<compile_context>
chip_gen: v7x
topology: tpu7x:2x2x1
jax: 0.10.0
libtpu: 0.0.40
codegen_flags: <defaults>
</compile_context>

<pallas_src>
import functools
import math

import jax
import jax.numpy as jnp
from jax.experimental import pallas as pl
from jax.experimental.pallas import tpu as pltpu

# ----------------------------- small synthetic config ------------------------------
BATCH = 2
CHANS = 3            # RGB, as the ViT expects
IMG = 16             # H = W
PATCH = 8            # p
STRIDE = 4           # stride divides patch_size (as asserted in patch_vit_resolution)
EMBED = 32           # d
NUM_HEADS = 4
HEAD_DIM = EMBED // NUM_HEADS
MLP_DIM = 4 * EMBED                       # 128 -> exactly one lane tile
DEPTH = 2                                 # scaled-down "vitb"
GRID = 1 + (IMG - PATCH) // STRIDE        # 3
NUM_PATCHES = GRID * GRID                 # 9
TOKENS = NUM_PATCHES + 1                  # t = 10
T_PAD = ((TOKENS + 7) // 8) * 8           # 16: sublane-aligned padded token count
CPP = CHANS * PATCH * PATCH               # 192
LN_EPS = 1e-6
NEG_INF = -1e30


# ---------------------------------- kernel helpers ---------------------------------
def _layernorm(v, g, b, eps=LN_EPS):
    mu = jnp.mean(v, axis=-1, keepdims=True)
    var = jnp.mean(jnp.square(v - mu), axis=-1, keepdims=True)
    return (v - mu) * jax.lax.rsqrt(var + eps) * g + b


def _erf(x):
    # Abramowitz & Stegun 7.1.26 polynomial, |err| < 1.5e-7 (float32-exact here).
    a1, a2, a3, a4, a5 = 0.254829592, -0.284496736, 1.421413741, -1.453152027, 1.061405429
    p = 0.3275911
    sgn = jnp.where(x >= 0.0, 1.0, -1.0)
    ax = jnp.abs(x)
    t = 1.0 / (1.0 + p * ax)
    poly = ((((a5 * t + a4) * t + a3) * t + a2) * t + a1) * t
    return sgn * (1.0 - poly * jnp.exp(-ax * ax))


def _gelu(x):
    # exact (erf) GELU, matching torch.nn.GELU default
    return 0.5 * x * (1.0 + _erf(x * (1.0 / math.sqrt(2.0))))


# ----------------------------------- fused kernel ----------------------------------
def fused_vit_kernel(patches_ref, pw_ref, base_ref, mask_ref, normg_ref, normb_ref,
                     ln1g_ref, ln1b_ref, qkvw_ref, qkvb_ref, projw_ref, projb_ref,
                     ln2g_ref, ln2b_ref, fc1w_ref, fc1b_ref, fc2w_ref, fc2b_ref,
                     out_ref, x_scr, *, n_batch, t_pad, num_heads):
    d = pl.program_id(0)
    dim = x_scr.shape[-1]
    hd = dim // num_heads
    scale = 1.0 / math.sqrt(hd)

    # ------ prologue (d == 0): patch embedding + CLS token + positional embedding ------
    @pl.when(d == 0)
    def _():
        emb = jnp.dot(patches_ref[...], pw_ref[...], preferred_element_type=jnp.float32)
        # base rows: 0 -> cls+pos[0];  1..N -> patch_bias+pos[1:];  padded rows -> 0
        x_scr[...] = emb + base_ref[...]

    x = x_scr[...]                                      # (B*T_PAD, D) resident tokens

    # --------------------------- multi-head self-attention -----------------------------
    h1 = _layernorm(x, ln1g_ref[0], ln1b_ref[0])
    qkv = jnp.dot(h1, qkvw_ref[0], preferred_element_type=jnp.float32) + qkvb_ref[0]

    def split_heads(z):                                 # (B*T_PAD, D) -> (H, B*T_PAD, hd)
        return jnp.stack([z[:, i * hd:(i + 1) * hd] for i in range(num_heads)], axis=0)

    q = split_heads(qkv[:, :dim])
    k = split_heads(qkv[:, dim:2 * dim])
    v = split_heads(qkv[:, 2 * dim:])

    # one batched score matmul + ONE softmax for all heads; the additive mask keeps the
    # images separated (block-diagonal) and the padded key tokens inert.
    s = jnp.einsum('nqd,nkd->nqk', q, k, preferred_element_type=jnp.float32) * scale
    s = s + mask_ref[...]
    s = s - jnp.max(s, axis=-1, keepdims=True)
    e = jnp.exp(s)
    p = e * pl.reciprocal(jnp.sum(e, axis=-1, keepdims=True), approx=True)
    o = jnp.einsum('nqk,nkd->nqd', p, v, preferred_element_type=jnp.float32)  # (H, B*T, hd)

    # fold head-concat into the projection: concat_h(o_h) @ Wp == sum_h o_h @ Wp[h*hd:(h+1)*hd]
    wproj = projw_ref[0]
    attn = jnp.dot(o[0], wproj[:hd, :], preferred_element_type=jnp.float32)
    for i in range(1, num_heads):
        attn = attn + jnp.dot(o[i], wproj[i * hd:(i + 1) * hd, :],
                              preferred_element_type=jnp.float32)
    x = x + attn + projb_ref[0]

    # -------------------------------------- MLP ----------------------------------------
    h2 = _layernorm(x, ln2g_ref[0], ln2b_ref[0])
    h2 = jnp.dot(h2, fc1w_ref[0], preferred_element_type=jnp.float32) + fc1b_ref[0]
    h2 = _gelu(h2)
    h2 = jnp.dot(h2, fc2w_ref[0], preferred_element_type=jnp.float32) + fc2b_ref[0]
    x = x + h2
    x_scr[...] = x

    # --------- epilogue (d == DEPTH-1): final LayerNorm of the CLS token only -----------
    @pl.when(d == pl.num_programs(0) - 1)
    def _():
        cls = x.reshape(n_batch, t_pad, dim)[:, 0, :]   # (B, D)
        out_ref[...] = _layernorm(cls, normg_ref[...], normb_ref[...])


# ----------------------------------- pallas wrapper ---------------------------------
def _const_spec(shape):
    # depth-invariant input: full-array block, constant index -> stays resident in VMEM
    return pl.BlockSpec(shape, lambda d: (0,) * len(shape))


def _depth_spec(shape):
    # per-block stacked weight: (DEPTH, a, b) -> block (1, a, b) selected by the depth index
    return pl.BlockSpec((1,) + tuple(shape[1:]), lambda d: (d, 0, 0))


def vit_forward(x, params):
    """Equivalent of ViTExtractor.forward(x, is_proj=False) == self.model(x) -> (B, D)."""
    B = x.shape[0]
    h0 = 1 + (x.shape[2] - PATCH) // STRIDE
    w0 = 1 + (x.shape[3] - PATCH) // STRIDE
    n = h0 * w0

    # im2col for Conv2d(kernel=p, stride=s); output channels are (C, ph, pw)-major, which
    # matches the PyTorch conv-weight flattening done once in init_params.
    patches = jax.lax.conv_general_dilated_patches(
        x, filter_shape=(PATCH, PATCH), window_strides=(STRIDE, STRIDE),
        padding='VALID', dimension_numbers=('NCHW', 'OIHW', 'NCHW'))     # (B, C*p*p, h0, w0)
    patches = jnp.transpose(patches.reshape(B, CPP, n), (0, 2, 1))       # (B, N, C*p*p)
    # row 0 is the CLS slot, rows N+1..T_PAD-1 are padding -> zero patch rows
    patches = jnp.pad(patches, ((0, 0), (1, T_PAD - 1 - n), (0, 0)))
    patches2d = patches.reshape(B * T_PAD, CPP)

    args = (patches2d, params['patch_w_t'], params['base2d'], params['attn_mask'],
            params['norm_g'], params['norm_b'],
            params['ln1_g'], params['ln1_b'], params['qkv_w'], params['qkv_b'],
            params['proj_w'], params['proj_b'], params['ln2_g'], params['ln2_b'],
            params['fc1_w'], params['fc1_b'], params['fc2_w'], params['fc2_b'])
    in_specs = ([_const_spec(a.shape) for a in args[:6]]
                + [_depth_spec(a.shape) for a in args[6:]])

    kern = functools.partial(fused_vit_kernel, n_batch=B, t_pad=T_PAD, num_heads=NUM_HEADS)
    return pl.pallas_call(
        kern,
        out_shape=jax.ShapeDtypeStruct((B, EMBED), jnp.float32),
        grid_spec=pltpu.PrefetchScalarGridSpec(
            num_scalar_prefetch=0,
            grid=(DEPTH,),
            in_specs=in_specs,
            out_specs=pl.BlockSpec((B, EMBED), lambda d: (0, 0)),
            scratch_shapes=[pltpu.VMEM((B * T_PAD, EMBED), jnp.float32)]),
        compiler_params=pltpu.CompilerParams(
            dimension_semantics=("arbitrary",)),
    )(*args)


# ------------------------------- deterministic params -------------------------------
def init_params(key):
    """Synthetic DINO-style weights, pre-packed into kernel-ready layouts (all transposes,
    reshapes and depth-stacking happen here, once, not per forward call)."""
    ks = jax.random.split(key, 4 + DEPTH)
    scale = 0.02
    normal = jax.random.normal

    patch_w = scale * normal(ks[0], (EMBED, CHANS, PATCH, PATCH), jnp.float32)
    patch_b = jnp.zeros((EMBED,), jnp.float32)
    cls_tok = scale * normal(ks[1], (1, 1, EMBED), jnp.float32)
    pos = scale * normal(ks[2], (1, TOKENS, EMBED), jnp.float32)
    # TODO(synk): bicubic positional-embedding interpolation (patch_vit_resolution) is skipped;
    # pos_embed is created directly at the strided token grid.

    qkv_w, qkv_b, proj_w, proj_b = [], [], [], []
    fc1_w, fc1_b, fc2_w, fc2_b = [], [], [], []
    for dpt in range(DEPTH):
        bk = jax.random.split(ks[4 + dpt], 4)
        qkv_w.append(scale * normal(bk[0], (3 * EMBED, EMBED), jnp.float32))
        qkv_b.append(jnp.zeros((3 * EMBED,), jnp.float32))
        proj_w.append(scale * normal(bk[1], (EMBED, EMBED), jnp.float32))
        proj_b.append(jnp.zeros((EMBED,), jnp.float32))
        fc1_w.append(scale * normal(bk[2], (MLP_DIM, EMBED), jnp.float32))
        fc1_b.append(jnp.zeros((MLP_DIM,), jnp.float32))
        fc2_w.append(scale * normal(bk[3], (EMBED, MLP_DIM), jnp.float32))
        fc2_b.append(jnp.zeros((EMBED,), jnp.float32))

    # "base" token rows: row 0 = cls + pos[0]; rows 1..N = conv bias + pos[1:]; pad rows = 0.
    base = jnp.zeros((T_PAD, EMBED), jnp.float32)
    base = base.at[0].set(cls_tok[0, 0] + pos[0, 0])
    base = base.at[1:1 + NUM_PATCHES].set(pos[0, 1:] + patch_b[None, :])
    base2d = jnp.tile(base, (BATCH, 1))                              # (B*T_PAD, D)

    # additive attention mask: block-diagonal over the batch + key-padding mask.
    row = jnp.arange(BATCH * T_PAD)
    same_img = (row[:, None] // T_PAD) == (row[None, :] // T_PAD)
    valid_key = (row[None, :] % T_PAD) < TOKENS
    attn_mask = jnp.where(same_img & valid_key, 0.0, NEG_INF).astype(jnp.float32)

    def stack_t(ws):   # list of PyTorch-layout (out, in) -> (DEPTH, in, out)
        return jnp.stack([w.T for w in ws], axis=0)

    def stack_b(bs):   # list of (n,) -> (DEPTH, 1, n)
        return jnp.stack([b.reshape(1, -1) for b in bs], axis=0)

    return {
        'patch_w_t': patch_w.reshape(EMBED, CPP).T,                  # (C*p*p, D)
        'base2d': base2d,                                            # (B*T_PAD, D)
        'attn_mask': attn_mask,                                      # (B*T_PAD, B*T_PAD)
        'norm_g': jnp.ones((1, EMBED), jnp.float32),
        'norm_b': jnp.zeros((1, EMBED), jnp.float32),
        'ln1_g': jnp.ones((DEPTH, 1, EMBED), jnp.float32),
        'ln1_b': jnp.zeros((DEPTH, 1, EMBED), jnp.float32),
        'ln2_g': jnp.ones((DEPTH, 1, EMBED), jnp.float32),
        'ln2_b': jnp.zeros((DEPTH, 1, EMBED), jnp.float32),
        'qkv_w': stack_t(qkv_w), 'qkv_b': stack_b(qkv_b),            # (DEPTH, D, 3D), (DEPTH,1,3D)
        'proj_w': stack_t(proj_w), 'proj_b': stack_b(proj_b),        # (DEPTH, D, D),  (DEPTH,1,D)
        'fc1_w': stack_t(fc1_w), 'fc1_b': stack_b(fc1_b),            # (DEPTH, D, MLP),(DEPTH,1,MLP)
        'fc2_w': stack_t(fc2_w), 'fc2_b': stack_b(fc2_b),            # (DEPTH, MLP, D),(DEPTH,1,D)
    }


if __name__ == "__main__":
    key = jax.random.PRNGKey(0)
    k_x, k_p = jax.random.split(key)
    x = jax.random.normal(k_x, (BATCH, CHANS, IMG, IMG), jnp.float32)   # NCHW, like PyTorch
    params = init_params(k_p)

    fwd = jax.jit(vit_forward)
    out = jax.block_until_ready(fwd(x, params))
    assert out.shape == (BATCH, EMBED)
    assert bool(jnp.all(jnp.isfinite(out)))
    print("KERNEL_OK")
</pallas_src>

<mosaic_0001>
module attributes {stable_mosaic.version = 11 : i64} {
  func.func @fused_vit_kernel(%arg0: i32, %arg1: memref<32x192xf32, #tpu.memory_space<vmem>>, %arg2: memref<192x32xf32, #tpu.memory_space<vmem>>, %arg3: memref<32x32xf32, #tpu.memory_space<vmem>>, %arg4: memref<32x32xf32, #tpu.memory_space<vmem>>, %arg5: memref<1x32xf32, #tpu.memory_space<vmem>>, %arg6: memref<1x32xf32, #tpu.memory_space<vmem>>, %arg7: memref<1x1x32xf32, #tpu.memory_space<vmem>>, %arg8: memref<1x1x32xf32, #tpu.memory_space<vmem>>, %arg9: memref<1x32x96xf32, #tpu.memory_space<vmem>>, %arg10: memref<1x1x96xf32, #tpu.memory_space<vmem>>, %arg11: memref<1x32x32xf32, #tpu.memory_space<vmem>>, %arg12: memref<1x1x32xf32, #tpu.memory_space<vmem>>, %arg13: memref<1x1x32xf32, #tpu.memory_space<vmem>>, %arg14: memref<1x1x32xf32, #tpu.memory_space<vmem>>, %arg15: memref<1x32x128xf32, #tpu.memory_space<vmem>>, %arg16: memref<1x1x128xf32, #tpu.memory_space<vmem>>, %arg17: memref<1x128x32xf32, #tpu.memory_space<vmem>>, %arg18: memref<1x1x32xf32, #tpu.memory_space<vmem>>, %arg19: memref<2x32xf32, #tpu.memory_space<vmem>>, %arg20: memref<32x32xf32, #tpu.memory_space<vmem>>) attributes {dimension_semantics = [#tpu.dimension_semantics<arbitrary>], iteration_bounds = array<i64: 2>, scalar_prefetch = 0 : i64, scratch_operands = 1 : i64, tpu.core_type = #tpu.core_type<tc>, window_params = [{pipeline_mode = #tpu.pipeline_mode<synchronous>, transform_indices = @transform_0, window_bounds = array<i64: 32, 192>}, {pipeline_mode = #tpu.pipeline_mode<synchronous>, transform_indices = @transform_1, window_bounds = array<i64: 192, 32>}, {pipeline_mode = #tpu.pipeline_mode<synchronous>, transform_indices = @transform_2, window_bounds = array<i64: 32, 32>}, {pipeline_mode = #tpu.pipeline_mode<synchronous>, transform_indices = @transform_3, window_bounds = array<i64: 32, 32>}, {pipeline_mode = #tpu.pipeline_mode<synchronous>, transform_indices = @transform_4, window_bounds = array<i64: 1, 32>}, {pipeline_mode = #tpu.pipeline_mode<synchronous>, transform_indices = @transform_5, window_bounds = array<i64: 1, 32>}, {transform_indices = @transform_6, window_bounds = array<i64: 1, 1, 32>}, {transform_indices = @transform_7, window_bounds = array<i64: 1, 1, 32>}, {transform_indices = @transform_8, window_bounds = array<i64: 1, 32, 96>}, {transform_indices = @transform_9, window_bounds = array<i64: 1, 1, 96>}, {transform_indices = @transform_10, window_bounds = array<i64: 1, 32, 32>}, {transform_indices = @transform_11, window_bounds = array<i64: 1, 1, 32>}, {transform_indices = @transform_12, window_bounds = array<i64: 1, 1, 32>}, {transform_indices = @transform_13, window_bounds = array<i64: 1, 1, 32>}, {transform_indices = @transform_14, window_bounds = array<i64: 1, 32, 128>}, {transform_indices = @transform_15, window_bounds = array<i64: 1, 1, 128>}, {transform_indices = @transform_16, window_bounds = array<i64: 1, 128, 32>}, {transform_indices = @transform_17, window_bounds = array<i64: 1, 1, 32>}, {pipeline_mode = #tpu.pipeline_mode<synchronous>, transform_indices = @transform_18, window_bounds = array<i64: 2, 32>}]} {
    %c0_i32 = arith.constant 0 : i32
    %0 = arith.cmpi eq, %arg0, %c0_i32 : i32
    %1 = arith.extui %0 : i1 to i32
    %c0_i32_0 = arith.constant 0 : i32
    %2 = arith.cmpi ne, %1, %c0_i32_0 : i32
    scf.if %2 {
      %c0_80 = arith.constant 0 : index
      %c0_81 = arith.constant 0 : index
      %197 = vector.load %arg1[%c0_80, %c0_81] : memref<32x192xf32, #tpu.memory_space<vmem>>, vector<32x192xf32>
      %c0_82 = arith.constant 0 : index
      %c0_83 = arith.constant 0 : index
      %198 = vector.load %arg2[%c0_82, %c0_83] : memref<192x32xf32, #tpu.memory_space<vmem>>, vector<192x32xf32>
      %cst_84 = arith.constant dense<0.000000e+00> : vector<32x32xf32>
      %199 = tpu.matmul %197, %198, %cst_84 {dimension_numbers = #tpu.dot_dimension_numbers<[1], [0], [0], [1], [0, 0, 1, 1], [], []>} : vector<32x192xf32>, vector<192x32xf32>, vector<32x32xf32> -> vector<32x32xf32>
      %c0_85 = arith.constant 0 : index
      %c0_86 = arith.constant 0 : index
      %200 = vector.load %arg3[%c0_85, %c0_86] : memref<32x32xf32, #tpu.memory_space<vmem>>, vector<32x32xf32>
      %201 = arith.addf %199, %200 : vector<32x32xf32>
      %c0_87 = arith.constant 0 : index
      %c0_88 = arith.constant 0 : index
      %202 = vector.load %arg20[%c0_87, %c0_88] : memref<32x32xf32, #tpu.memory_space<vmem>>, vector<32x32xf32>
      tpu.vector_store %arg20[%c0_87, %c0_88], %201 {strides = array<i32>} : memref<32x32xf32, #tpu.memory_space<vmem>>, vector<32x32xf32>,
    } else {
    }
    %c0 = arith.constant 0 : index
    %c0_1 = arith.constant 0 : index
    %3 = vector.load %arg20[%c0, %c0_1] : memref<32x32xf32, #tpu.memory_space<vmem>>, vector<32x32xf32>
    %c0_2 = arith.constant 0 : index
    %c0_3 = arith.constant 0 : index
    %c0_4 = arith.constant 0 : index
    %4 = vector.load %arg7[%c0_2, %c0_3, %c0_4] : memref<1x1x32xf32, #tpu.memory_space<vmem>>, vector<1x1x32xf32>
    %5 = vector.shape_cast %4 : vector<1x1x32xf32> to vector<1x32xf32>
    %c0_5 = arith.constant 0 : index
    %c0_6 = arith.constant 0 : index
    %c0_7 = arith.constant 0 : index
    %6 = vector.load %arg8[%c0_5, %c0_6, %c0_7] : memref<1x1x32xf32, #tpu.memory_space<vmem>>, vector<1x1x32xf32>
    %7 = vector.shape_cast %6 : vector<1x1x32xf32> to vector<1x32xf32>
    %cst = arith.constant dense<0.000000e+00> : vector<32xf32>
    %8 = vector.multi_reduction <add>, %3, %cst [1] : vector<32x32xf32> to vector<32xf32>
    %9 = vector.shape_cast %8 : vector<32xf32> to vector<32x1xf32>
    %cst_8 = arith.constant 3.200000e+01 : f32
    %10 = vector.broadcast %cst_8 : f32 to vector<32x1xf32>
    %11 = arith.divf %9, %10 : vector<32x1xf32>
    %12 = vector.broadcast %11 : vector<32x1xf32> to vector<32x32xf32>
    %13 = arith.subf %3, %12 : vector<32x32xf32>
    %14 = arith.mulf %13, %13 : vector<32x32xf32>
    %cst_9 = arith.constant dense<0.000000e+00> : vector<32xf32>
    %15 = vector.multi_reduction <add>, %14, %cst_9 [1] : vector<32x32xf32> to vector<32xf32>
    %16 = vector.shape_cast %15 : vector<32xf32> to vector<32x1xf32>
    %cst_10 = arith.constant 3.200000e+01 : f32
    %17 = vector.broadcast %cst_10 : f32 to vector<32x1xf32>
    %18 = arith.divf %16, %17 : vector<32x1xf32>
    %19 = vector.broadcast %11 : vector<32x1xf32> to vector<32x32xf32>
    %20 = arith.subf %3, %19 : vector<32x32xf32>
    %cst_11 = arith.constant 9.99999997E-7 : f32
    %21 = vector.broadcast %cst_11 : f32 to vector<32x1xf32>
    %22 = arith.addf %18, %21 : vector<32x1xf32>
    %23 = math.rsqrt %22 : vector<32x1xf32>
    %24 = vector.broadcast %23 : vector<32x1xf32> to vector<32x32xf32>
    %25 = arith.mulf %20, %24 : vector<32x32xf32>
    %26 = vector.broadcast %5 : vector<1x32xf32> to vector<32x32xf32>
    %27 = arith.mulf %25, %26 : vector<32x32xf32>
    %28 = vector.broadcast %7 : vector<1x32xf32> to vector<32x32xf32>
    %29 = arith.addf %27, %28 : vector<32x32xf32>
    %c0_12 = arith.constant 0 : index
    %c0_13 = arith.constant 0 : index
    %c0_14 = arith.constant 0 : index
    %30 = vector.load %arg9[%c0_12, %c0_13, %c0_14] : memref<1x32x96xf32, #tpu.memory_space<vmem>>, vector<1x32x96xf32>
    %31 = vector.shape_cast %30 : vector<1x32x96xf32> to vector<32x96xf32>
    %cst_15 = arith.constant dense<0.000000e+00> : vector<32x96xf32>
    %32 = tpu.matmul %29, %31, %cst_15 {dimension_numbers = #tpu.dot_dimension_numbers<[1], [0], [0], [1], [0, 0, 1, 1], [], []>} : vector<32x32xf32>, vector<32x96xf32>, vector<32x96xf32> -> vector<32x96xf32>
    %c0_16 = arith.constant 0 : index
    %c0_17 = arith.constant 0 : index
    %c0_18 = arith.constant 0 : index
    %33 = vector.load %arg10[%c0_16, %c0_17, %c0_18] : memref<1x1x96xf32, #tpu.memory_space<vmem>>, vector<1x1x96xf32>
    %34 = vector.shape_cast %33 : vector<1x1x96xf32> to vector<1x96xf32>
    %35 = vector.broadcast %34 : vector<1x96xf32> to vector<32x96xf32>
    %36 = arith.addf %32, %35 : vector<32x96xf32>
    %37 = vector.extract_strided_slice %36 {offsets = [0, 0], sizes = [32, 32], strides = [1, 1]} : vector<32x96xf32> to vector<32x32xf32>
    %38 = vector.extract_strided_slice %37 {offsets = [0, 0], sizes = [32, 8], strides = [1, 1]} : vector<32x32xf32> to vector<32x8xf32>
    %39 = vector.extract_strided_slice %37 {offsets = [0, 8], sizes = [32, 8], strides = [1, 1]} : vector<32x32xf32> to vector<32x8xf32>
    %40 = vector.extract_strided_slice %37 {offsets = [0, 16], sizes = [32, 8], strides = [1, 1]} : vector<32x32xf32> to vector<32x8xf32>
    %41 = vector.extract_strided_slice %37 {offsets = [0, 24], sizes = [32, 8], strides = [1, 1]} : vector<32x32xf32> to vector<32x8xf32>
    %42 = vector.shape_cast %38 : vector<32x8xf32> to vector<1x32x8xf32>
    %43 = vector.shape_cast %39 : vector<32x8xf32> to vector<1x32x8xf32>
    %44 = vector.shape_cast %40 : vector<32x8xf32> to vector<1x32x8xf32>
    %45 = vector.shape_cast %41 : vector<32x8xf32> to vector<1x32x8xf32>
    %46 = tpu.concatenate %42, %43, %44, %45 in 0 : vector<1x32x8xf32>, vector<1x32x8xf32>, vector<1x32x8xf32>, vector<1x32x8xf32> -> vector<4x32x8xf32>
    %47 = vector.extract_strided_slice %36 {offsets = [0, 32], sizes = [32, 32], strides = [1, 1]} : vector<32x96xf32> to vector<32x32xf32>
    %48 = vector.extract_strided_slice %47 {offsets = [0, 0], sizes = [32, 8], strides = [1, 1]} : vector<32x32xf32> to vector<32x8xf32>
    %49 = vector.extract_strided_slice %47 {offsets = [0, 8], sizes = [32, 8], strides = [1, 1]} : vector<32x32xf32> to vector<32x8xf32>
    %50 = vector.extract_strided_slice %47 {offsets = [0, 16], sizes = [32, 8], strides = [1, 1]} : vector<32x32xf32> to vector<32x8xf32>
    %51 = vector.extract_strided_slice %47 {offsets = [0, 24], sizes = [32, 8], strides = [1, 1]} : vector<32x32xf32> to vector<32x8xf32>
    %52 = vector.shape_cast %48 : vector<32x8xf32> to vector<1x32x8xf32>
    %53 = vector.shape_cast %49 : vector<32x8xf32> to vector<1x32x8xf32>
    %54 = vector.shape_cast %50 : vector<32x8xf32> to vector<1x32x8xf32>
    %55 = vector.shape_cast %51 : vector<32x8xf32> to vector<1x32x8xf32>
    %56 = tpu.concatenate %52, %53, %54, %55 in 0 : vector<1x32x8xf32>, vector<1x32x8xf32>, vector<1x32x8xf32>, vector<1x32x8xf32> -> vector<4x32x8xf32>
    %57 = vector.extract_strided_slice %36 {offsets = [0, 64], sizes = [32, 32], strides = [1, 1]} : vector<32x96xf32> to vector<32x32xf32>
    %58 = vector.extract_strided_slice %57 {offsets = [0, 0], sizes = [32, 8], strides = [1, 1]} : vector<32x32xf32> to vector<32x8xf32>
    %59 = vector.extract_strided_slice %57 {offsets = [0, 8], sizes = [32, 8], strides = [1, 1]} : vector<32x32xf32> to vector<32x8xf32>
    %60 = vector.extract_strided_slice %57 {offsets = [0, 16], sizes = [32, 8], strides = [1, 1]} : vector<32x32xf32> to vector<32x8xf32>
    %61 = vector.extract_strided_slice %57 {offsets = [0, 24], sizes = [32, 8], strides = [1, 1]} : vector<32x32xf32> to vector<32x8xf32>
    %62 = vector.shape_cast %58 : vector<32x8xf32> to vector<1x32x8xf32>
    %63 = vector.shape_cast %59 : vector<32x8xf32> to vector<1x32x8xf32>
    %64 = vector.shape_cast %60 : vector<32x8xf32> to vector<1x32x8xf32>
    %65 = vector.shape_cast %61 : vector<32x8xf32> to vector<1x32x8xf32>
    %66 = tpu.concatenate %62, %63, %64, %65 in 0 : vector<1x32x8xf32>, vector<1x32x8xf32>, vector<1x32x8xf32>, vector<1x32x8xf32> -> vector<4x32x8xf32>
    "tpu.trace_start"() <{level = 10 : i32, message = "nqd,nkd->nqk"}> : () -> ()
    %cst_19 = arith.constant dense<0.000000e+00> : vector<4x32x32xf32>
    %67 = tpu.matmul %46, %56, %cst_19 {dimension_numbers = #tpu.dot_dimension_numbers<[2], [2], [1], [1], [0, 0, 0, 1, 1, 1], [0], [0]>} : vector<4x32x8xf32>, vector<4x32x8xf32>, vector<4x32x32xf32> -> vector<4x32x32xf32>
    "tpu.trace_stop"() : () -> ()
    %cst_20 = arith.constant 0.353553385 : f32
    %68 = vector.broadcast %cst_20 : f32 to vector<4x32x32xf32>
    %69 = arith.mulf %67, %68 : vector<4x32x32xf32>
    %c0_21 = arith.constant 0 : index
    %c0_22 = arith.constant 0 : index
    %70 = vector.load %arg4[%c0_21, %c0_22] : memref<32x32xf32, #tpu.memory_space<vmem>>, vector<32x32xf32>
    %71 = vector.shape_cast %70 : vector<32x32xf32> to vector<1x32x32xf32>
    %72 = vector.broadcast %71 : vector<1x32x32xf32> to vector<4x32x32xf32>
    %73 = arith.addf %69, %72 : vector<4x32x32xf32>
    %cst_23 = arith.constant dense<0xFF800000> : vector<4x32xf32>
    %74 = vector.multi_reduction <maximumf>, %73, %cst_23 [2] : vector<4x32x32xf32> to vector<4x32xf32>
    %75 = vector.shape_cast %74 : vector<4x32xf32> to vector<4x32x1xf32>
    %76 = vector.broadcast %75 : vector<4x32x1xf32> to vector<4x32x32xf32>
    %77 = arith.subf %73, %76 : vector<4x32x32xf32>
    %78 = math.exp %77 : vector<4x32x32xf32>
    %cst_24 = arith.constant dense<0.000000e+00> : vector<4x32xf32>
    %79 = vector.multi_reduction <add>, %78, %cst_24 [2] : vector<4x32x32xf32> to vector<4x32xf32>
    %80 = vector.shape_cast %79 : vector<4x32xf32> to vector<4x32x1xf32>
    %81 = tpu.reciprocal %80 {approx = true} : vector<4x32x1xf32> -> vector<4x32x1xf32>
    %82 = vector.broadcast %81 : vector<4x32x1xf32> to vector<4x32x32xf32>
    %83 = arith.mulf %78, %82 : vector<4x32x32xf32>
    "tpu.trace_start"() <{level = 10 : i32, message = "nqk,nkd->nqd"}> : () -> ()
    %cst_25 = arith.constant dense<0.000000e+00> : vector<4x32x8xf32>
    %84 = tpu.matmul %83, %66, %cst_25 {dimension_numbers = #tpu.dot_dimension_numbers<[2], [1], [1], [2], [0, 0, 0, 1, 1, 2], [0], [0]>} : vector<4x32x32xf32>, vector<4x32x8xf32>, vector<4x32x8xf32> -> vector<4x32x8xf32>
    "tpu.trace_stop"() : () -> ()
    %c0_26 = arith.constant 0 : index
    %c0_27 = arith.constant 0 : index
    %c0_28 = arith.constant 0 : index
    %85 = vector.load %arg11[%c0_26, %c0_27, %c0_28] : memref<1x32x32xf32, #tpu.memory_space<vmem>>, vector<1x32x32xf32>
    %86 = vector.shape_cast %85 : vector<1x32x32xf32> to vector<32x32xf32>
    %87 = vector.extract_strided_slice %84 {offsets = [0, 0, 0], sizes = [1, 32, 8], strides = [1, 1, 1]} : vector<4x32x8xf32> to vector<1x32x8xf32>
    %88 = vector.shape_cast %87 : vector<1x32x8xf32> to vector<32x8xf32>
    %89 = vector.extract_strided_slice %86 {offsets = [0, 0], sizes = [8, 32], strides = [1, 1]} : vector<32x32xf32> to vector<8x32xf32>
    %cst_29 = arith.constant dense<0.000000e+00> : vector<32x32xf32>
    %90 = tpu.matmul %88, %89, %cst_29 {dimension_numbers = #tpu.dot_dimension_numbers<[1], [0], [0], [1], [0, 0, 1, 1], [], []>} : vector<32x8xf32>, vector<8x32xf32>, vector<32x32xf32> -> vector<32x32xf32>
    %91 = vector.extract_strided_slice %84 {offsets = [1, 0, 0], sizes = [1, 32, 8], strides = [1, 1, 1]} : vector<4x32x8xf32> to vector<1x32x8xf32>
    %92 = vector.shape_cast %91 : vector<1x32x8xf32> to vector<32x8xf32>
    %93 = vector.extract_strided_slice %86 {offsets = [8, 0], sizes = [8, 32], strides = [1, 1]} : vector<32x32xf32> to vector<8x32xf32>
    %cst_30 = arith.constant dense<0.000000e+00> : vector<32x32xf32>
    %94 = tpu.matmul %92, %93, %cst_30 {dimension_numbers = #tpu.dot_dimension_numbers<[1], [0], [0], [1], [0, 0, 1, 1], [], []>} : vector<32x8xf32>, vector<8x32xf32>, vector<32x32xf32> -> vector<32x32xf32>
    %95 = arith.addf %90, %94 : vector<32x32xf32>
    %96 = vector.extract_strided_slice %84 {offsets = [2, 0, 0], sizes = [1, 32, 8], strides = [1, 1, 1]} : vector<4x32x8xf32> to vector<1x32x8xf32>
    %97 = vector.shape_cast %96 : vector<1x32x8xf32> to vector<32x8xf32>
    %98 = vector.extract_strided_slice %86 {offsets = [16, 0], sizes = [8, 32], strides = [1, 1]} : vector<32x32xf32> to vector<8x32xf32>
    %cst_31 = arith.constant dense<0.000000e+00> : vector<32x32xf32>
    %99 = tpu.matmul %97, %98, %cst_31 {dimension_numbers = #tpu.dot_dimension_numbers<[1], [0], [0], [1], [0, 0, 1, 1], [], []>} : vector<32x8xf32>, vector<8x32xf32>, vector<32x32xf32> -> vector<32x32xf32>
    %100 = arith.addf %95, %99 : vector<32x32xf32>
    %101 = vector.extract_strided_slice %84 {offsets = [3, 0, 0], sizes = [1, 32, 8], strides = [1, 1, 1]} : vector<4x32x8xf32> to vector<1x32x8xf32>
    %102 = vector.shape_cast %101 : vector<1x32x8xf32> to vector<32x8xf32>
    %103 = vector.extract_strided_slice %86 {offsets = [24, 0], sizes = [8, 32], strides = [1, 1]} : vector<32x32xf32> to vector<8x32xf32>
    %cst_32 = arith.constant dense<0.000000e+00> : vector<32x32xf32>
    %104 = tpu.matmul %102, %103, %cst_32 {dimension_numbers = #tpu.dot_dimension_numbers<[1], [0], [0], [1], [0, 0, 1, 1], [], []>} : vector<32x8xf32>, vector<8x32xf32>, vector<32x32xf32> -> vector<32x32xf32>
    %105 = arith.addf %100, %104 : vector<32x32xf32>
    %106 = arith.addf %3, %105 : vector<32x32xf32>
    %c0_33 = arith.constant 0 : index
    %c0_34 = arith.constant 0 : index
    %c0_35 = arith.constant 0 : index
    %107 = vector.load %arg12[%c0_33, %c0_34, %c0_35] : memref<1x1x32xf32, #tpu.memory_space<vmem>>, vector<1x1x32xf32>
    %108 = vector.shape_cast %107 : vector<1x1x32xf32> to vector<1x32xf32>
    %109 = vector.broadcast %108 : vector<1x32xf32> to vector<32x32xf32>
    %110 = arith.addf %106, %109 : vector<32x32xf32>
    %c0_36 = arith.constant 0 : index
    %c0_37 = arith.constant 0 : index
    %c0_38 = arith.constant 0 : index
    %111 = vector.load %arg13[%c0_36, %c0_37, %c0_38] : memref<1x1x32xf32, #tpu.memory_space<vmem>>, vector<1x1x32xf32>
    %112 = vector.shape_cast %111 : vector<1x1x32xf32> to vector<1x32xf32>
    %c0_39 = arith.constant 0 : index
    %c0_40 = arith.constant 0 : index
    %c0_41 = arith.constant 0 : index
    %113 = vector.load %arg14[%c0_39, %c0_40, %c0_41] : memref<1x1x32xf32, #tpu.memory_space<vmem>>, vector<1x1x32xf32>
    %114 = vector.shape_cast %113 : vector<1x1x32xf32> to vector<1x32xf32>
    %cst_42 = arith.constant dense<0.000000e+00> : vector<32xf32>
    %115 = vector.multi_reduction <add>, %110, %cst_42 [1] : vector<32x32xf32> to vector<32xf32>
    %116 = vector.shape_cast %115 : vector<32xf32> to vector<32x1xf32>
    %cst_43 = arith.constant 3.200000e+01 : f32
    %117 = vector.broadcast %cst_43 : f32 to vector<32x1xf32>
    %118 = arith.divf %116, %117 : vector<32x1xf32>
    %119 = vector.broadcast %118 : vector<32x1xf32> to vector<32x32xf32>
    %120 = arith.subf %110, %119 : vector<32x32xf32>
    %121 = arith.mulf %120, %120 : vector<32x32xf32>
    %cst_44 = arith.constant dense<0.000000e+00> : vector<32xf32>
    %122 = vector.multi_reduction <add>, %121, %cst_44 [1] : vector<32x32xf32> to vector<32xf32>
    %123 = vector.shape_cast %122 : vector<32xf32> to vector<32x1xf32>
    %cst_45 = arith.constant 3.200000e+01 : f32
    %124 = vector.broadcast %cst_45 : f32 to vector<32x1xf32>
    %125 = arith.divf %123, %124 : vector<32x1xf32>
    %126 = vector.broadcast %118 : vector<32x1xf32> to vector<32x32xf32>
    %127 = arith.subf %110, %126 : vector<32x32xf32>
    %cst_46 = arith.constant 9.99999997E-7 : f32
    %128 = vector.broadcast %cst_46 : f32 to vector<32x1xf32>
    %129 = arith.addf %125, %128 : vector<32x1xf32>
    %130 = math.rsqrt %129 : vector<32x1xf32>
    %131 = vector.broadcast %130 : vector<32x1xf32> to vector<32x32xf32>
    %132 = arith.mulf %127, %131 : vector<32x32xf32>
    %133 = vector.broadcast %112 : vector<1x32xf32> to vector<32x32xf32>
    %134 = arith.mulf %132, %133 : vector<32x32xf32>
    %135 = vector.broadcast %114 : vector<1x32xf32> to vector<32x32xf32>
    %136 = arith.addf %134, %135 : vector<32x32xf32>
    %c0_47 = arith.constant 0 : index
    %c0_48 = arith.constant 0 : index
    %c0_49 = arith.constant 0 : index
    %137 = vector.load %arg15[%c0_47, %c0_48, %c0_49] : memref<1x32x128xf32, #tpu.memory_space<vmem>>, vector<1x32x128xf32>
    %138 = vector.shape_cast %137 : vector<1x32x128xf32> to vector<32x128xf32>
    %cst_50 = arith.constant dense<0.000000e+00> : vector<32x128xf32>
    %139 = tpu.matmul %136, %138, %cst_50 {dimension_numbers = #tpu.dot_dimension_numbers<[1], [0], [0], [1], [0, 0, 1, 1], [], []>} : vector<32x32xf32>, vector<32x128xf32>, vector<32x128xf32> -> vector<32x128xf32>
    %c0_51 = arith.constant 0 : index
    %c0_52 = arith.constant 0 : index
    %c0_53 = arith.constant 0 : index
    %140 = vector.load %arg16[%c0_51, %c0_52, %c0_53] : memref<1x1x128xf32, #tpu.memory_space<vmem>>, vector<1x1x128xf32>
    %141 = vector.shape_cast %140 : vector<1x1x128xf32> to vector<1x128xf32>
    %142 = vector.broadcast %141 : vector<1x128xf32> to vector<32x128xf32>
    %143 = arith.addf %139, %142 : vector<32x128xf32>
    %cst_54 = arith.constant 5.000000e-01 : f32
    %144 = vector.broadcast %cst_54 : f32 to vector<32x128xf32>
    %145 = arith.mulf %144, %143 : vector<32x128xf32>
    %cst_55 = arith.constant 0.707106769 : f32
    %146 = vector.broadcast %cst_55 : f32 to vector<32x128xf32>
    %147 = arith.mulf %143, %146 : vector<32x128xf32>
    %cst_56 = arith.constant 0.000000e+00 : f32
    %148 = vector.broadcast %cst_56 : f32 to vector<32x128xf32>
    %149 = arith.cmpf oge, %147, %148 : vector<32x128xf32>
    %cst_57 = arith.constant 1.000000e+00 : f32
    %cst_58 = arith.constant -1.000000e+00 : f32
    %150 = vector.broadcast %cst_57 : f32 to vector<32x128xf32>
    %151 = vector.broadcast %cst_58 : f32 to vector<32x128xf32>
    %152 = arith.select %149, %150, %151 : vector<32x128xi1>, vector<32x128xf32>
    %153 = math.absf %147 : vector<32x128xf32>
    %cst_59 = arith.constant 0.327591091 : f32
    %154 = vector.broadcast %cst_59 : f32 to vector<32x128xf32>
    %155 = arith.mulf %154, %153 : vector<32x128xf32>
    %cst_60 = arith.constant 1.000000e+00 : f32
    %156 = vector.broadcast %cst_60 : f32 to vector<32x128xf32>
    %157 = arith.addf %156, %155 : vector<32x128xf32>
    %cst_61 = arith.constant 1.000000e+00 : f32
    %158 = vector.broadcast %cst_61 : f32 to vector<32x128xf32>
    %159 = arith.divf %158, %157 : vector<32x128xf32>
    %cst_62 = arith.constant 1.06140542 : f32
    %160 = vector.broadcast %cst_62 : f32 to vector<32x128xf32>
    %161 = arith.mulf %160, %159 : vector<32x128xf32>
    %cst_63 = arith.constant -1.45315206 : f32
    %162 = vector.broadcast %cst_63 : f32 to vector<32x128xf32>
    %163 = arith.addf %161, %162 : vector<32x128xf32>
    %164 = arith.mulf %163, %159 : vector<32x128xf32>
    %cst_64 = arith.constant 1.42141378 : f32
    %165 = vector.broadcast %cst_64 : f32 to vector<32x128xf32>
    %166 = arith.addf %164, %165 : vector<32x128xf32>
    %167 = arith.mulf %166, %159 : vector<32x128xf32>
    %cst_65 = arith.constant -0.284496725 : f32
    %168 = vector.broadcast %cst_65 : f32 to vector<32x128xf32>
    %169 = arith.addf %167, %168 : vector<32x128xf32>
    %170 = arith.mulf %169, %159 : vector<32x128xf32>
    %cst_66 = arith.constant 0.254829586 : f32
    %171 = vector.broadcast %cst_66 : f32 to vector<32x128xf32>
    %172 = arith.addf %170, %171 : vector<32x128xf32>
    %173 = arith.mulf %172, %159 : vector<32x128xf32>
    %cst_67 = arith.constant 0.000000e+00 : f32
    %174 = vector.broadcast %cst_67 : f32 to vector<32x128xf32>
    %175 = arith.subf %174, %153 : vector<32x128xf32>
    %176 = arith.mulf %175, %153 : vector<32x128xf32>
    %177 = math.exp %176 : vector<32x128xf32>
    %178 = arith.mulf %173, %177 : vector<32x128xf32>
    %cst_68 = arith.constant 1.000000e+00 : f32
    %179 = vector.broadcast %cst_68 : f32 to vector<32x128xf32>
    %180 = arith.subf %179, %178 : vector<32x128xf32>
    %181 = arith.mulf %152, %180 : vector<32x128xf32>
    %cst_69 = arith.constant 1.000000e+00 : f32
    %182 = vector.broadcast %cst_69 : f32 to vector<32x128xf32>
    %183 = arith.addf %182, %181 : vector<32x128xf32>
    %184 = arith.mulf %145, %183 : vector<32x128xf32>
    %c0_70 = arith.constant 0 : index
    %c0_71 = arith.constant 0 : index
    %c0_72 = arith.constant 0 : index
    %185 = vector.load %arg17[%c0_70, %c0_71, %c0_72] : memref<1x128x32xf32, #tpu.memory_space<vmem>>, vector<1x128x32xf32>
    %186 = vector.shape_cast %185 : vector<1x128x32xf32> to vector<128x32xf32>
    %cst_73 = arith.constant dense<0.000000e+00> : vector<32x32xf32>
    %187 = tpu.matmul %184, %186, %cst_73 {dimension_numbers = #tpu.dot_dimension_numbers<[1], [0], [0], [1], [0, 0, 1, 1], [], []>} : vector<32x128xf32>, vector<128x32xf32>, vector<32x32xf32> -> vector<32x32xf32>
    %c0_74 = arith.constant 0 : index
    %c0_75 = arith.constant 0 : index
    %c0_76 = arith.constant 0 : index
    %188 = vector.load %arg18[%c0_74, %c0_75, %c0_76] : memref<1x1x32xf32, #tpu.memory_space<vmem>>, vector<1x1x32xf32>
    %189 = vector.shape_cast %188 : vector<1x1x32xf32> to vector<1x32xf32>
    %190 = vector.broadcast %189 : vector<1x32xf32> to vector<32x32xf32>
    %191 = arith.addf %187, %190 : vector<32x32xf32>
    %192 = arith.addf %110, %191 : vector<32x32xf32>
    %c0_77 = arith.constant 0 : index
    %c0_78 = arith.constant 0 : index
    %193 = vector.load %arg20[%c0_77, %c0_78] : memref<32x32xf32, #tpu.memory_space<vmem>>, vector<32x32xf32>
    tpu.vector_store %arg20[%c0_77, %c0_78], %192 {strides = array<i32>} : memref<32x32xf32, #tpu.memory_space<vmem>>, vector<32x32xf32>,
    %c1_i32 = arith.constant 1 : i32
    %194 = arith.cmpi eq, %arg0, %c1_i32 : i32
    %195 = arith.extui %194 : i1 to i32
    %c0_i32_79 = arith.constant 0 : i32
    %196 = arith.cmpi ne, %195, %c0_i32_79 : i32
    scf.if %196 {
      %197 = vector.shape_cast %192 : vector<32x32xf32> to vector<2x16x32xf32>
      %198 = vector.extract_strided_slice %197 {offsets = [0, 0, 0], sizes = [2, 1, 32], strides = [1, 1, 1]} : vector<2x16x32xf32> to vector<2x1x32xf32>
      %199 = vector.shape_cast %198 : vector<2x1x32xf32> to vector<2x32xf32>
      %c0_80 = arith.constant 0 : index
      %c0_81 = arith.constant 0 : index
      %200 = vector.load %arg5[%c0_80, %c0_81] : memref<1x32xf32, #tpu.memory_space<vmem>>, vector<1x32xf32>
      %c0_82 = arith.constant 0 : index
      %c0_83 = arith.constant 0 : index
      %201 = vector.load %arg6[%c0_82, %c0_83] : memref<1x32xf32, #tpu.memory_space<vmem>>, vector<1x32xf32>
      %cst_84 = arith.constant dense<0.000000e+00> : vector<2xf32>
      %202 = vector.multi_reduction <add>, %199, %cst_84 [1] : vector<2x32xf32> to vector<2xf32>
      %203 = vector.shape_cast %202 : vector<2xf32> to vector<2x1xf32>
      %cst_85 = arith.constant 3.200000e+01 : f32
      %204 = vector.broadcast %cst_85 : f32 to vector<2x1xf32>
      %205 = arith.divf %203, %204 : vector<2x1xf32>
      %206 = vector.broadcast %205 : vector<2x1xf32> to vector<2x32xf32>
      %207 = arith.subf %199, %206 : vector<2x32xf32>
      %208 = arith.mulf %207, %207 : vector<2x32xf32>
      %cst_86 = arith.constant dense<0.000000e+00> : vector<2xf32>
      %209 = vector.multi_reduction <add>, %208, %cst_86 [1] : vector<2x32xf32> to vector<2xf32>
      %210 = vector.shape_cast %209 : vector<2xf32> to vector<2x1xf32>
      %cst_87 = arith.constant 3.200000e+01 : f32
      %211 = vector.broadcast %cst_87 : f32 to vector<2x1xf32>
      %212 = arith.divf %210, %211 : vector<2x1xf32>
      %213 = vector.broadcast %205 : vector<2x1xf32> to vector<2x32xf32>
      %214 = arith.subf %199, %213 : vector<2x32xf32>
      %cst_88 = arith.constant 9.99999997E-7 : f32
      %215 = vector.broadcast %cst_88 : f32 to vector<2x1xf32>
      %216 = arith.addf %212, %215 : vector<2x1xf32>
      %217 = math.rsqrt %216 : vector<2x1xf32>
      %218 = vector.broadcast %217 : vector<2x1xf32> to vector<2x32xf32>
      %219 = arith.mulf %214, %218 : vector<2x32xf32>
      %220 = vector.broadcast %200 : vector<1x32xf32> to vector<2x32xf32>
      %221 = arith.mulf %219, %220 : vector<2x32xf32>
      %222 = vector.broadcast %201 : vector<1x32xf32> to vector<2x32xf32>
      %223 = arith.addf %221, %222 : vector<2x32xf32>
      %c0_89 = arith.constant 0 : index
      %c0_90 = arith.constant 0 : index
      %224 = vector.load %arg19[%c0_89, %c0_90] : memref<2x32xf32, #tpu.memory_space<vmem>>, vector<2x32xf32>
      tpu.vector_store %arg19[%c0_89, %c0_90], %223 {strides = array<i32>} : memref<2x32xf32, #tpu.memory_space<vmem>>, vector<2x32xf32>,
    } else {
    }
    return
  }
  func.func @transform_0(%arg0: i32) -> (i32, i32) {
    %c0_i32 = arith.constant 0 : i32
    %c0_i32_0 = arith.constant 0 : i32
    %c0_i32_1 = arith.constant 0 : i32
    return %c0_i32, %c0_i32_0 : i32, i32
  }
  func.func @transform_1(%arg0: i32) -> (i32, i32) {
    %c0_i32 = arith.constant 0 : i32
    %c0_i32_0 = arith.constant 0 : i32
    %c0_i32_1 = arith.constant 0 : i32
    return %c0_i32, %c0_i32_0 : i32, i32
  }
  func.func @transform_2(%arg0: i32) -> (i32, i32) {
    %c0_i32 = arith.constant 0 : i32
    %c0_i32_0 = arith.constant 0 : i32
    %c0_i32_1 = arith.constant 0 : i32
    return %c0_i32, %c0_i32_0 : i32, i32
  }
  func.func @transform_3(%arg0: i32) -> (i32, i32) {
    %c0_i32 = arith.constant 0 : i32
    %c0_i32_0 = arith.constant 0 : i32
    %c0_i32_1 = arith.constant 0 : i32
    return %c0_i32, %c0_i32_0 : i32, i32
  }
  func.func @transform_4(%arg0: i32) -> (i32, i32) {
    %c0_i32 = arith.constant 0 : i32
    %c0_i32_0 = arith.constant 0 : i32
    %c0_i32_1 = arith.constant 0 : i32
    return %c0_i32, %c0_i32_0 : i32, i32
  }
  func.func @transform_5(%arg0: i32) -> (i32, i32) {
    %c0_i32 = arith.constant 0 : i32
    %c0_i32_0 = arith.constant 0 : i32
    %c0_i32_1 = arith.constant 0 : i32
    return %c0_i32, %c0_i32_0 : i32, i32
  }
  func.func @transform_6(%arg0: i32) -> (i32, i32, i32) {
    %c0_i32 = arith.constant 0 : i32
    %c0_i32_0 = arith.constant 0 : i32
    %c0_i32_1 = arith.constant 0 : i32
    return %arg0, %c0_i32, %c0_i32_0 : i32, i32, i32
  }
  func.func @transform_7(%arg0: i32) -> (i32, i32, i32) {
    %c0_i32 = arith.constant 0 : i32
    %c0_i32_0 = arith.constant 0 : i32
    %c0_i32_1 = arith.constant 0 : i32
    return %arg0, %c0_i32, %c0_i32_0 : i32, i32, i32
  }
  func.func @transform_8(%arg0: i32) -> (i32, i32, i32) {
    %c0_i32 = arith.constant 0 : i32
    %c0_i32_0 = arith.constant 0 : i32
    %c0_i32_1 = arith.constant 0 : i32
    return %arg0, %c0_i32, %c0_i32_0 : i32, i32, i32
  }
  func.func @transform_9(%arg0: i32) -> (i32, i32, i32) {
    %c0_i32 = arith.constant 0 : i32
    %c0_i32_0 = arith.constant 0 : i32
    %c0_i32_1 = arith.constant 0 : i32
    return %arg0, %c0_i32, %c0_i32_0 : i32, i32, i32
  }
  func.func @transform_10(%arg0: i32) -> (i32, i32, i32) {
    %c0_i32 = arith.constant 0 : i32
    %c0_i32_0 = arith.constant 0 : i32
    %c0_i32_1 = arith.constant 0 : i32
    return %arg0, %c0_i32, %c0_i32_0 : i32, i32, i32
  }
  func.func @transform_11(%arg0: i32) -> (i32, i32, i32) {
    %c0_i32 = arith.constant 0 : i32
    %c0_i32_0 = arith.constant 0 : i32
    %c0_i32_1 = arith.constant 0 : i32
    return %arg0, %c0_i32, %c0_i32_0 : i32, i32, i32
  }
  func.func @transform_12(%arg0: i32) -> (i32, i32, i32) {
    %c0_i32 = arith.constant 0 : i32
    %c0_i32_0 = arith.constant 0 : i32
    %c0_i32_1 = arith.constant 0 : i32
    return %arg0, %c0_i32, %c0_i32_0 : i32, i32, i32
  }
  func.func @transform_13(%arg0: i32) -> (i32, i32, i32) {
    %c0_i32 = arith.constant 0 : i32
    %c0_i32_0 = arith.constant 0 : i32
    %c0_i32_1 = arith.constant 0 : i32
    return %arg0, %c0_i32, %c0_i32_0 : i32, i32, i32
  }
  func.func @transform_14(%arg0: i32) -> (i32, i32, i32) {
    %c0_i32 = arith.constant 0 : i32
    %c0_i32_0 = arith.constant 0 : i32
    %c0_i32_1 = arith.constant 0 : i32
    return %arg0, %c0_i32, %c0_i32_0 : i32, i32, i32
  }
  func.func @transform_15(%arg0: i32) -> (i32, i32, i32) {
    %c0_i32 = arith.constant 0 : i32
    %c0_i32_0 = arith.constant 0 : i32
    %c0_i32_1 = arith.constant 0 : i32
    return %arg0, %c0_i32, %c0_i32_0 : i32, i32, i32
  }
  func.func @transform_16(%arg0: i32) -> (i32, i32, i32) {
    %c0_i32 = arith.constant 0 : i32
    %c0_i32_0 = arith.constant 0 : i32
    %c0_i32_1 = arith.constant 0 : i32
    return %arg0, %c0_i32, %c0_i32_0 : i32, i32, i32
  }
  func.func @transform_17(%arg0: i32) -> (i32, i32, i32) {
    %c0_i32 = arith.constant 0 : i32
    %c0_i32_0 = arith.constant 0 : i32
    %c0_i32_1 = arith.constant 0 : i32
    return %arg0, %c0_i32, %c0_i32_0 : i32, i32, i32
  }
  func.func @transform_18(%arg0: i32) -> (i32, i32) {
    %c0_i32 = arith.constant 0 : i32
    %c0_i32_0 = arith.constant 0 : i32
    %c0_i32_1 = arith.constant 0 : i32
    return %c0_i32, %c0_i32_0 : i32, i32
  }
}

</mosaic_0001>

<llo_original>
// kernel: vit_forward.1
$region0: #{vit_forward.1}
  #allocation0 [shape = 'u32[]', space=smem, size = 0x4, offset = 0x4, fixed_abs, tag = 'smem constant byte address 0x4 - core index']
  #allocation1 [shape = 'u32[144,128]{1,0:T(1,128)}', space=vmem, size = 0x12000, scoped, tag = 'internal scratch']
  #allocation2 [shape = 'f32[32,32]{1,0:T(8,128)}', space=vmem, size = 0x4000, scoped, tag = 'scratch operand']
  %s0 = inlined_call_operand.vmem [shape: f32[32,192], index: 0, kind: input, shape index: {}]
  %s1 = inlined_call_operand.vmem [shape: f32[192,32], index: 1, kind: input, shape index: {}]
  %s2 = inlined_call_operand.vmem [shape: f32[32,32], index: 2, kind: input, shape index: {}]
  %s3 = inlined_call_operand.vmem [shape: f32[32,32], index: 3, kind: input, shape index: {}]
  %s4 = inlined_call_operand.vmem [shape: f32[1,32], index: 4, kind: input, shape index: {}]
  %s5 = inlined_call_operand.vmem [shape: f32[1,32], index: 5, kind: input, shape index: {}]
  %s6 = inlined_call_operand.vmem [shape: f32[2,1,32], index: 6, kind: input, shape index: {}]
  %s7 = inlined_call_operand.vmem [shape: f32[2,1,32], index: 7, kind: input, shape index: {}]
  %s8 = inlined_call_operand.vmem [shape: f32[2,32,96], index: 8, kind: input, shape index: {}]
  %s9 = inlined_call_operand.vmem [shape: f32[2,1,96], index: 9, kind: input, shape index: {}]
  %s10 = inlined_call_operand.vmem [shape: f32[2,32,32], index: 10, kind: input, shape index: {}]
  %s11 = inlined_call_operand.vmem [shape: f32[2,1,32], index: 11, kind: input, shape index: {}]
  %s12 = inlined_call_operand.vmem [shape: f32[2,1,32], index: 12, kind: input, shape index: {}]
  %s13 = inlined_call_operand.vmem [shape: f32[2,1,32], index: 13, kind: input, shape index: {}]
  %s14 = inlined_call_operand.vmem [shape: f32[2,32,128], index: 14, kind: input, shape index: {}]
  %s15 = inlined_call_operand.vmem [shape: f32[2,1,128], index: 15, kind: input, shape index: {}]
  %s16 = inlined_call_operand.vmem [shape: f32[2,128,32], index: 16, kind: input, shape index: {}]
  %s17 = inlined_call_operand.vmem [shape: f32[2,1,32], index: 17, kind: input, shape index: {}]
  %s18 = inlined_call_operand.hbm [shape: f32[2,32], index: 18, kind: output, shape index: {}]
  %s19 = sld [smem:[#allocation0]]
  $region113: #{vit_forward.1} parent=0
    _
  %s21 = ssub.s32 1, %s19
  %s22 = scalar_select 0, %s21, %s19
  $region1: #{vit_forward.1} parent=0
    #allocation3 [shape = 'u8[1024]{0}', space=vmem, size = 0x400, scoped, tag = 'output window, operand 0, single buffered']
    #allocation4 [shape = 's32[2]{0}', space=sflag, size = 0x8, scoped, tag = 'scoped memory for vit_forward.1']
    %23 = vsyncpa [#allocation4], 0
    loop: start=0, step=1, limit=4
    $region2: #{vit_forward.1} parent=1 // loop_pre_header
      _
    $region3: #{vit_forward.1} parent=1 // loop_header
      %s25 = sphi 0, %s29
      %p26 = scmp.ge.s32.totalorder %s25, 4
      %s33 = sphi 0, %s33
      %s35 = sphi 0, %s33
      %s36 = sphi 0, %s35
      %s50 = sphi 0, %s36
      %s54 = sphi 0, %s54
      %s56 = sphi 0, %s54
      %s57 = sphi 0, %s56
      %s71 = sphi 0, %s57
      %s75 = sphi 0, %s75
      %s77 = sphi 0, %s75
      %s78 = sphi 0, %s77
      %s92 = sphi 0, %s78
      %s96 = sphi 0, %s96
      %s98 = sphi 0, %s96
      %s99 = sphi 0, %s98
      %s113 = sphi 0, %s99
      %s117 = sphi 0, %s117
      %s119 = sphi 0, %s117
      %s120 = sphi 0, %s119
      %s134 = sphi 0, %s120
      %s138 = sphi 0, %s138
      %s140 = sphi 0, %s138
      %s141 = sphi 0, %s140
      %s155 = sphi 0, %s141
      %s161 = sphi 0, %s163
      %s164 = sphi 0, %s161
      %s165 = sphi 0, %s164
      %s181 = sphi 0, %s165
      %s187 = sphi 0, %s189
      %s190 = sphi 0, %s187
      %s191 = sphi 0, %s190
      %s207 = sphi 0, %s191
      %s213 = sphi 0, %s215
      %s216 = sphi 0, %s213
      %s217 = sphi 0, %s216
      %s233 = sphi 0, %s217
      %s239 = sphi 0, %s241
      %s242 = sphi 0, %s239
      %s243 = sphi 0, %s242
      %s259 = sphi 0, %s243
      %s265 = sphi 0, %s267
      %s268 = sphi 0, %s265
      %s269 = sphi 0, %s268
      %s285 = sphi 0, %s269
      %s291 = sphi 0, %s293
      %s294 = sphi 0, %s291
      %s295 = sphi 0, %s294
      %s311 = sphi 0, %s295
      %s317 = sphi 0, %s319
      %s320 = sphi 0, %s317
      %s321 = sphi 0, %s320
      %s337 = sphi 0, %s321
      %s343 = sphi 0, %s345
      %s346 = sphi 0, %s343
      %s347 = sphi 0, %s346
      %s363 = sphi 0, %s347
      %s369 = sphi 0, %s371
      %s372 = sphi 0, %s369
      %s373 = sphi 0, %s372
      %s389 = sphi 0, %s373
      %s395 = sphi 0, %s397
      %s398 = sphi 0, %s395
      %s399 = sphi 0, %s398
      %s415 = sphi 0, %s399
      %s421 = sphi 0, %s423
      %s424 = sphi 0, %s421
      %s425 = sphi 0, %s424
      %s441 = sphi 0, %s425
      %s447 = sphi 0, %s449
      %s450 = sphi 0, %s447
      %s451 = sphi 0, %s450
      %s467 = sphi 0, %s451
      %s471 = sphi 0, %s471
      %s473 = sphi 0, %s471
      %s474 = sphi 0, %s473
      %s488 = sphi 0, %s474
    $region4: #{vit_forward.1} parent=1 // loop_header_branch
      %28 = sbr.rel (%p26) target = $region8
    $region5: #{vit_forward.1} parent=1 // loop_body
      %s30 = ssub.s32 %s25, 1
      %s31 = ssub.s32 %s25, 2
      %s32 = sadd.s32 %s25, 1
      %s34 = sadd.s32 %s33, 1
      %p37 = scmp.eq.s32.totalorder %s25, 1
      %p38 = scmp.ne.s32.totalorder %s33, %s35
      %p39 = scmp.eq.s32.totalorder %s25, 0
      %p40 = por %p38, %p39
      %p41 = scmp.ne.s32.totalorder %s33, %s35
      %p42 = scmp.eq.s32.totalorder %s30, 1
      %p43 = por %p41, %p42
      %p44 = scmp.ne.s32.totalorder %s35, %s36
      %p45 = scmp.eq.s32.totalorder %s30, 0
      %p46 = por %p44, %p45
      %p47 = scmp.ne.s32.totalorder %s35, %s36
      %p48 = scmp.eq.s32.totalorder %s31, 1
      %p49 = por %p47, %p48
      %p51 = scmp.ne.s32.totalorder %s36, %s50
      %p52 = scmp.eq.s32.totalorder %s31, 0
      %p53 = por %p51, %p52
      %s55 = sadd.s32 %s54, 1
      %p58 = scmp.eq.s32.totalorder %s25, 1
      %p59 = scmp.ne.s32.totalorder %s54, %s56
      %p60 = scmp.eq.s32.totalorder %s25, 0
      %p61 = por %p59, %p60
      %p62 = scmp.ne.s32.totalorder %s54, %s56
      %p63 = scmp.eq.s32.totalorder %s30, 1
      %p64 = por %p62, %p63
      %p65 = scmp.ne.s32.totalorder %s56, %s57
      %p66 = scmp.eq.s32.totalorder %s30, 0
      %p67 = por %p65, %p66
      %p68 = scmp.ne.s32.totalorder %s56, %s57
      %p69 = scmp.eq.s32.totalorder %s31, 1
      %p70 = por %p68, %p69
      %p72 = scmp.ne.s32.totalorder %s57, %s71
      %p73 = scmp.eq.s32.totalorder %s31, 0
      %p74 = por %p72, %p73
      %s76 = sadd.s32 %s75, 1
      %p79 = scmp.eq.s32.totalorder %s25, 1
      %p80 = scmp.ne.s32.totalorder %s75, %s77
      %p81 = scmp.eq.s32.totalorder %s25, 0
      %p82 = por %p80, %p81
      %p83 = scmp.ne.s32.totalorder %s75, %s77
      %p84 = scmp.eq.s32.totalorder %s30, 1
      %p85 = por %p83, %p84
      %p86 = scmp.ne.s32.totalorder %s77, %s78
      %p87 = scmp.eq.s32.totalorder %s30, 0
      %p88 = por %p86, %p87
      %p89 = scmp.ne.s32.totalorder %s77, %s78
      %p90 = scmp.eq.s32.totalorder %s31, 1
      %p91 = por %p89, %p90
      %p93 = scmp.ne.s32.totalorder %s78, %s92
      %p94 = scmp.eq.s32.totalorder %s31, 0
      %p95 = por %p93, %p94
      %s97 = sadd.s32 %s96, 1
      %p100 = scmp.eq.s32.totalorder %s25, 1
      %p101 = scmp.ne.s32.totalorder %s96, %s98
      %p102 = scmp.eq.s32.totalorder %s25, 0
      %p103 = por %p101, %p102
      %p104 = scmp.ne.s32.totalorder %s96, %s98
      %p105 = scmp.eq.s32.totalorder %s30, 1
      %p106 = por %p104, %p105
      %p107 = scmp.ne.s32.totalorder %s98, %s99
      %p108 = scmp.eq.s32.totalorder %s30, 0
      %p109 = por %p107, %p108
      %p110 = scmp.ne.s32.totalorder %s98, %s99
      %p111 = scmp.eq.s32.totalorder %s31, 1
      %p112 = por %p110, %p111
      %p114 = scmp.ne.s32.totalorder %s99, %s113
      %p115 = scmp.eq.s32.totalorder %s31, 0
      %p116 = por %p114, %p115
      %s118 = sadd.s32 %s117, 1
      %p121 = scmp.eq.s32.totalorder %s25, 1
      %p122 = scmp.ne.s32.totalorder %s117, %s119
      %p123 = scmp.eq.s32.totalorder %s25, 0
      %p124 = por %p122, %p123
      %p125 = scmp.ne.s32.totalorder %s117, %s119
      %p126 = scmp.eq.s32.totalorder %s30, 1
      %p127 = por %p125, %p126
      %p128 = scmp.ne.s32.totalorder %s119, %s120
      %p129 = scmp.eq.s32.totalorder %s30, 0
      %p130 = por %p128, %p129
      %p131 = scmp.ne.s32.totalorder %s119, %s120
      %p132 = scmp.eq.s32.totalorder %s31, 1
      %p133 = por %p131, %p132
      %p135 = scmp.ne.s32.totalorder %s120, %s134
      %p136 = scmp.eq.s32.totalorder %s31, 0
      %p137 = por %p135, %p136
      %s139 = sadd.s32 %s138, 1
      %p142 = scmp.eq.s32.totalorder %s25, 1
      %p143 = scmp.ne.s32.totalorder %s138, %s140
      %p144 = scmp.eq.s32.totalorder %s25, 0
      %p145 = por %p143, %p144
      %p146 = scmp.ne.s32.totalorder %s138, %s140
      %p147 = scmp.eq.s32.totalorder %s30, 1
      %p148 = por %p146, %p147
      %p149 = scmp.ne.s32.totalorder %s140, %s141
      %p150 = scmp.eq.s32.totalorder %s30, 0
      %p151 = por %p149, %p150
      %p152 = scmp.ne.s32.totalorder %s140, %s141
      %p153 = scmp.eq.s32.totalorder %s31, 1
      %p154 = por %p152, %p153
      %p156 = scmp.ne.s32.totalorder %s141, %s155
      %p157 = scmp.eq.s32.totalorder %s31, 0
      %p158 = por %p156, %p157
      %s159 = ssub.s32 %s25, %s32
      %p160 = scmp.eq.s32.totalorder %s159, 0
      %s162 = sadd.s32 %s161, 1
      %s163 = scalar_select %p160, %s161, %s162
      %p166 = pneg %p160
      %p167 = scmp.eq.s32.totalorder %s25, 1
      %p168 = por %p166, %p167
      %p169 = scmp.ne.s32.totalorder %s161, %s164
      %p170 = scmp.eq.s32.totalorder %s25, 0
      %p171 = por %p169, %p170
      %p172 = scmp.ne.s32.totalorder %s161, %s164
      %p173 = scmp.eq.s32.totalorder %s30, 1
      %p174 = por %p172, %p173
      %p175 = scmp.ne.s32.totalorder %s164, %s165
      %p176 = scmp.eq.s32.totalorder %s30, 0
      %p177 = por %p175, %p176
      %p178 = scmp.ne.s32.totalorder %s164, %s165
      %p179 = scmp.eq.s32.totalorder %s31, 1
      %p180 = por %p178, %p179
      %p182 = scmp.ne.s32.totalorder %s165, %s181
      %p183 = scmp.eq.s32.totalorder %s31, 0
      %p184 = por %p182, %p183
      %s185 = ssub.s32 %s25, %s32
      %p186 = scmp.eq.s32.totalorder %s185, 0
      %s188 = sadd.s32 %s187, 1
      %s189 = scalar_select %p186, %s187, %s188
      %p192 = pneg %p186
      %p193 = scmp.eq.s32.totalorder %s25, 1
      %p194 = por %p192, %p193
      %p195 = scmp.ne.s32.totalorder %s187, %s190
      %p196 = scmp.eq.s32.totalorder %s25, 0
      %p197 = por %p195, %p196
      %p198 = scmp.ne.s32.totalorder %s187, %s190
      %p199 = scmp.eq.s32.totalorder %s30, 1
      %p200 = por %p198, %p199
      %p201 = scmp.ne.s32.totalorder %s190, %s191
      %p202 = scmp.eq.s32.totalorder %s30, 0
      %p203 = por %p201, %p202
      %p204 = scmp.ne.s32.totalorder %s190, %s191
      %p205 = scmp.eq.s32.totalorder %s31, 1
      %p206 = por %p204, %p205
      %p208 = scmp.ne.s32.totalorder %s191, %s207
      %p209 = scmp.eq.s32.totalorder %s31, 0
      %p210 = por %p208, %p209
      %s211 = ssub.s32 %s25, %s32
      %p212 = scmp.eq.s32.totalorder %s211, 0
      %s214 = sadd.s32 %s213, 1
      %s215 = scalar_select %p212, %s213, %s214
      %p218 = pneg %p212
      %p219 = scmp.eq.s32.totalorder %s25, 1
      %p220 = por %p218, %p219
      %p221 = scmp.ne.s32.totalorder %s213, %s216
      %p222 = scmp.eq.s32.totalorder %s25, 0
      %p223 = por %p221, %p222
      %p224 = scmp.ne.s32.totalorder %s213, %s216
      %p225 = scmp.eq.s32.totalorder %s30, 1
      %p226 = por %p224, %p225
      %p227 = scmp.ne.s32.totalorder %s216, %s217
      %p228 = scmp.eq.s32.totalorder %s30, 0
      %p229 = por %p227, %p228
      %p230 = scmp.ne.s32.totalorder %s216, %s217
      %p231 = scmp.eq.s32.totalorder %s31, 1
      %p232 = por %p230, %p231
      %p234 = scmp.ne.s32.totalorder %s217, %s233
      %p235 = scmp.eq.s32.totalorder %s31, 0
      %p236 = por %p234, %p235
      %s237 = ssub.s32 %s25, %s32
      %p238 = scmp.eq.s32.totalorder %s237, 0
      %s240 = sadd.s32 %s239, 1
      %s241 = scalar_select %p238, %s239, %s240
      %p244 = pneg %p238
      %p245 = scmp.eq.s32.totalorder %s25, 1
      %p246 = por %p244, %p245
      %p247 = scmp.ne.s32.totalorder %s239, %s242
      %p248 = scmp.eq.s32.totalorder %s25, 0
      %p249 = por %p247, %p248
      %p250 = scmp.ne.s32.totalorder %s239, %s242
      %p251 = scmp.eq.s32.totalorder %s30, 1
      %p252 = por %p250, %p251
      %p253 = scmp.ne.s32.totalorder %s242, %s243
      %p254 = scmp.eq.s32.totalorder %s30, 0
      %p255 = por %p253, %p254
      %p256 = scmp.ne.s32.totalorder %s242, %s243
      %p257 = scmp.eq.s32.totalorder %s31, 1
      %p258 = por %p256, %p257
      %p260 = scmp.ne.s32.totalorder %s243, %s259
      %p261 = scmp.eq.s32.totalorder %s31, 0
      %p262 = por %p260, %p261
      %s263 = ssub.s32 %s25, %s32
      %p264 = scmp.eq.s32.totalorder %s263, 0
      %s266 = sadd.s32 %s265, 1
      %s267 = scalar_select %p264, %s265, %s266
      %p270 = pneg %p264
      %p271 = scmp.eq.s32.totalorder %s25, 1
      %p272 = por %p270, %p271
      %p273 = scmp.ne.s32.totalorder %s265, %s268
      %p274 = scmp.eq.s32.totalorder %s25, 0
      %p275 = por %p273, %p274
      %p276 = scmp.ne.s32.totalorder %s265, %s268
      %p277 = scmp.eq.s32.totalorder %s30, 1
      %p278 = por %p276, %p277
      %p279 = scmp.ne.s32.totalorder %s268, %s269
      %p280 = scmp.eq.s32.totalorder %s30, 0
      %p281 = por %p279, %p280
      %p282 = scmp.ne.s32.totalorder %s268, %s269
      %p283 = scmp.eq.s32.totalorder %s31, 1
      %p284 = por %p282, %p283
      %p286 = scmp.ne.s32.totalorder %s269, %s285
      %p287 = scmp.eq.s32.totalorder %s31, 0
      %p288 = por %p286, %p287
      %s289 = ssub.s32 %s25, %s32
      %p290 = scmp.eq.s32.totalorder %s289, 0
      %s292 = sadd.s32 %s291, 1
      %s293 = scalar_select %p290, %s291, %s292
      %p296 = pneg %p290
      %p297 = scmp.eq.s32.totalorder %s25, 1
      %p298 = por %p296, %p297
      %p299 = scmp.ne.s32.totalorder %s291, %s294
      %p300 = scmp.eq.s32.totalorder %s25, 0
      %p301 = por %p299, %p300
      %p302 = scmp.ne.s32.totalorder %s291, %s294
      %p303 = scmp.eq.s32.totalorder %s30, 1
      %p304 = por %p302, %p303
      %p305 = scmp.ne.s32.totalorder %s294, %s295
      %p306 = scmp.eq.s32.totalorder %s30, 0
      %p307 = por %p305, %p306
      %p308 = scmp.ne.s32.totalorder %s294, %s295
      %p309 = scmp.eq.s32.totalorder %s31, 1
      %p310 = por %p308, %p309
      %p312 = scmp.ne.s32.totalorder %s295, %s311
      %p313 = scmp.eq.s32.totalorder %s31, 0
      %p314 = por %p312, %p313
      %s315 = ssub.s32 %s25, %s32
      %p316 = scmp.eq.s32.totalorder %s315, 0
      %s318 = sadd.s32 %s317, 1
      %s319 = scalar_select %p316, %s317, %s318
      %p322 = pneg %p316
      %p323 = scmp.eq.s32.totalorder %s25, 1
      %p324 = por %p322, %p323
      %p325 = scmp.ne.s32.totalorder %s317, %s320
      %p326 = scmp.eq.s32.totalorder %s25, 0
      %p327 = por %p325, %p326
      %p328 = scmp.ne.s32.totalorder %s317, %s320
      %p329 = scmp.eq.s32.totalorder %s30, 1
      %p330 = por %p328, %p329
      %p331 = scmp.ne.s32.totalorder %s320, %s321
      %p332 = scmp.eq.s32.totalorder %s30, 0
      %p333 = por %p331, %p332
      %p334 = scmp.ne.s32.totalorder %s320, %s321
      %p335 = scmp.eq.s32.totalorder %s31, 1
      %p336 = por %p334, %p335
      %p338 = scmp.ne.s32.totalorder %s321, %s337
      %p339 = scmp.eq.s32.totalorder %s31, 0
      %p340 = por %p338, %p339
      %s341 = ssub.s32 %s25, %s32
      %p342 = scmp.eq.s32.totalorder %s341, 0
      %s344 = sadd.s32 %s343, 1
      %s345 = scalar_select %p342, %s343, %s344
      %p348 = pneg %p342
      %p349 = scmp.eq.s32.totalorder %s25, 1
      %p350 = por %p348, %p349
      %p351 = scmp.ne.s32.totalorder %s343, %s346
      %p352 = scmp.eq.s32.totalorder %s25, 0
      %p353 = por %p351, %p352
      %p354 = scmp.ne.s32.totalorder %s343, %s346
      %p355 = scmp.eq.s32.totalorder %s30, 1
      %p356 = por %p354, %p355
      %p357 = scmp.ne.s32.totalorder %s346, %s347
      %p358 = scmp.eq.s32.totalorder %s30, 0
      %p359 = por %p357, %p358
      %p360 = scmp.ne.s32.totalorder %s346, %s347
      %p361 = scmp.eq.s32.totalorder %s31, 1
      %p362 = por %p360, %p361
      %p364 = scmp.ne.s32.totalorder %s347, %s363
      %p365 = scmp.eq.s32.totalorder %s31, 0
      %p366 = por %p364, %p365
      %s367 = ssub.s32 %s25, %s32
      %p368 = scmp.eq.s32.totalorder %s367, 0
      %s370 = sadd.s32 %s369, 1
      %s371 = scalar_select %p368, %s369, %s370
      %p374 = pneg %p368
      %p375 = scmp.eq.s32.totalorder %s25, 1
      %p376 = por %p374, %p375
      %p377 = scmp.ne.s32.totalorder %s369, %s372
      %p378 = scmp.eq.s32.totalorder %s25, 0
      %p379 = por %p377, %p378
      %p380 = scmp.ne.s32.totalorder %s369, %s372
      %p381 = scmp.eq.s32.totalorder %s30, 1
      %p382 = por %p380, %p381
      %p383 = scmp.ne.s32.totalorder %s372, %s373
      %p384 = scmp.eq.s32.totalorder %s30, 0
      %p385 = por %p383, %p384
      %p386 = scmp.ne.s32.totalorder %s372, %s373
      %p387 = scmp.eq.s32.totalorder %s31, 1
      %p388 = por %p386, %p387
      %p390 = scmp.ne.s32.totalorder %s373, %s389
      %p391 = scmp.eq.s32.totalorder %s31, 0
      %p392 = por %p390, %p391
      %s393 = ssub.s32 %s25, %s32
      %p394 = scmp.eq.s32.totalorder %s393, 0
      %s396 = sadd.s32 %s395, 1
      %s397 = scalar_select %p394, %s395, %s396
      %p400 = pneg %p394
      %p401 = scmp.eq.s32.totalorder %s25, 1
      %p402 = por %p400, %p401
      %p403 = scmp.ne.s32.totalorder %s395, %s398
      %p404 = scmp.eq.s32.totalorder %s25, 0
      %p405 = por %p403, %p404
      %p406 = scmp.ne.s32.totalorder %s395, %s398
      %p407 = scmp.eq.s32.totalorder %s30, 1
      %p408 = por %p406, %p407
      %p409 = scmp.ne.s32.totalorder %s398, %s399
      %p410 = scmp.eq.s32.totalorder %s30, 0
      %p411 = por %p409, %p410
      %p412 = scmp.ne.s32.totalorder %s398, %s399
      %p413 = scmp.eq.s32.totalorder %s31, 1
      %p414 = por %p412, %p413
      %p416 = scmp.ne.s32.totalorder %s399, %s415
      %p417 = scmp.eq.s32.totalorder %s31, 0
      %p418 = por %p416, %p417
      %s419 = ssub.s32 %s25, %s32
      %p420 = scmp.eq.s32.totalorder %s419, 0
      %s422 = sadd.s32 %s421, 1
      %s423 = scalar_select %p420, %s421, %s422
      %p426 = pneg %p420
      %p427 = scmp.eq.s32.totalorder %s25, 1
      %p428 = por %p426, %p427
      %p429 = scmp.ne.s32.totalorder %s421, %s424
      %p430 = scmp.eq.s32.totalorder %s25, 0
      %p431 = por %p429, %p430
      %p432 = scmp.ne.s32.totalorder %s421, %s424
      %p433 = scmp.eq.s32.totalorder %s30, 1
      %p434 = por %p432, %p433
      %p435 = scmp.ne.s32.totalorder %s424, %s425
      %p436 = scmp.eq.s32.totalorder %s30, 0
      %p437 = por %p435, %p436
      %p438 = scmp.ne.s32.totalorder %s424, %s425
      %p439 = scmp.eq.s32.totalorder %s31, 1
      %p440 = por %p438, %p439
      %p442 = scmp.ne.s32.totalorder %s425, %s441
      %p443 = scmp.eq.s32.totalorder %s31, 0
      %p444 = por %p442, %p443
      %s445 = ssub.s32 %s25, %s32
      %p446 = scmp.eq.s32.totalorder %s445, 0
      %s448 = sadd.s32 %s447, 1
      %s449 = scalar_select %p446, %s447, %s448
      %p452 = pneg %p446
      %p453 = scmp.eq.s32.totalorder %s25, 1
      %p454 = por %p452, %p453
      %p455 = scmp.ne.s32.totalorder %s447, %s450
      %p456 = scmp.eq.s32.totalorder %s25, 0
      %p457 = por %p455, %p456
      %p458 = scmp.ne.s32.totalorder %s447, %s450
      %p459 = scmp.eq.s32.totalorder %s30, 1
      %p460 = por %p458, %p459
      %p461 = scmp.ne.s32.totalorder %s450, %s451
      %p462 = scmp.eq.s32.totalorder %s30, 0
      %p463 = por %p461, %p462
      %p464 = scmp.ne.s32.totalorder %s450, %s451
      %p465 = scmp.eq.s32.totalorder %s31, 1
      %p466 = por %p464, %p465
      %p468 = scmp.ne.s32.totalorder %s451, %s467
      %p469 = scmp.eq.s32.totalorder %s31, 0
      %p470 = por %p468, %p469
      %s472 = sadd.s32 %s471, 1
      %p475 = scmp.eq.s32.totalorder %s25, 1
      %p476 = scmp.ne.s32.totalorder %s471, %s473
      %p477 = scmp.eq.s32.totalorder %s25, 0
      %p478 = por %p476, %p477
      %p479 = scmp.ne.s32.totalorder %s471, %s473
      %p480 = scmp.eq.s32.totalorder %s30, 1
      %p481 = por %p479, %p480
      %p482 = scmp.ne.s32.totalorder %s473, %s474
      %p483 = scmp.eq.s32.totalorder %s30, 0
      %p484 = por %p482, %p483
      %p485 = scmp.ne.s32.totalorder %s473, %s474
      %p486 = scmp.eq.s32.totalorder %s31, 1
      %p487 = por %p485, %p486
      %p489 = scmp.ne.s32.totalorder %s474, %s488
      %p490 = scmp.eq.s32.totalorder %s31, 0
      %p491 = por %p489, %p490
      %p492 = scmp.le.s32.totalorder 1, %s25
      %p493 = scmp.lt.s32.totalorder %s25, 3
      %p494 = pnand %p492, %p493
      %p495 = pneg %p494
      // Predicated region
      $region9: #{vit_forward.1} parent=5 // pred_check
        _
      $region10: #{vit_forward.1} parent=5 // pred_check_branch
        %497 = sbr.rel (%p494) target = $region12
      $region11: #{vit_forward.1} parent=5 // pred_region
        %s498 = ssub.s32 %s25, 1
        // Predicated region
        $region13: #{vit_forward.1} parent=11 // pred_check
          %p499 = pneg %p46
        $region14: #{vit_forward.1} parent=11 // pred_check_branch
          %501 = sbr.rel (%p499) target = $region16
        $region15: #{vit_forward.1} parent=11 // pred_region
          _
        $region16: #{vit_forward.1} parent=11 // pred_fallthru
          _
        // Predicated region
        $region17: #{vit_forward.1} parent=11 // pred_check
          %p502 = pneg %p67
        $region18: #{vit_forward.1} parent=11 // pred_check_branch
          %504 = sbr.rel (%p502) target = $region20
        $region19: #{vit_forward.1} parent=11 // pred_region
          _
        $region20: #{vit_forward.1} parent=11 // pred_fallthru
          _
        // Predicated region
        $region21: #{vit_forward.1} parent=11 // pred_check
          %p505 = pneg %p88
        $region22: #{vit_forward.1} parent=11 // pred_check_branch
          %507 = sbr.rel (%p505) target = $region24
        $region23: #{vit_forward.1} parent=11 // pred_region
          _
        $region24: #{vit_forward.1} parent=11 // pred_fallthru
          _
        // Predicated region
        $region25: #{vit_forward.1} parent=11 // pred_check
          %p508 = pneg %p109
        $region26: #{vit_forward.1} parent=11 // pred_check_branch
          %510 = sbr.rel (%p508) target = $region28
        $region27: #{vit_forward.1} parent=11 // pred_region
          _
        $region28: #{vit_forward.1} parent=11 // pred_fallthru
          _
        // Predicated region
        $region29: #{vit_forward.1} parent=11 // pred_check
          %p511 = pneg %p130
        $region30: #{vit_forward.1} parent=11 // pred_check_branch
          %513 = sbr.rel (%p511) target = $region32
        $region31: #{vit_forward.1} parent=11 // pred_region
          _
        $region32: #{vit_forward.1} parent=11 // pred_fallthru
          _
        // Predicated region
        $region33: #{vit_forward.1} parent=11 // pred_check
          %p514 = pneg %p151
        $region34: #{vit_forward.1} parent=11 // pred_check_branch
          %516 = sbr.rel (%p514) target = $region36
        $region35: #{vit_forward.1} parent=11 // pred_region
          _
        $region36: #{vit_forward.1} parent=11 // pred_fallthru
          _
      $region12: #{vit_forward.1} parent=5 // pred_fallthru
        _
      %p517 = scmp.lt.s32.totalorder %s25, 2
      // Predicated region
      $region37: #{vit_forward.1} parent=5 // pred_check
        %p518 = pneg %p517
      $region38: #{vit_forward.1} parent=5 // pred_check_branch
        %520 = sbr.rel (%p518) target = $region40
      $region39: #{vit_forward.1} parent=5 // pred_region
        // Predicated region
        $region41: #{vit_forward.1} parent=39 // pred_check
          %p521 = pneg %p171
        $region42: #{vit_forward.1} parent=39 // pred_check_branch
          %523 = sbr.rel (%p521) target = $region44
        $region43: #{vit_forward.1} parent=39 // pred_region
          %p524 = scmp.lt.s32.totalorder %s25, 1
          %s525 = scalar_select %p524, %s25, 1
          %s526 = scalar_lea.vmem %s6, %s525
        $region44: #{vit_forward.1} parent=39 // pred_fallthru
          _
        // Predicated region
        $region45: #{vit_forward.1} parent=39 // pred_check
          %p527 = pneg %p197
        $region46: #{vit_forward.1} parent=39 // pred_check_branch
          %529 = sbr.rel (%p527) target = $region48
        $region47: #{vit_forward.1} parent=39 // pred_region
          %p530 = scmp.lt.s32.totalorder %s25, 1
          %s531 = scalar_select %p530, %s25, 1
          %s532 = scalar_lea.vmem %s7, %s531
        $region48: #{vit_forward.1} parent=39 // pred_fallthru
          _
        // Predicated region
        $region49: #{vit_forward.1} parent=39 // pred_check
          %p533 = pneg %p223
        $region50: #{vit_forward.1} parent=39 // pred_check_branch
          %535 = sbr.rel (%p533) target = $region52
        $region51: #{vit_forward.1} parent=39 // pred_region
          %p536 = scmp.lt.s32.totalorder %s25, 1
          %s537 = scalar_select %p536, %s25, 1
          %s538 = smul.addr %s537, 4
          %s539 = smul.addr %s538, 8
          %s540 = scalar_lea.vmem %s8, %s539
        $region52: #{vit_forward.1} parent=39 // pred_fallthru
          _
        // Predicated region
        $region53: #{vit_forward.1} parent=39 // pred_check
          %p541 = pneg %p249
        $region54: #{vit_forward.1} parent=39 // pred_check_branch
          %543 = sbr.rel (%p541) target = $region56
        $region55: #{vit_forward.1} parent=39 // pred_region
          %p544 = scmp.lt.s32.totalorder %s25, 1
          %s545 = scalar_select %p544, %s25, 1
          %s546 = scalar_lea.vmem %s9, %s545
        $region56: #{vit_forward.1} parent=39 // pred_fallthru
          _
        // Predicated region
        $region57: #{vit_forward.1} parent=39 // pred_check
          %p547 = pneg %p275
        $region58: #{vit_forward.1} parent=39 // pred_check_branch
          %549 = sbr.rel (%p547) target = $region60
        $region59: #{vit_forward.1} parent=39 // pred_region
          %p550 = scmp.lt.s32.totalorder %s25, 1
          %s551 = scalar_select %p550, %s25, 1
          %s552 = smul.addr %s551, 4
          %s553 = smul.addr %s552, 8
          %s554 = scalar_lea.vmem %s10, %s553
        $region60: #{vit_forward.1} parent=39 // pred_fallthru
          _
        // Predicated region
        $region61: #{vit_forward.1} parent=39 // pred_check
          %p555 = pneg %p301
        $region62: #{vit_forward.1} parent=39 // pred_check_branch
          %557 = sbr.rel (%p555) target = $region64
        $region63: #{vit_forward.1} parent=39 // pred_region
          %p558 = scmp.lt.s32.totalorder %s25, 1
          %s559 = scalar_select %p558, %s25, 1
          %s560 = scalar_lea.vmem %s11, %s559
        $region64: #{vit_forward.1} parent=39 // pred_fallthru
          _
        // Predicated region
        $region65: #{vit_forward.1} parent=39 // pred_check
          %p561 = pneg %p327
        $region66: #{vit_forward.1} parent=39 // pred_check_branch
          %563 = sbr.rel (%p561) target = $region68
        $region67: #{vit_forward.1} parent=39 // pred_region
          %p564 = scmp.lt.s32.totalorder %s25, 1
          %s565 = scalar_select %p564, %s25, 1
          %s566 = scalar_lea.vmem %s12, %s565
        $region68: #{vit_forward.1} parent=39 // pred_fallthru
          _
        // Predicated region
        $region69: #{vit_forward.1} parent=39 // pred_check
          %p567 = pneg %p353
        $region70: #{vit_forward.1} parent=39 // pred_check_branch
          %569 = sbr.rel (%p567) target = $region72
        $region71: #{vit_forward.1} parent=39 // pred_region
          %p570 = scmp.lt.s32.totalorder %s25, 1
          %s571 = scalar_select %p570, %s25, 1
          %s572 = scalar_lea.vmem %s13, %s571
        $region72: #{vit_forward.1} parent=39 // pred_fallthru
          _
        // Predicated region
        $region73: #{vit_forward.1} parent=39 // pred_check
          %p573 = pneg %p379
        $region74: #{vit_forward.1} parent=39 // pred_check_branch
          %575 = sbr.rel (%p573) target = $region76
        $region75: #{vit_forward.1} parent=39 // pred_region
          %p576 = scmp.lt.s32.totalorder %s25, 1
          %s577 = scalar_select %p576, %s25, 1
          %s578 = smul.addr %s577, 4
          %s579 = smul.addr %s578, 8
          %s580 = scalar_lea.vmem %s14, %s579
        $region76: #{vit_forward.1} parent=39 // pred_fallthru
          _
        // Predicated region
        $region77: #{vit_forward.1} parent=39 // pred_check
          %p581 = pneg %p405
        $region78: #{vit_forward.1} parent=39 // pred_check_branch
          %583 = sbr.rel (%p581) target = $region80
        $region79: #{vit_forward.1} parent=39 // pred_region
          %p584 = scmp.lt.s32.totalorder %s25, 1
          %s585 = scalar_select %p584, %s25, 1
          %s586 = scalar_lea.vmem %s15, %s585
        $region80: #{vit_forward.1} parent=39 // pred_fallthru
          _
        // Predicated region
        $region81: #{vit_forward.1} parent=39 // pred_check
          %p587 = pneg %p431
        $region82: #{vit_forward.1} parent=39 // pred_check_branch
          %589 = sbr.rel (%p587) target = $region84
        $region83: #{vit_forward.1} parent=39 // pred_region
          %p590 = scmp.lt.s32.totalorder %s25, 1
          %s591 = scalar_select %p590, %s25, 1
          %s592 = smul.addr %s591, 16
          %s593 = smul.addr %s592, 8
          %s594 = scalar_lea.vmem %s16, %s593
        $region84: #{vit_forward.1} parent=39 // pred_fallthru
          _
        // Predicated region
        $region85: #{vit_forward.1} parent=39 // pred_check
          %p595 = pneg %p457
        $region86: #{vit_forward.1} parent=39 // pred_check_branch
          %597 = sbr.rel (%p595) target = $region88
        $region87: #{vit_forward.1} parent=39 // pred_region
          %p598 = scmp.lt.s32.totalorder %s25, 1
          %s599 = scalar_select %p598, %s25, 1
          %s600 = scalar_lea.vmem %s17, %s599
        $region88: #{vit_forward.1} parent=39 // pred_fallthru
          _
      $region40: #{vit_forward.1} parent=5 // pred_fallthru
        _
      %p601 = scmp.le.s32.totalorder 1, %s25
      %p602 = scmp.lt.s32.totalorder %s25, 3
      %p603 = pnand %p601, %p602
      %p604 = pneg %p603
      // Predicated region
      $region89: #{vit_forward.1} parent=5 // pred_check
        _
      $region90: #{vit_forward.1} parent=5 // pred_check_branch
        %606 = sbr.rel (%p603) target = $region92
      $region91: #{vit_forward.1} parent=5 // pred_region
        %s607 = ssub.s32 %s25, 1
        %p608 = pneg %p46
        %p609 = pneg %p43
        %p610 = pneg %p67
        %p611 = pneg %p64
        %p612 = pneg %p88
        %p613 = pneg %p85
        %p614 = pneg %p109
        %p615 = pneg %p106
        %p616 = pneg %p130
        %p617 = pneg %p127
        %p618 = pneg %p151
        %p619 = pneg %p148
        %p620 = scmp.lt.s32.totalorder %s30, 1
        %s621 = scalar_select %p620, %s30, 1
        %s622 = scalar_lea.vmem %s6, %s621
        %p623 = pneg %p177
        %p624 = pneg %p174
        %p625 = scmp.lt.s32.totalorder %s30, 1
        %s626 = scalar_select %p625, %s30, 1
        %s627 = scalar_lea.vmem %s7, %s626
        %p628 = pneg %p203
        %p629 = pneg %p200
        %p630 = scmp.lt.s32.totalorder %s30, 1
        %s631 = scalar_select %p630, %s30, 1
        %s632 = smul.addr %s631, 4
        %s633 = smul.addr %s632, 8
        %s634 = scalar_lea.vmem %s8, %s633
        %p635 = pneg %p229
        %p636 = pneg %p226
        %p637 = scmp.lt.s32.totalorder %s30, 1
        %s638 = scalar_select %p637, %s30, 1
        %s639 = scalar_lea.vmem %s9, %s638
        %p640 = pneg %p255
        %p641 = pneg %p252
        %p642 = scmp.lt.s32.totalorder %s30, 1
        %s643 = scalar_select %p642, %s30, 1
        %s644 = smul.addr %s643, 4
        %s645 = smul.addr %s644, 8
        %s646 = scalar_lea.vmem %s10, %s645
        %p647 = pneg %p281
        %p648 = pneg %p278
        %p649 = scmp.lt.s32.totalorder %s30, 1
        %s650 = scalar_select %p649, %s30, 1
        %s651 = scalar_lea.vmem %s11, %s650
        %p652 = pneg %p307
        %p653 = pneg %p304
        %p654 = scmp.lt.s32.totalorder %s30, 1
        %s655 = scalar_select %p654, %s30, 1
        %s656 = scalar_lea.vmem %s12, %s655
        %p657 = pneg %p333
        %p658 = pneg %p330
        %p659 = scmp.lt.s32.totalorder %s30, 1
        %s660 = scalar_select %p659, %s30, 1
        %s661 = scalar_lea.vmem %s13, %s660
        %p662 = pneg %p359
        %p663 = pneg %p356
        %p664 = scmp.lt.s32.totalorder %s30, 1
        %s665 = scalar_select %p664, %s30, 1
        %s666 = smul.addr %s665, 4
        %s667 = smul.addr %s666, 8
        %s668 = scalar_lea.vmem %s14, %s667
        %p669 = pneg %p385
        %p670 = pneg %p382
        %p671 = scmp.lt.s32.totalorder %s30, 1
        %s672 = scalar_select %p671, %s30, 1
        %s673 = scalar_lea.vmem %s15, %s672
        %p674 = pneg %p411
        %p675 = pneg %p408
        %p676 = scmp.lt.s32.totalorder %s30, 1
        %s677 = scalar_select %p676, %s30, 1
        %s678 = smul.addr %s677, 16
        %s679 = smul.addr %s678, 8
        %s680 = scalar_lea.vmem %s16, %s679
        %p681 = pneg %p437
        %p682 = pneg %p434
        %p683 = scmp.lt.s32.totalorder %s30, 1
        %s684 = scalar_select %p683, %s30, 1
        %s685 = scalar_lea.vmem %s17, %s684
        %p686 = pneg %p463
        %p687 = pneg %p460
        %p688 = pneg %p484
        %p689 = pneg %p481
        %p690 = scmp.lt.s32.totalorder %s30, 1
        %s691 = scalar_select %p690, %s30, 1
        %s692 = scalar_lea.vmem %s6, %s691
        %p693 = scmp.lt.s32.totalorder %s30, 1
        %s694 = scalar_select %p693, %s30, 1
        %s695 = scalar_lea.vmem %s7, %s694
        %p696 = scmp.lt.s32.totalorder %s30, 1
        %s697 = scalar_select %p696, %s30, 1
        %s698 = smul.addr %s697, 4
        %s699 = smul.addr %s698, 8
        %s700 = scalar_lea.vmem %s8, %s699
        %p701 = scmp.lt.s32.totalorder %s30, 1
        %s702 = scalar_select %p701, %s30, 1
        %s703 = scalar_lea.vmem %s9, %s702
        %p704 = scmp.lt.s32.totalorder %s30, 1
        %s705 = scalar_select %p704, %s30, 1
        %s706 = smul.addr %s705, 4
        %s707 = smul.addr %s706, 8
        %s708 = scalar_lea.vmem %s10, %s707
        %p709 = scmp.lt.s32.totalorder %s30, 1
        %s710 = scalar_select %p709, %s30, 1
        %s711 = scalar_lea.vmem %s11, %s710
        %p712 = scmp.lt.s32.totalorder %s30, 1
        %s713 = scalar_select %p712, %s30, 1
        %s714 = scalar_lea.vmem %s12, %s713
        %p715 = scmp.lt.s32.totalorder %s30, 1
        %s716 = scalar_select %p715, %s30, 1
        %s717 = scalar_lea.vmem %s13, %s716
        %p718 = scmp.lt.s32.totalorder %s30, 1
        %s719 = scalar_select %p718, %s30, 1
        %s720 = smul.addr %s719, 4
        %s721 = smul.addr %s720, 8
        %s722 = scalar_lea.vmem %s14, %s721
        %p723 = scmp.lt.s32.totalorder %s30, 1
        %s724 = scalar_select %p723, %s30, 1
        %s725 = scalar_lea.vmem %s15, %s724
        %p726 = scmp.lt.s32.totalorder %s30, 1
        %s727 = scalar_select %p726, %s30, 1
        %s728 = smul.addr %s727, 16
        %s729 = smul.addr %s728, 8
        %s730 = scalar_lea.vmem %s16, %s729
        %p731 = scmp.lt.s32.totalorder %s30, 1
        %s732 = scalar_select %p731, %s30, 1
        %s733 = scalar_lea.vmem %s17, %s732
        %p734 = scmp.eq.s32.totalorder %s30, 0
        // Predicated region
        $region93: #{vit_forward.1} parent=91 // pred_check
          %p735 = pneg %p734
        $region94: #{vit_forward.1} parent=91 // pred_check_branch
          %737 = sbr.rel (%p735) target = $region96
        $region95: #{vit_forward.1} parent=91 // pred_region
          %v738 = vld [vmem:[%s0] sm:$0xff]
          %v739 = vld [vmem:[%s0 + $0x8] sm:$0xff]
          %v740 = vld [vmem:[%s0 + $0x10] sm:$0xff]
          %v741 = vld [vmem:[%s0 + $0x18] sm:$0xff]
          %v742 = vld [vmem:[%s0 + $0x20] sm:$0xff]
          %v743 = vld [vmem:[%s0 + $0x28] sm:$0xff]
          %v744 = vld [vmem:[%s0 + $0x30] sm:$0xff]
          %v745 = vld [vmem:[%s0 + $0x38] sm:$0xff]
          %v746 = vld [vmem:[%s1] sm:$0xff]
          %v747 = vld [vmem:[%s1 + $0x8] sm:$0xff]
          %v748 = vld [vmem:[%s1 + $0x10] sm:$0xff]
          %v749 = vld [vmem:[%s1 + $0x18] sm:$0xff]
          %v750 = vld [vmem:[%s1 + $0x20] sm:$0xff]
          %v751 = vld [vmem:[%s1 + $0x28] sm:$0xff]
          %v752 = vld [vmem:[%s1 + $0x30] sm:$0xff]
          %v753 = vld [vmem:[%s1 + $0x38] sm:$0xff]
          %v754 = vld [vmem:[%s1 + $0x40] sm:$0xff]
          %v755 = vld [vmem:[%s1 + $0x48] sm:$0xff]
          %v756 = vld [vmem:[%s1 + $0x50] sm:$0xff]
          %v757 = vld [vmem:[%s1 + $0x58] sm:$0xff]
          %v758 = vld [vmem:[%s1 + $0x60] sm:$0xff]
          %v759 = vld [vmem:[%s1 + $0x68] sm:$0xff]
          %v760 = vld [vmem:[%s1 + $0x70] sm:$0xff]
          %v761 = vld [vmem:[%s1 + $0x78] sm:$0xff]
          %v762 = vld [vmem:[%s1 + $0x80] sm:$0xff]
          %v763 = vld [vmem:[%s1 + $0x88] sm:$0xff]
          %v764 = vld [vmem:[%s1 + $0x90] sm:$0xff]
          %v765 = vld [vmem:[%s1 + $0x98] sm:$0xff]
          %v766 = vld [vmem:[%s1 + $0xa0] sm:$0xff]
          %v767 = vld [vmem:[%s1 + $0xa8] sm:$0xff]
          %v768 = vld [vmem:[%s1 + $0xb0] sm:$0xff]
          %v769 = vld [vmem:[%s1 + $0xb8] sm:$0xff]
          %v770 = vld [vmem:[%s2] sm:$0xff]
          %v771 = vld [vmem:[%s2 + $0x8] sm:$0xff]
          %v772 = vld [vmem:[%s2 + $0x10] sm:$0xff]
          %v773 = vld [vmem:[%s2 + $0x18] sm:$0xff]
          %vm774 = vcmask 523264
          %v776 = vsel %vm774, %v739, 0
          %v779 = vsel %vm774, %v741, 0
          %v782 = vsel %vm774, %v743, 0
          %v785 = vsel %vm774, %v745, 0
          %787 = vmatprep.subr.mxu0 0.0
          %788 = vmatpush1.msra.mxu0 %v746
          %789 = vmatprep.subr.mxu0 0.0
          %790 = vmatpush1.msra.mxu0 %v747
          %791 = vmatprep.subr.mxu0 0.0
          %792 = vmatpush1.msra.mxu0 %v748
          %793 = vmatprep.subr.mxu0 0.0
          %794 = vmatpush1.msra.mxu0 %v749
          %795 = vmatprep.subr.mxu0 0.0
          %796 = vmatpush1.msra.mxu0 %v750
          %797 = vmatprep.subr.mxu0 0.0
          %798 = vmatpush1.msra.mxu0 %v751
          %799 = vmatprep.subr.mxu0 0.0
          %800 = vmatpush1.msra.mxu0 %v752
          %801 = vmatprep.subr.mxu0 0.0
          %802 = vmatpush1.msra.mxu0 %v753
          %803 = vmatprep.subr.mxu0 0.0
          %804 = vmatpush1.msra.mxu0 %v754
          %805 = vmatprep.subr.mxu0 0.0
          %806 = vmatpush1.msra.mxu0 %v755
          %807 = vmatprep.subr.mxu0 0.0
          %808 = vmatpush1.msra.mxu0 %v756
          %809 = vmatprep.subr.mxu0 0.0
          %810 = vmatpush1.msra.mxu0 %v757
          %811 = vmatprep.subr.mxu0 0.0
          %812 = vmatpush1.msra.mxu0 %v758
          %813 = vmatprep.subr.mxu0 0.0
          %814 = vmatpush1.msra.mxu0 %v759
          %815 = vmatprep.subr.mxu0 0.0
          %816 = vmatpush1.msra.mxu0 %v760
          %817 = vmatprep.subr.mxu0 0.0
          %818 = vmatpush1.msra.mxu0 %v761
          %819 = vmatprep.subr.mxu0 0.0
          %820 = vmatpush1.msra.mxu0 %v762
          %821 = vmatprep.subr.mxu0 0.0
          %822 = vmatpush1.msra.mxu0 %v763
          %823 = vmatprep.subr.mxu0 0.0
          %824 = vmatpush1.msra.mxu0 %v764
          %825 = vmatprep.subr.mxu0 0.0
          %826 = vmatpush1.msra.mxu0 %v765
          %827 = vmatprep.subr.mxu0 0.0
          %828 = vmatpush1.msra.mxu0 %v766
          %829 = vmatprep.subr.mxu0 0.0
          %830 = vmatpush1.msra.mxu0 %v767
          %831 = vmatprep.subr.mxu0 0.0
          %832 = vmatpush1.msra.mxu0 %v768
          %833 = vmatprep.subr.mxu0 0.0
          %834 = vmatpush1.msra.mxu0 %v769
          %835 = vmatprep.subr.mxu0 0.0
          %836 = vmatpush1.msra.mxu0 0.0
          %837 = vmatprep.subr.mxu0 0.0
          %838 = vmatpush1.msra.mxu0 0.0
          %839 = vmatprep.subr.mxu0 0.0
          %840 = vmatpush1.msra.mxu0 0.0
          %841 = vmatprep.subr.mxu0 0.0
          %842 = vmatpush1.msra.mxu0 0.0
          %843 = vmatprep.subr.mxu0 0.0
          %844 = vmatpush1.msra.mxu0 0.0
          %845 = vmatprep.subr.mxu0 0.0
          %846 = vmatpush1.msra.mxu0 0.0
          %847 = vmatprep.subr.mxu0 0.0
          %848 = vmatpush1.msra.mxu0 0.0
          %849 = vmatprep.subr.mxu0 0.0
          %850 = vmatpush1.msra.mxu0 0.0
          %851 = vmatprep.mubr.f32.mxu0 %v776
          %852 = vmatmul.mubr.f32.gmra.mrb[0].mxu0 %v738
          %v853 = vpop.f32.mrb[0].mxu0
          %v854 = vadd.f32 %v770, %v853
          %v855 = vpop.f32.mrb[0].mxu0
          %856 = vmatprep.mubr.f32.mxu0 %v779
          %857 = vmatmul.mubr.f32.gmra.mrb[0].mxu0 %v740
          %v858 = vpop.f32.mrb[0].mxu0
          %v859 = vadd.f32 %v771, %v858
          %v860 = vpop.f32.mrb[0].mxu0
          %861 = vmatprep.mubr.f32.mxu0 %v782
          %862 = vmatmul.mubr.f32.gmra.mrb[0].mxu0 %v742
          %v863 = vpop.f32.mrb[0].mxu0
          %v864 = vadd.f32 %v772, %v863
          %v865 = vpop.f32.mrb[0].mxu0
          %866 = vmatprep.mubr.f32.mxu0 %v785
          %867 = vmatmul.mubr.f32.gmra.mrb[0].mxu0 %v744
          %v868 = vpop.f32.mrb[0].mxu0
          %v869 = vadd.f32 %v773, %v868
          %v870 = vpop.f32.mrb[0].mxu0
          %871 = vdwg.mxu0
          %vm872 = vcmask 261120
          %873 = vst.msk [vmem:[#allocation2] sm:$0xff] %vm872, %v854
          %874 = vst.msk [vmem:[#allocation2 + $0x8] sm:$0xff] %vm872, %v859
          %875 = vst.msk [vmem:[#allocation2 + $0x10] sm:$0xff] %vm872, %v864
          %876 = vst.msk [vmem:[#allocation2 + $0x18] sm:$0xff] %vm872, %v869
        $region96: #{vit_forward.1} parent=91 // pred_fallthru
          _
        %v877 = vld [vmem:[#allocation2] sm:$0xff]
        %v878 = vld [vmem:[#allocation2 + $0x8] sm:$0xff]
        %v879 = vld [vmem:[#allocation2 + $0x10] sm:$0xff]
        %v880 = vld [vmem:[#allocation2 + $0x18] sm:$0xff]
        %v881 = vld [vmem:[%s692] sm:$0x1]
        %v882 = vld [vmem:[%s695] sm:$0x1]
        %vm883 = vcmask 261120
        %v884 = vsel %vm883, %v877, 0.0
        %885 = vadd.xlane.f32.xlu0 %v884
        %v886 = vpop.xlane.xlu0 %885
        %v887 = vsel %vm883, %v878, 0.0
        %888 = vadd.xlane.f32.xlu0 %v887
        %v889 = vpop.xlane.xlu0 %888
        %v890 = vsel %vm883, %v879, 0.0
        %891 = vadd.xlane.f32.xlu0 %v890
        %v892 = vpop.xlane.xlu0 %891
        %v893 = vsel %vm883, %v880, 0.0
        %894 = vadd.xlane.f32.xlu0 %v893
        %v895 = vpop.xlane.xlu0 %894
        %v896 = vrcp.pop 32.0
        %v897 = vmul.f32 %v886, %v896
        %v898 = vmul.f32 %v889, %v896
        %v899 = vmul.f32 %v892, %v896
        %v900 = vmul.f32 %v895, %v896
        %v901 = vsub.f32 %v877, %v897
        %v902 = vsub.f32 %v878, %v898
        %v903 = vsub.f32 %v879, %v899
        %v904 = vsub.f32 %v880, %v900
        %v905 = vmul.f32 %v901, %v901
        %v906 = vmul.f32 %v902, %v902
        %v907 = vmul.f32 %v903, %v903
        %v908 = vmul.f32 %v904, %v904
        %v909 = vsel %vm883, %v905, 0.0
        %910 = vadd.xlane.f32.xlu0 %v909
        %v911 = vpop.xlane.xlu0 %910
        %v912 = vsel %vm883, %v906, 0.0
        %913 = vadd.xlane.f32.xlu0 %v912
        %v914 = vpop.xlane.xlu0 %913
        %v915 = vsel %vm883, %v907, 0.0
        %916 = vadd.xlane.f32.xlu0 %v915
        %v917 = vpop.xlane.xlu0 %916
        %v918 = vsel %vm883, %v908, 0.0
        %919 = vadd.xlane.f32.xlu0 %v918
        %v920 = vpop.xlane.xlu0 %919
        %v921 = vmul.f32 %v911, %v896
        %v922 = vmul.f32 %v914, %v896
        %v923 = vmul.f32 %v917, %v896
        %v924 = vmul.f32 %v920, %v896
        %v925 = vadd.f32 %v921, 1e-06
        %v926 = vadd.f32 %v922, 1e-06
        %v927 = vadd.f32 %v923, 1e-06
        %v928 = vadd.f32 %v924, 1e-06
        %v929 = vrsqrt.pop %v925
        %v930 = vrsqrt.pop %v926
        %v931 = vrsqrt.pop %v927
        %v932 = vrsqrt.pop %v928
        %v933 = vmul.f32 %v901, %v929
        %v934 = vmul.f32 %v902, %v930
        %v935 = vmul.f32 %v903, %v931
        %v936 = vmul.f32 %v904, %v932
        %v938 = vlaneseq
        %v939 = vshrl.u32 %v938, 7
        %v940 = vsub.s32 0, %v939
        %v941 = vrot.slane %v881, %v940
        %v943 = vmul.f32 %v933, %v941
        %v944 = vmul.f32 %v934, %v941
        %v945 = vmul.f32 %v935, %v941
        %v946 = vmul.f32 %v936, %v941
        %v948 = vlaneseq
        %v949 = vshrl.u32 %v948, 7
        %v950 = vsub.s32 0, %v949
        %v951 = vrot.slane %v882, %v950
        %v953 = vadd.f32 %v943, %v951
        %v954 = vadd.f32 %v944, %v951
        %v955 = vadd.f32 %v945, %v951
        %v956 = vadd.f32 %v946, %v951
        %v957 = vld [vmem:[%s700] sm:$0xff]
        %v958 = vld [vmem:[%s700 + $0x8] sm:$0xff]
        %v959 = vld [vmem:[%s700 + $0x10] sm:$0xff]
        %v960 = vld [vmem:[%s700 + $0x18] sm:$0xff]
        %v961 = vld [vmem:[%s703] sm:$0x1]
        %v963 = vlaneseq
        %v964 = vshrl.u32 %v963, 7
        %v965 = vsub.s32 0, %v964
        %v966 = vrot.slane %v961, %v965
        %v969 = vsel %vm883, %v953, 0
        %v972 = vsel %vm883, %v954, 0
        %v975 = vsel %vm883, %v955, 0
        %v978 = vsel %vm883, %v956, 0
        %980 = vmatprep.subr.mxu0 0.0
        %981 = vmatpush1.msra.mxu0 %v957
        %982 = vmatprep.subr.mxu0 0.0
        %983 = vmatpush1.msra.mxu0 %v958
        %984 = vmatprep.subr.mxu0 0.0
        %985 = vmatpush1.msra.mxu0 %v959
        %986 = vmatprep.subr.mxu0 0.0
        %987 = vmatpush1.msra.mxu0 %v960
        %988 = vmatprep.subr.mxu0 0.0
        %989 = vmatpush1.msra.mxu0 0.0
        %990 = vmatprep.subr.mxu0 0.0
        %991 = vmatpush1.msra.mxu0 0.0
        %992 = vmatprep.subr.mxu0 0.0
        %993 = vmatpush1.msra.mxu0 0.0
        %994 = vmatprep.subr.mxu0 0.0
        %995 = vmatpush1.msra.mxu0 0.0
        %996 = vmatprep.subr.mxu0 0.0
        %997 = vmatpush1.msra.mxu0 0.0
        %998 = vmatprep.subr.mxu0 0.0
        %999 = vmatpush1.msra.mxu0 0.0
        %1000 = vmatprep.subr.mxu0 0.0
        %1001 = vmatpush1.msra.mxu0 0.0
        %1002 = vmatprep.subr.mxu0 0.0
        %1003 = vmatpush1.msra.mxu0 0.0
        %1004 = vmatprep.subr.mxu0 0.0
        %1005 = vmatpush1.msra.mxu0 0.0
        %1006 = vmatprep.subr.mxu0 0.0
        %1007 = vmatpush1.msra.mxu0 0.0
        %1008 = vmatprep.subr.mxu0 0.0
        %1009 = vmatpush1.msra.mxu0 0.0
        %1010 = vmatprep.subr.mxu0 0.0
        %1011 = vmatpush1.msra.mxu0 0.0
        %1012 = vmatprep.subr.mxu0 0.0
        %1013 = vmatpush1.msra.mxu0 0.0
        %1014 = vmatprep.subr.mxu0 0.0
        %1015 = vmatpush1.msra.mxu0 0.0
        %1016 = vmatprep.subr.mxu0 0.0
        %1017 = vmatpush1.msra.mxu0 0.0
        %1018 = vmatprep.subr.mxu0 0.0
        %1019 = vmatpush1.msra.mxu0 0.0
        %1020 = vmatprep.subr.mxu0 0.0
        %1021 = vmatpush1.msra.mxu0 0.0
        %1022 = vmatprep.subr.mxu0 0.0
        %1023 = vmatpush1.msra.mxu0 0.0
        %1024 = vmatprep.subr.mxu0 0.0
        %1025 = vmatpush1.msra.mxu0 0.0
        %1026 = vmatprep.subr.mxu0 0.0
        %1027 = vmatpush1.msra.mxu0 0.0
        %1028 = vmatprep.subr.mxu0 0.0
        %1029 = vmatpush1.msra.mxu0 0.0
        %1030 = vmatprep.subr.mxu0 0.0
        %1031 = vmatpush1.msra.mxu0 0.0
        %1032 = vmatprep.subr.mxu0 0.0
        %1033 = vmatpush1.msra.mxu0 0.0
        %1034 = vmatprep.subr.mxu0 0.0
        %1035 = vmatpush1.msra.mxu0 0.0
        %1036 = vmatprep.subr.mxu0 0.0
        %1037 = vmatpush1.msra.mxu0 0.0
        %1038 = vmatprep.subr.mxu0 0.0
        %1039 = vmatpush1.msra.mxu0 0.0
        %1040 = vmatprep.subr.mxu0 0.0
        %1041 = vmatpush1.msra.mxu0 0.0
        %1042 = vmatprep.subr.mxu0 0.0
        %1043 = vmatpush1.msra.mxu0 0.0
        %1044 = vmatprep.mubr.f32.mxu0 0.0
        %1045 = vmatmul.mubr.f32.gmra.mrb[0].mxu0 %v969
        %v1046 = vpop.f32.mrb[0].mxu0
        %v1047 = vadd.f32 %v966, %v1046
        %v1048 = vpop.f32.mrb[0].mxu0
        %1049 = vmatprep.mubr.f32.mxu0 0.0
        %1050 = vmatmul.mubr.f32.gmra.mrb[0].mxu0 %v972
        %v1051 = vpop.f32.mrb[0].mxu0
        %v1052 = vadd.f32 %v966, %v1051
        %v1053 = vpop.f32.mrb[0].mxu0
        %1054 = vmatprep.mubr.f32.mxu0 0.0
        %1055 = vmatmul.mubr.f32.gmra.mrb[0].mxu0 %v975
        %v1056 = vpop.f32.mrb[0].mxu0
        %v1057 = vadd.f32 %v966, %v1056
        %v1058 = vpop.f32.mrb[0].mxu0
        %1059 = vmatprep.mubr.f32.mxu0 0.0
        %1060 = vmatmul.mubr.f32.gmra.mrb[0].mxu0 %v978
        %v1061 = vpop.f32.mrb[0].mxu0
        %v1062 = vadd.f32 %v966, %v1061
        %v1063 = vpop.f32.mrb[0].mxu0
        %1064 = vdwg.mxu0
        %1069 = vrot.lane.b32.xlu0 %v1047, 120
        %v1070 = vpop.permute.xlu0 %1069
        %1071 = vrot.lane.b32.xlu0 %v1052, 120
        %v1072 = vpop.permute.xlu0 %1071
        %1073 = vrot.lane.b32.xlu0 %v1057, 120
        %v1074 = vpop.permute.xlu0 %1073
        %1075 = vrot.lane.b32.xlu0 %v1062, 120
        %v1076 = vpop.permute.xlu0 %1075
        %1077 = vrot.lane.b32.xlu0 %v1047, 112
        %v1078 = vpop.permute.xlu0 %1077
        %1079 = vrot.lane.b32.xlu0 %v1052, 112
        %v1080 = vpop.permute.xlu0 %1079
        %1081 = vrot.lane.b32.xlu0 %v1057, 112
        %v1082 = vpop.permute.xlu0 %1081
        %1083 = vrot.lane.b32.xlu0 %v1062, 112
        %v1084 = vpop.permute.xlu0 %1083
        %1085 = vrot.lane.b32.xlu0 %v1047, 104
        %v1086 = vpop.permute.xlu0 %1085
        %1087 = vrot.lane.b32.xlu0 %v1052, 104
        %v1088 = vpop.permute.xlu0 %1087
        %1089 = vrot.lane.b32.xlu0 %v1057, 104
        %v1090 = vpop.permute.xlu0 %1089
        %1091 = vrot.lane.b32.xlu0 %v1062, 104
        %v1092 = vpop.permute.xlu0 %1091
        %1093 = vrot.lane.b32.xlu0 %v1047, 96
        %v1094 = vpop.permute.xlu0 %1093
        %1095 = vrot.lane.b32.xlu0 %v1052, 96
        %v1096 = vpop.permute.xlu0 %1095
        %1097 = vrot.lane.b32.xlu0 %v1057, 96
        %v1098 = vpop.permute.xlu0 %1097
        %1099 = vrot.lane.b32.xlu0 %v1062, 96
        %v1100 = vpop.permute.xlu0 %1099
        %vm1101 = vcmask 64512
        %v1102 = vsel %vm1101, %v1047, 0
        %v1104 = vsel %vm1101, %v1052, 0
        %v1106 = vsel %vm1101, %v1057, 0
        %v1108 = vsel %vm1101, %v1062, 0
        %v1110 = vsel %vm1101, %v1094, 0
        %v1112 = vsel %vm1101, %v1096, 0
        %v1114 = vsel %vm1101, %v1098, 0
        %v1116 = vsel %vm1101, %v1100, 0
        %1118 = vmatprep.subr.mxu0 0.0
        %1119 = vmatpush1.xpose.msra.mxu0 %v1110
        %1120 = vmatprep.subr.mxu0 0.0
        %1121 = vmatpush1.xpose.msra.mxu0 %v1112
        %1122 = vmatprep.subr.mxu0 0.0
        %1123 = vmatpush1.xpose.msra.mxu0 %v1114
        %1124 = vmatprep.subr.mxu0 0.0
        %1125 = vmatpush1.xpose.msra.mxu0 %v1116
        %1126 = vmatprep.subr.mxu0 0.0
        %1127 = vmatpush1.xpose.msra.mxu0 0.0
        %1128 = vmatprep.subr.mxu0 0.0
        %1129 = vmatpush1.xpose.msra.mxu0 0.0
        %1130 = vmatprep.subr.mxu0 0.0
        %1131 = vmatpush1.xpose.msra.mxu0 0.0
        %1132 = vmatprep.subr.mxu0 0.0
        %1133 = vmatpush1.xpose.msra.mxu0 0.0
        %1134 = vmatprep.subr.mxu0 0.0
        %1135 = vmatpush1.xpose.msra.mxu0 0.0
        %1136 = vmatprep.subr.mxu0 0.0
        %1137 = vmatpush1.xpose.msra.mxu0 0.0
        %1138 = vmatprep.subr.mxu0 0.0
        %1139 = vmatpush1.xpose.msra.mxu0 0.0
        %1140 = vmatprep.subr.mxu0 0.0
        %1141 = vmatpush1.xpose.msra.mxu0 0.0
        %1142 = vmatprep.subr.mxu0 0.0
        %1143 = vmatpush1.xpose.msra.mxu0 0.0
        %1144 = vmatprep.subr.mxu0 0.0
        %1145 = vmatpush1.xpose.msra.mxu0 0.0
        %1146 = vmatprep.subr.mxu0 0.0
        %1147 = vmatpush1.xpose.msra.mxu0 0.0
        %1148 = vmatprep.subr.mxu0 0.0
        %1149 = vmatpush1.xpose.msra.mxu0 0.0
        %1150 = vmatprep.subr.mxu0 0.0
        %1151 = vmatpush1.xpose.msra.mxu0 0.0
        %1152 = vmatprep.subr.mxu0 0.0
        %1153 = vmatpush1.xpose.msra.mxu0 0.0
        %1154 = vmatprep.subr.mxu0 0.0
        %1155 = vmatpush1.xpose.msra.mxu0 0.0
        %1156 = vmatprep.subr.mxu0 0.0
        %1157 = vmatpush1.xpose.msra.mxu0 0.0
        %1158 = vmatprep.subr.mxu0 0.0
        %1159 = vmatpush1.xpose.msra.mxu0 0.0
        %1160 = vmatprep.subr.mxu0 0.0
        %1161 = vmatpush1.xpose.msra.mxu0 0.0
        %1162 = vmatprep.subr.mxu0 0.0
        %1163 = vmatpush1.xpose.msra.mxu0 0.0
        %1164 = vmatprep.subr.mxu0 0.0
        %1165 = vmatpush1.xpose.msra.mxu0 0.0
        %1166 = vmatprep.subr.mxu0 0.0
        %1167 = vmatpush1.xpose.msra.mxu0 0.0
        %1168 = vmatprep.subr.mxu0 0.0
        %1169 = vmatpush1.xpose.msra.mxu0 0.0
        %1170 = vmatprep.subr.mxu0 0.0
        %1171 = vmatpush1.xpose.msra.mxu0 0.0
        %1172 = vmatprep.subr.mxu0 0.0
        %1173 = vmatpush1.xpose.msra.mxu0 0.0
        %1174 = vmatprep.subr.mxu0 0.0
        %1175 = vmatpush1.xpose.msra.mxu0 0.0
        %1176 = vmatprep.subr.mxu0 0.0
        %1177 = vmatpush1.xpose.msra.mxu0 0.0
        %1178 = vmatprep.subr.mxu0 0.0
        %1179 = vmatpush1.xpose.msra.mxu0 0.0
        %1180 = vmatprep.subr.mxu0 0.0
        %1181 = vmatpush1.xpose.msra.mxu0 0.0
        %1182 = vmatprep.mubr.f32.mxu0 0.0
        %1183 = vmatmul.mubr.f32.gmra.mrb[0].mxu0 %v1102
        %v1184 = vpop.f32.mrb[0].mxu0
        %v1185 = vadd.f32 0.0, %v1184
        %v1186 = vpop.f32.mrb[0].mxu0
        %1187 = vmatprep.mubr.f32.mxu0 0.0
        %1188 = vmatmul.mubr.f32.gmra.mrb[0].mxu0 %v1104
        %v1189 = vpop.f32.mrb[0].mxu0
        %v1190 = vadd.f32 0.0, %v1189
        %v1191 = vpop.f32.mrb[0].mxu0
        %1192 = vmatprep.mubr.f32.mxu0 0.0
        %1193 = vmatmul.mubr.f32.gmra.mrb[0].mxu0 %v1106
        %v1194 = vpop.f32.mrb[0].mxu0
        %v1195 = vadd.f32 0.0, %v1194
        %v1196 = vpop.f32.mrb[0].mxu0
        %1197 = vmatprep.mubr.f32.mxu0 0.0
        %1198 = vmatmul.mubr.f32.gmra.mrb[0].mxu0 %v1108
        %v1199 = vpop.f32.mrb[0].mxu0
        %v1200 = vadd.f32 0.0, %v1199
        %v1201 = vpop.f32.mrb[0].mxu0
        %1202 = vdwg.mxu0
        %1203 = vrot.lane.b32.xlu0 %v1070, 96
        %v1204 = vpop.permute.xlu0 %1203
        %1205 = vrot.lane.b32.xlu0 %v1072, 96
        %v1206 = vpop.permute.xlu0 %1205
        %1207 = vrot.lane.b32.xlu0 %v1074, 96
        %v1208 = vpop.permute.xlu0 %1207
        %1209 = vrot.lane.b32.xlu0 %v1076, 96
        %v1210 = vpop.permute.xlu0 %1209
        %v1211 = vsel %vm1101, %v1070, 0
        %v1213 = vsel %vm1101, %v1072, 0
        %v1215 = vsel %vm1101, %v1074, 0
        %v1217 = vsel %vm1101, %v1076, 0
        %v1219 = vsel %vm1101, %v1204, 0
        %v1221 = vsel %vm1101, %v1206, 0
        %v1223 = vsel %vm1101, %v1208, 0
        %v1225 = vsel %vm1101, %v1210, 0
        %1227 = vmatprep.subr.mxu0 0.0
        %1228 = vmatpush1.xpose.msra.mxu0 %v1219
        %1229 = vmatprep.subr.mxu0 0.0
        %1230 = vmatpush1.xpose.msra.mxu0 %v1221
        %1231 = vmatprep.subr.mxu0 0.0
        %1232 = vmatpush1.xpose.msra.mxu0 %v1223
        %1233 = vmatprep.subr.mxu0 0.0
        %1234 = vmatpush1.xpose.msra.mxu0 %v1225
        %1235 = vmatprep.subr.mxu0 0.0
        %1236 = vmatpush1.xpose.msra.mxu0 0.0
        %1237 = vmatprep.subr.mxu0 0.0
        %1238 = vmatpush1.xpose.msra.mxu0 0.0
        %1239 = vmatprep.subr.mxu0 0.0
        %1240 = vmatpush1.xpose.msra.mxu0 0.0
        %1241 = vmatprep.subr.mxu0 0.0
        %1242 = vmatpush1.xpose.msra.mxu0 0.0
        %1243 = vmatprep.subr.mxu0 0.0
        %1244 = vmatpush1.xpose.msra.mxu0 0.0
        %1245 = vmatprep.subr.mxu0 0.0
        %1246 = vmatpush1.xpose.msra.mxu0 0.0
        %1247 = vmatprep.subr.mxu0 0.0
        %1248 = vmatpush1.xpose.msra.mxu0 0.0
        %1249 = vmatprep.subr.mxu0 0.0
        %1250 = vmatpush1.xpose.msra.mxu0 0.0
        %1251 = vmatprep.subr.mxu0 0.0
        %1252 = vmatpush1.xpose.msra.mxu0 0.0
        %1253 = vmatprep.subr.mxu0 0.0
        %1254 = vmatpush1.xpose.msra.mxu0 0.0
        %1255 = vmatprep.subr.mxu0 0.0
        %1256 = vmatpush1.xpose.msra.mxu0 0.0
        %1257 = vmatprep.subr.mxu0 0.0
        %1258 = vmatpush1.xpose.msra.mxu0 0.0
        %1259 = vmatprep.subr.mxu0 0.0
        %1260 = vmatpush1.xpose.msra.mxu0 0.0
        %1261 = vmatprep.subr.mxu0 0.0
        %1262 = vmatpush1.xpose.msra.mxu0 0.0
        %1263 = vmatprep.subr.mxu0 0.0
        %1264 = vmatpush1.xpose.msra.mxu0 0.0
        %1265 = vmatprep.subr.mxu0 0.0
        %1266 = vmatpush1.xpose.msra.mxu0 0.0
        %1267 = vmatprep.subr.mxu0 0.0
        %1268 = vmatpush1.xpose.msra.mxu0 0.0
        %1269 = vmatprep.subr.mxu0 0.0
        %1270 = vmatpush1.xpose.msra.mxu0 0.0
        %1271 = vmatprep.subr.mxu0 0.0
        %1272 = vmatpush1.xpose.msra.mxu0 0.0
        %1273 = vmatprep.subr.mxu0 0.0
        %1274 = vmatpush1.xpose.msra.mxu0 0.0
        %1275 = vmatprep.subr.mxu0 0.0
        %1276 = vmatpush1.xpose.msra.mxu0 0.0
        %1277 = vmatprep.subr.mxu0 0.0
        %1278 = vmatpush1.xpose.msra.mxu0 0.0
        %1279 = vmatprep.subr.mxu0 0.0
        %1280 = vmatpush1.xpose.msra.mxu0 0.0
        %1281 = vmatprep.subr.mxu0 0.0
        %1282 = vmatpush1.xpose.msra.mxu0 0.0
        %1283 = vmatprep.subr.mxu0 0.0
        %1284 = vmatpush1.xpose.msra.mxu0 0.0
        %1285 = vmatprep.subr.mxu0 0.0
        %1286 = vmatpush1.xpose.msra.mxu0 0.0
        %1287 = vmatprep.subr.mxu0 0.0
        %1288 = vmatpush1.xpose.msra.mxu0 0.0
        %1289 = vmatprep.subr.mxu0 0.0
        %1290 = vmatpush1.xpose.msra.mxu0 0.0
        %1291 = vmatprep.mubr.f32.mxu0 0.0
        %1292 = vmatmul.mubr.f32.gmra.mrb[0].mxu0 %v1211
        %v1293 = vpop.f32.mrb[0].mxu0
        %v1294 = vadd.f32 0.0, %v1293
        %v1295 = vpop.f32.mrb[0].mxu0
        %1296 = vmatprep.mubr.f32.mxu0 0.0
        %1297 = vmatmul.mubr.f32.gmra.mrb[0].mxu0 %v1213
        %v1298 = vpop.f32.mrb[0].mxu0
        %v1299 = vadd.f32 0.0, %v1298
        %v1300 = vpop.f32.mrb[0].mxu0
        %1301 = vmatprep.mubr.f32.mxu0 0.0
        %1302 = vmatmul.mubr.f32.gmra.mrb[0].mxu0 %v1215
        %v1303 = vpop.f32.mrb[0].mxu0
        %v1304 = vadd.f32 0.0, %v1303
        %v1305 = vpop.f32.mrb[0].mxu0
        %1306 = vmatprep.mubr.f32.mxu0 0.0
        %1307 = vmatmul.mubr.f32.gmra.mrb[0].mxu0 %v1217
        %v1308 = vpop.f32.mrb[0].mxu0
        %v1309 = vadd.f32 0.0, %v1308
        %v1310 = vpop.f32.mrb[0].mxu0
        %1311 = vdwg.mxu0
        %1312 = vrot.lane.b32.xlu0 %v1078, 96
        %v1313 = vpop.permute.xlu0 %1312
        %1314 = vrot.lane.b32.xlu0 %v1080, 96
        %v1315 = vpop.permute.xlu0 %1314
        %1316 = vrot.lane.b32.xlu0 %v1082, 96
        %v1317 = vpop.permute.xlu0 %1316
        %1318 = vrot.lane.b32.xlu0 %v1084, 96
        %v1319 = vpop.permute.xlu0 %1318
        %v1320 = vsel %vm1101, %v1078, 0
        %v1322 = vsel %vm1101, %v1080, 0
        %v1324 = vsel %vm1101, %v1082, 0
        %v1326 = vsel %vm1101, %v1084, 0
        %v1328 = vsel %vm1101, %v1313, 0
        %v1330 = vsel %vm1101, %v1315, 0
        %v1332 = vsel %vm1101, %v1317, 0
        %v1334 = vsel %vm1101, %v1319, 0
        %1336 = vmatprep.subr.mxu0 0.0
        %1337 = vmatpush1.xpose.msra.mxu0 %v1328
        %1338 = vmatprep.subr.mxu0 0.0
        %1339 = vmatpush1.xpose.msra.mxu0 %v1330
        %1340 = vmatprep.subr.mxu0 0.0
        %1341 = vmatpush1.xpose.msra.mxu0 %v1332
        %1342 = vmatprep.subr.mxu0 0.0
        %1343 = vmatpush1.xpose.msra.mxu0 %v1334
        %1344 = vmatprep.subr.mxu0 0.0
        %1345 = vmatpush1.xpose.msra.mxu0 0.0
        %1346 = vmatprep.subr.mxu0 0.0
        %1347 = vmatpush1.xpose.msra.mxu0 0.0
        %1348 = vmatprep.subr.mxu0 0.0
        %1349 = vmatpush1.xpose.msra.mxu0 0.0
        %1350 = vmatprep.subr.mxu0 0.0
        %1351 = vmatpush1.xpose.msra.mxu0 0.0
        %1352 = vmatprep.subr.mxu0 0.0
        %1353 = vmatpush1.xpose.msra.mxu0 0.0
        %1354 = vmatprep.subr.mxu0 0.0
        %1355 = vmatpush1.xpose.msra.mxu0 0.0
        %1356 = vmatprep.subr.mxu0 0.0
        %1357 = vmatpush1.xpose.msra.mxu0 0.0
        %1358 = vmatprep.subr.mxu0 0.0
        %1359 = vmatpush1.xpose.msra.mxu0 0.0
        %1360 = vmatprep.subr.mxu0 0.0
        %1361 = vmatpush1.xpose.msra.mxu0 0.0
        %1362 = vmatprep.subr.mxu0 0.0
        %1363 = vmatpush1.xpose.msra.mxu0 0.0
        %1364 = vmatprep.subr.mxu0 0.0
        %1365 = vmatpush1.xpose.msra.mxu0 0.0
        %1366 = vmatprep.subr.mxu0 0.0
        %1367 = vmatpush1.xpose.msra.mxu0 0.0
        %1368 = vmatprep.subr.mxu0 0.0
        %1369 = vmatpush1.xpose.msra.mxu0 0.0
        %1370 = vmatprep.subr.mxu0 0.0
        %1371 = vmatpush1.xpose.msra.mxu0 0.0
        %1372 = vmatprep.subr.mxu0 0.0
        %1373 = vmatpush1.xpose.msra.mxu0 0.0
        %1374 = vmatprep.subr.mxu0 0.0
        %1375 = vmatpush1.xpose.msra.mxu0 0.0
        %1376 = vmatprep.subr.mxu0 0.0
        %1377 = vmatpush1.xpose.msra.mxu0 0.0
        %1378 = vmatprep.subr.mxu0 0.0
        %1379 = vmatpush1.xpose.msra.mxu0 0.0
        %1380 = vmatprep.subr.mxu0 0.0
        %1381 = vmatpush1.xpose.msra.mxu0 0.0
        %1382 = vmatprep.subr.mxu0 0.0
        %1383 = vmatpush1.xpose.msra.mxu0 0.0
        %1384 = vmatprep.subr.mxu0 0.0
        %1385 = vmatpush1.xpose.msra.mxu0 0.0
        %1386 = vmatprep.subr.mxu0 0.0
        %1387 = vmatpush1.xpose.msra.mxu0 0.0
        %1388 = vmatprep.subr.mxu0 0.0
        %1389 = vmatpush1.xpose.msra.mxu0 0.0
        %1390 = vmatprep.subr.mxu0 0.0
        %1391 = vmatpush1.xpose.msra.mxu0 0.0
        %1392 = vmatprep.subr.mxu0 0.0
        %1393 = vmatpush1.xpose.msra.mxu0 0.0
        %1394 = vmatprep.subr.mxu0 0.0
        %1395 = vmatpush1.xpose.msra.mxu0 0.0
        %1396 = vmatprep.subr.mxu0 0.0
        %1397 = vmatpush1.xpose.msra.mxu0 0.0
        %1398 = vmatprep.subr.mxu0 0.0
        %1399 = vmatpush1.xpose.msra.mxu0 0.0
        %1400 = vmatprep.mubr.f32.mxu0 0.0
        %1401 = vmatmul.mubr.f32.gmra.mrb[0].mxu0 %v1320
        %v1402 = vpop.f32.mrb[0].mxu0
        %v1403 = vadd.f32 0.0, %v1402
        %v1404 = vpop.f32.mrb[0].mxu0
        %1405 = vmatprep.mubr.f32.mxu0 0.0
        %1406 = vmatmul.mubr.f32.gmra.mrb[0].mxu0 %v1322
        %v1407 = vpop.f32.mrb[0].mxu0
        %v1408 = vadd.f32 0.0, %v1407
        %v1409 = vpop.f32.mrb[0].mxu0
        %1410 = vmatprep.mubr.f32.mxu0 0.0
        %1411 = vmatmul.mubr.f32.gmra.mrb[0].mxu0 %v1324
        %v1412 = vpop.f32.mrb[0].mxu0
        %v1413 = vadd.f32 0.0, %v1412
        %v1414 = vpop.f32.mrb[0].mxu0
        %1415 = vmatprep.mubr.f32.mxu0 0.0
        %1416 = vmatmul.mubr.f32.gmra.mrb[0].mxu0 %v1326
        %v1417 = vpop.f32.mrb[0].mxu0
        %v1418 = vadd.f32 0.0, %v1417
        %v1419 = vpop.f32.mrb[0].mxu0
        %1420 = vdwg.mxu0
        %1421 = vrot.lane.b32.xlu0 %v1086, 96
        %v1422 = vpop.permute.xlu0 %1421
        %1423 = vrot.lane.b32.xlu0 %v1088, 96
        %v1424 = vpop.permute.xlu0 %1423
        %1425 = vrot.lane.b32.xlu0 %v1090, 96
        %v1426 = vpop.permute.xlu0 %1425
        %1427 = vrot.lane.b32.xlu0 %v1092, 96
        %v1428 = vpop.permute.xlu0 %1427
        %v1429 = vsel %vm1101, %v1086, 0
        %v1431 = vsel %vm1101, %v1088, 0
        %v1433 = vsel %vm1101, %v1090, 0
        %v1435 = vsel %vm1101, %v1092, 0
        %v1437 = vsel %vm1101, %v1422, 0
        %v1439 = vsel %vm1101, %v1424, 0
        %v1441 = vsel %vm1101, %v1426, 0
        %v1443 = vsel %vm1101, %v1428, 0
        %1445 = vmatprep.subr.mxu0 0.0
        %1446 = vmatpush1.xpose.msra.mxu0 %v1437
        %1447 = vmatprep.subr.mxu0 0.0
        %1448 = vmatpush1.xpose.msra.mxu0 %v1439
        %1449 = vmatprep.subr.mxu0 0.0
        %1450 = vmatpush1.xpose.msra.mxu0 %v1441
        %1451 = vmatprep.subr.mxu0 0.0
        %1452 = vmatpush1.xpose.msra.mxu0 %v1443
        %1453 = vmatprep.subr.mxu0 0.0
        %1454 = vmatpush1.xpose.msra.mxu0 0.0
        %1455 = vmatprep.subr.mxu0 0.0
        %1456 = vmatpush1.xpose.msra.mxu0 0.0
        %1457 = vmatprep.subr.mxu0 0.0
        %1458 = vmatpush1.xpose.msra.mxu0 0.0
        %1459 = vmatprep.subr.mxu0 0.0
        %1460 = vmatpush1.xpose.msra.mxu0 0.0
        %1461 = vmatprep.subr.mxu0 0.0
        %1462 = vmatpush1.xpose.msra.mxu0 0.0
        %1463 = vmatprep.subr.mxu0 0.0
        %1464 = vmatpush1.xpose.msra.mxu0 0.0
        %1465 = vmatprep.subr.mxu0 0.0
        %1466 = vmatpush1.xpose.msra.mxu0 0.0
        %1467 = vmatprep.subr.mxu0 0.0
        %1468 = vmatpush1.xpose.msra.mxu0 0.0
        %1469 = vmatprep.subr.mxu0 0.0
        %1470 = vmatpush1.xpose.msra.mxu0 0.0
        %1471 = vmatprep.subr.mxu0 0.0
        %1472 = vmatpush1.xpose.msra.mxu0 0.0
        %1473 = vmatprep.subr.mxu0 0.0
        %1474 = vmatpush1.xpose.msra.mxu0 0.0
        %1475 = vmatprep.subr.mxu0 0.0
        %1476 = vmatpush1.xpose.msra.mxu0 0.0
        %1477 = vmatprep.subr.mxu0 0.0
        %1478 = vmatpush1.xpose.msra.mxu0 0.0
        %1479 = vmatprep.subr.mxu0 0.0
        %1480 = vmatpush1.xpose.msra.mxu0 0.0
        %1481 = vmatprep.subr.mxu0 0.0
        %1482 = vmatpush1.xpose.msra.mxu0 0.0
        %1483 = vmatprep.subr.mxu0 0.0
        %1484 = vmatpush1.xpose.msra.mxu0 0.0
        %1485 = vmatprep.subr.mxu0 0.0
        %1486 = vmatpush1.xpose.msra.mxu0 0.0
        %1487 = vmatprep.subr.mxu0 0.0
        %1488 = vmatpush1.xpose.msra.mxu0 0.0
        %1489 = vmatprep.subr.mxu0 0.0
        %1490 = vmatpush1.xpose.msra.mxu0 0.0
        %1491 = vmatprep.subr.mxu0 0.0
        %1492 = vmatpush1.xpose.msra.mxu0 0.0
        %1493 = vmatprep.subr.mxu0 0.0
        %1494 = vmatpush1.xpose.msra.mxu0 0.0
        %1495 = vmatprep.subr.mxu0 0.0
        %1496 = vmatpush1.xpose.msra.mxu0 0.0
        %1497 = vmatprep.subr.mxu0 0.0
        %1498 = vmatpush1.xpose.msra.mxu0 0.0
        %1499 = vmatprep.subr.mxu0 0.0
        %1500 = vmatpush1.xpose.msra.mxu0 0.0
        %1501 = vmatprep.subr.mxu0 0.0
        %1502 = vmatpush1.xpose.msra.mxu0 0.0
        %1503 = vmatprep.subr.mxu0 0.0
        %1504 = vmatpush1.xpose.msra.mxu0 0.0
        %1505 = vmatprep.subr.mxu0 0.0
        %1506 = vmatpush1.xpose.msra.mxu0 0.0
        %1507 = vmatprep.subr.mxu0 0.0
        %1508 = vmatpush1.xpose.msra.mxu0 0.0
        %1509 = vmatprep.mubr.f32.mxu0 0.0
        %1510 = vmatmul.mubr.f32.gmra.mrb[0].mxu0 %v1429
        %v1511 = vpop.f32.mrb[0].mxu0
        %v1512 = vadd.f32 0.0, %v1511
        %v1513 = vpop.f32.mrb[0].mxu0
        %1514 = vmatprep.mubr.f32.mxu0 0.0
        %1515 = vmatmul.mubr.f32.gmra.mrb[0].mxu0 %v1431
        %v1516 = vpop.f32.mrb[0].mxu0
        %v1517 = vadd.f32 0.0, %v1516
        %v1518 = vpop.f32.mrb[0].mxu0
        %1519 = vmatprep.mubr.f32.mxu0 0.0
        %1520 = vmatmul.mubr.f32.gmra.mrb[0].mxu0 %v1433
        %v1521 = vpop.f32.mrb[0].mxu0
        %v1522 = vadd.f32 0.0, %v1521
        %v1523 = vpop.f32.mrb[0].mxu0
        %1524 = vmatprep.mubr.f32.mxu0 0.0
        %1525 = vmatmul.mubr.f32.gmra.mrb[0].mxu0 %v1435
        %v1526 = vpop.f32.mrb[0].mxu0
        %v1527 = vadd.f32 0.0, %v1526
        %v1528 = vpop.f32.mrb[0].mxu0
        %1529 = vdwg.mxu0
        %v1530 = vmul.f32 %v1185, 0.35355338
        %v1531 = vmul.f32 %v1190, 0.35355338
        %v1532 = vmul.f32 %v1195, 0.35355338
        %v1533 = vmul.f32 %v1200, 0.35355338
        %v1534 = vmul.f32 %v1294, 0.35355338
        %v1535 = vmul.f32 %v1299, 0.35355338
        %v1536 = vmul.f32 %v1304, 0.35355338
        %v1537 = vmul.f32 %v1309, 0.35355338
        %v1538 = vmul.f32 %v1403, 0.35355338
        %v1539 = vmul.f32 %v1408, 0.35355338
        %v1540 = vmul.f32 %v1413, 0.35355338
        %v1541 = vmul.f32 %v1418, 0.35355338
        %v1542 = vmul.f32 %v1512, 0.35355338
        %v1543 = vmul.f32 %v1517, 0.35355338
        %v1544 = vmul.f32 %v1522, 0.35355338
        %v1545 = vmul.f32 %v1527, 0.35355338
        %v1546 = vld [vmem:[%s3] sm:$0xff]
        %v1547 = vld [vmem:[%s3 + $0x8] sm:$0xff]
        %v1548 = vld [vmem:[%s3 + $0x10] sm:$0xff]
        %v1549 = vld [vmem:[%s3 + $0x18] sm:$0xff]
        %v1550 = vadd.f32 %v1530, %v1546
        %v1551 = vadd.f32 %v1531, %v1547
        %v1552 = vadd.f32 %v1532, %v1548
        %v1553 = vadd.f32 %v1533, %v1549
        %v1554 = vadd.f32 %v1534, %v1546
        %v1555 = vadd.f32 %v1535, %v1547
        %v1556 = vadd.f32 %v1536, %v1548
        %v1557 = vadd.f32 %v1537, %v1549
        %v1558 = vadd.f32 %v1538, %v1546
        %v1559 = vadd.f32 %v1539, %v1547
        %v1560 = vadd.f32 %v1540, %v1548
        %v1561 = vadd.f32 %v1541, %v1549
        %v1562 = vadd.f32 %v1542, %v1546
        %v1563 = vadd.f32 %v1543, %v1547
        %v1564 = vadd.f32 %v1544, %v1548
        %v1565 = vadd.f32 %v1545, %v1549
        %v1566 = vsel %vm883, %v1550, -inf
        %1567 = vmax.xlane.f32.xlu0 %v1566
        %v1568 = vpop.xlane.xlu0 %1567
        %v1569 = vsel %vm883, %v1551, -inf
        %1570 = vmax.xlane.f32.xlu0 %v1569
        %v1571 = vpop.xlane.xlu0 %1570
        %v1572 = vsel %vm883, %v1552, -inf
        %1573 = vmax.xlane.f32.xlu0 %v1572
        %v1574 = vpop.xlane.xlu0 %1573
        %v1575 = vsel %vm883, %v1553, -inf
        %1576 = vmax.xlane.f32.xlu0 %v1575
        %v1577 = vpop.xlane.xlu0 %1576
        %v1578 = vsel %vm883, %v1554, -inf
        %1579 = vmax.xlane.f32.xlu0 %v1578
        %v1580 = vpop.xlane.xlu0 %1579
        %v1581 = vsel %vm883, %v1555, -inf
        %1582 = vmax.xlane.f32.xlu0 %v1581
        %v1583 = vpop.xlane.xlu0 %1582
        %v1584 = vsel %vm883, %v1556, -inf
        %1585 = vmax.xlane.f32.xlu0 %v1584
        %v1586 = vpop.xlane.xlu0 %1585
        %v1587 = vsel %vm883, %v1557, -inf
        %1588 = vmax.xlane.f32.xlu0 %v1587
        %v1589 = vpop.xlane.xlu0 %1588
        %v1590 = vsel %vm883, %v1558, -inf
        %1591 = vmax.xlane.f32.xlu0 %v1590
        %v1592 = vpop.xlane.xlu0 %1591
        %v1593 = vsel %vm883, %v1559, -inf
        %1594 = vmax.xlane.f32.xlu0 %v1593
        %v1595 = vpop.xlane.xlu0 %1594
        %v1596 = vsel %vm883, %v1560, -inf
        %1597 = vmax.xlane.f32.xlu0 %v1596
        %v1598 = vpop.xlane.xlu0 %1597
        %v1599 = vsel %vm883, %v1561, -inf
        %1600 = vmax.xlane.f32.xlu0 %v1599
        %v1601 = vpop.xlane.xlu0 %1600
        %v1602 = vsel %vm883, %v1562, -inf
        %1603 = vmax.xlane.f32.xlu0 %v1602
        %v1604 = vpop.xlane.xlu0 %1603
        %v1605 = vsel %vm883, %v1563, -inf
        %1606 = vmax.xlane.f32.xlu0 %v1605
        %v1607 = vpop.xlane.xlu0 %1606
        %v1608 = vsel %vm883, %v1564, -inf
        %1609 = vmax.xlane.f32.xlu0 %v1608
        %v1610 = vpop.xlane.xlu0 %1609
        %v1611 = vsel %vm883, %v1565, -inf
        %1612 = vmax.xlane.f32.xlu0 %v1611
        %v1613 = vpop.xlane.xlu0 %1612
        %v1614 = vsub.f32 %v1550, %v1568
        %v1615 = vsub.f32 %v1551, %v1571
        %v1616 = vsub.f32 %v1552, %v1574
        %v1617 = vsub.f32 %v1553, %v1577
        %v1618 = vsub.f32 %v1554, %v1580
        %v1619 = vsub.f32 %v1555, %v1583
        %v1620 = vsub.f32 %v1556, %v1586
        %v1621 = vsub.f32 %v1557, %v1589
        %v1622 = vsub.f32 %v1558, %v1592
        %v1623 = vsub.f32 %v1559, %v1595
        %v1624 = vsub.f32 %v1560, %v1598
        %v1625 = vsub.f32 %v1561, %v1601
        %v1626 = vsub.f32 %v1562, %v1604
        %v1627 = vsub.f32 %v1563, %v1607
        %v1628 = vsub.f32 %v1564, %v1610
        %v1629 = vsub.f32 %v1565, %v1613
        %v1630 = vmul.f32 %v1614, 1.442695
        %v1631 = vpow.pop %v1630
        %v1632 = vmul.f32 %v1615, 1.442695
        %v1633 = vpow.pop %v1632
        %v1634 = vmul.f32 %v1616, 1.442695
        %v1635 = vpow.pop %v1634
        %v1636 = vmul.f32 %v1617, 1.442695
        %v1637 = vpow.pop %v1636
        %v1638 = vmul.f32 %v1618, 1.442695
        %v1639 = vpow.pop %v1638
        %v1640 = vmul.f32 %v1619, 1.442695
        %v1641 = vpow.pop %v1640
        %v1642 = vmul.f32 %v1620, 1.442695
        %v1643 = vpow.pop %v1642
        %v1644 = vmul.f32 %v1621, 1.442695
        %v1645 = vpow.pop %v1644
        %v1646 = vmul.f32 %v1622, 1.442695
        %v1647 = vpow.pop %v1646
        %v1648 = vmul.f32 %v1623, 1.442695
        %v1649 = vpow.pop %v1648
        %v1650 = vmul.f32 %v1624, 1.442695
        %v1651 = vpow.pop %v1650
        %v1652 = vmul.f32 %v1625, 1.442695
        %v1653 = vpow.pop %v1652
        %v1654 = vmul.f32 %v1626, 1.442695
        %v1655 = vpow.pop %v1654
        %v1656 = vmul.f32 %v1627, 1.442695
        %v1657 = vpow.pop %v1656
        %v1658 = vmul.f32 %v1628, 1.442695
        %v1659 = vpow.pop %v1658
        %v1660 = vmul.f32 %v1629, 1.442695
        %v1661 = vpow.pop %v1660
        %v1662 = vsel %vm883, %v1631, 0.0
        %1663 = vadd.xlane.f32.xlu0 %v1662
        %v1664 = vpop.xlane.xlu0 %1663
        %v1665 = vsel %vm883, %v1633, 0.0
        %1666 = vadd.xlane.f32.xlu0 %v1665
        %v1667 = vpop.xlane.xlu0 %1666
        %v1668 = vsel %vm883, %v1635, 0.0
        %1669 = vadd.xlane.f32.xlu0 %v1668
        %v1670 = vpop.xlane.xlu0 %1669
        %v1671 = vsel %vm883, %v1637, 0.0
        %1672 = vadd.xlane.f32.xlu0 %v1671
        %v1673 = vpop.xlane.xlu0 %1672
        %v1674 = vsel %vm883, %v1639, 0.0
        %1675 = vadd.xlane.f32.xlu0 %v1674
        %v1676 = vpop.xlane.xlu0 %1675
        %v1677 = vsel %vm883, %v1641, 0.0
        %1678 = vadd.xlane.f32.xlu0 %v1677
        %v1679 = vpop.xlane.xlu0 %1678
        %v1680 = vsel %vm883, %v1643, 0.0
        %1681 = vadd.xlane.f32.xlu0 %v1680
        %v1682 = vpop.xlane.xlu0 %1681
        %v1683 = vsel %vm883, %v1645, 0.0
        %1684 = vadd.xlane.f32.xlu0 %v1683
        %v1685 = vpop.xlane.xlu0 %1684
        %v1686 = vsel %vm883, %v1647, 0.0
        %1687 = vadd.xlane.f32.xlu0 %v1686
        %v1688 = vpop.xlane.xlu0 %1687
        %v1689 = vsel %vm883, %v1649, 0.0
        %1690 = vadd.xlane.f32.xlu0 %v1689
        %v1691 = vpop.xlane.xlu0 %1690
        %v1692 = vsel %vm883, %v1651, 0.0
        %1693 = vadd.xlane.f32.xlu0 %v1692
        %v1694 = vpop.xlane.xlu0 %1693
        %v1695 = vsel %vm883, %v1653, 0.0
        %1696 = vadd.xlane.f32.xlu0 %v1695
        %v1697 = vpop.xlane.xlu0 %1696
        %v1698 = vsel %vm883, %v1655, 0.0
        %1699 = vadd.xlane.f32.xlu0 %v1698
        %v1700 = vpop.xlane.xlu0 %1699
        %v1701 = vsel %vm883, %v1657, 0.0
        %1702 = vadd.xlane.f32.xlu0 %v1701
        %v1703 = vpop.xlane.xlu0 %1702
        %v1704 = vsel %vm883, %v1659, 0.0
        %1705 = vadd.xlane.f32.xlu0 %v1704
        %v1706 = vpop.xlane.xlu0 %1705
        %v1707 = vsel %vm883, %v1661, 0.0
        %1708 = vadd.xlane.f32.xlu0 %v1707
        %v1709 = vpop.xlane.xlu0 %1708
        %v1710 = vrcp.pop %v1664
        %v1711 = vrcp.pop %v1667
        %v1712 = vrcp.pop %v1670
        %v1713 = vrcp.pop %v1673
        %v1714 = vrcp.pop %v1676
        %v1715 = vrcp.pop %v1679
        %v1716 = vrcp.pop %v1682
        %v1717 = vrcp.pop %v1685
        %v1718 = vrcp.pop %v1688
        %v1719 = vrcp.pop %v1691
        %v1720 = vrcp.pop %v1694
        %v1721 = vrcp.pop %v1697
        %v1722 = vrcp.pop %v1700
        %v1723 = vrcp.pop %v1703
        %v1724 = vrcp.pop %v1706
        %v1725 = vrcp.pop %v1709
        %v1726 = vmul.f32 %v1631, %v1710
        %v1727 = vmul.f32 %v1633, %v1711
        %v1728 = vmul.f32 %v1635, %v1712
        %v1729 = vmul.f32 %v1637, %v1713
        %v1730 = vmul.f32 %v1639, %v1714
        %v1731 = vmul.f32 %v1641, %v1715
        %v1732 = vmul.f32 %v1643, %v1716
        %v1733 = vmul.f32 %v1645, %v1717
        %v1734 = vmul.f32 %v1647, %v1718
        %v1735 = vmul.f32 %v1649, %v1719
        %v1736 = vmul.f32 %v1651, %v1720
        %v1737 = vmul.f32 %v1653, %v1721
        %v1738 = vmul.f32 %v1655, %v1722
        %v1739 = vmul.f32 %v1657, %v1723
        %v1740 = vmul.f32 %v1659, %v1724
        %v1741 = vmul.f32 %v1661, %v1725
        %1742 = vrot.lane.b32.xlu0 %v1047, 64
        %v1743 = vpop.permute.xlu0 %1742
        %1744 = vrot.lane.b32.xlu0 %v1052, 64
        %v1745 = vpop.permute.xlu0 %1744
        %1746 = vrot.lane.b32.xlu0 %v1057, 64
        %v1747 = vpop.permute.xlu0 %1746
        %1748 = vrot.lane.b32.xlu0 %v1062, 64
        %v1749 = vpop.permute.xlu0 %1748
        %v1755 = vsel %vm883, %v1726, 0
        %v1758 = vsel %vm883, %v1727, 0
        %v1761 = vsel %vm883, %v1728, 0
        %v1764 = vsel %vm883, %v1729, 0
        %1766 = vmatprep.subr.mxu0 0.0
        %1767 = vmatpush1.msra.mxu0 %v1743
        %1768 = vmatprep.subr.mxu0 0.0
        %1769 = vmatpush1.msra.mxu0 %v1745
        %1770 = vmatprep.subr.mxu0 0.0
        %1771 = vmatpush1.msra.mxu0 %v1747
        %1772 = vmatprep.subr.mxu0 0.0
        %1773 = vmatpush1.msra.mxu0 %v1749
        %1774 = vmatprep.subr.mxu0 0.0
        %1775 = vmatpush1.msra.mxu0 0.0
        %1776 = vmatprep.subr.mxu0 0.0
        %1777 = vmatpush1.msra.mxu0 0.0
        %1778 = vmatprep.subr.mxu0 0.0
        %1779 = vmatpush1.msra.mxu0 0.0
        %1780 = vmatprep.subr.mxu0 0.0
        %1781 = vmatpush1.msra.mxu0 0.0
        %1782 = vmatprep.subr.mxu0 0.0
        %1783 = vmatpush1.msra.mxu0 0.0
        %1784 = vmatprep.subr.mxu0 0.0
        %1785 = vmatpush1.msra.mxu0 0.0
        %1786 = vmatprep.subr.mxu0 0.0
        %1787 = vmatpush1.msra.mxu0 0.0
        %1788 = vmatprep.subr.mxu0 0.0
        %1789 = vmatpush1.msra.mxu0 0.0
        %1790 = vmatprep.subr.mxu0 0.0
        %1791 = vmatpush1.msra.mxu0 0.0
        %1792 = vmatprep.subr.mxu0 0.0
        %1793 = vmatpush1.msra.mxu0 0.0
        %1794 = vmatprep.subr.mxu0 0.0
        %1795 = vmatpush1.msra.mxu0 0.0
        %1796 = vmatprep.subr.mxu0 0.0
        %1797 = vmatpush1.msra.mxu0 0.0
        %1798 = vmatprep.subr.mxu0 0.0
        %1799 = vmatpush1.msra.mxu0 0.0
        %1800 = vmatprep.subr.mxu0 0.0
        %1801 = vmatpush1.msra.mxu0 0.0
        %1802 = vmatprep.subr.mxu0 0.0
        %1803 = vmatpush1.msra.mxu0 0.0
        %1804 = vmatprep.subr.mxu0 0.0
        %1805 = vmatpush1.msra.mxu0 0.0
        %1806 = vmatprep.subr.mxu0 0.0
        %1807 = vmatpush1.msra.mxu0 0.0
        %1808 = vmatprep.subr.mxu0 0.0
        %1809 = vmatpush1.msra.mxu0 0.0
        %1810 = vmatprep.subr.mxu0 0.0
        %1811 = vmatpush1.msra.mxu0 0.0
        %1812 = vmatprep.subr.mxu0 0.0
        %1813 = vmatpush1.msra.mxu0 0.0
        %1814 = vmatprep.subr.mxu0 0.0
        %1815 = vmatpush1.msra.mxu0 0.0
        %1816 = vmatprep.subr.mxu0 0.0
        %1817 = vmatpush1.msra.mxu0 0.0
        %1818 = vmatprep.subr.mxu0 0.0
        %1819 = vmatpush1.msra.mxu0 0.0
        %1820 = vmatprep.subr.mxu0 0.0
        %1821 = vmatpush1.msra.mxu0 0.0
        %1822 = vmatprep.subr.mxu0 0.0
        %1823 = vmatpush1.msra.mxu0 0.0
        %1824 = vmatprep.subr.mxu0 0.0
        %1825 = vmatpush1.msra.mxu0 0.0
        %1826 = vmatprep.subr.mxu0 0.0
        %1827 = vmatpush1.msra.mxu0 0.0
        %1828 = vmatprep.subr.mxu0 0.0
        %1829 = vmatpush1.msra.mxu0 0.0
        %1830 = vmatprep.mubr.f32.mxu0 0.0
        %1831 = vmatmul.mubr.f32.gmra.mrb[0].mxu0 %v1755
        %v1832 = vpop.f32.mrb[0].mxu0
        %v1833 = vadd.f32 0.0, %v1832
        %v1834 = vpop.f32.mrb[0].mxu0
        %1835 = vmatprep.mubr.f32.mxu0 0.0
        %1836 = vmatmul.mubr.f32.gmra.mrb[0].mxu0 %v1758
        %v1837 = vpop.f32.mrb[0].mxu0
        %v1838 = vadd.f32 0.0, %v1837
        %v1839 = vpop.f32.mrb[0].mxu0
        %1840 = vmatprep.mubr.f32.mxu0 0.0
        %1841 = vmatmul.mubr.f32.gmra.mrb[0].mxu0 %v1761
        %v1842 = vpop.f32.mrb[0].mxu0
        %v1843 = vadd.f32 0.0, %v1842
        %v1844 = vpop.f32.mrb[0].mxu0
        %1845 = vmatprep.mubr.f32.mxu0 0.0
        %1846 = vmatmul.mubr.f32.gmra.mrb[0].mxu0 %v1764
        %v1847 = vpop.f32.mrb[0].mxu0
        %v1848 = vadd.f32 0.0, %v1847
        %v1849 = vpop.f32.mrb[0].mxu0
        %1850 = vdwg.mxu0
        %1851 = vrot.lane.b32.xlu0 %v1070, 64
        %v1852 = vpop.permute.xlu0 %1851
        %1853 = vrot.lane.b32.xlu0 %v1072, 64
        %v1854 = vpop.permute.xlu0 %1853
        %1855 = vrot.lane.b32.xlu0 %v1074, 64
        %v1856 = vpop.permute.xlu0 %1855
        %1857 = vrot.lane.b32.xlu0 %v1076, 64
        %v1858 = vpop.permute.xlu0 %1857
        %v1864 = vsel %vm883, %v1730, 0
        %v1867 = vsel %vm883, %v1731, 0
        %v1870 = vsel %vm883, %v1732, 0
        %v1873 = vsel %vm883, %v1733, 0
        %1875 = vmatprep.subr.mxu0 0.0
        %1876 = vmatpush1.msra.mxu0 %v1852
        %1877 = vmatprep.subr.mxu0 0.0
        %1878 = vmatpush1.msra.mxu0 %v1854
        %1879 = vmatprep.subr.mxu0 0.0
        %1880 = vmatpush1.msra.mxu0 %v1856
        %1881 = vmatprep.subr.mxu0 0.0
        %1882 = vmatpush1.msra.mxu0 %v1858
        %1883 = vmatprep.subr.mxu0 0.0
        %1884 = vmatpush1.msra.mxu0 0.0
        %1885 = vmatprep.subr.mxu0 0.0
        %1886 = vmatpush1.msra.mxu0 0.0
        %1887 = vmatprep.subr.mxu0 0.0
        %1888 = vmatpush1.msra.mxu0 0.0
        %1889 = vmatprep.subr.mxu0 0.0
        %1890 = vmatpush1.msra.mxu0 0.0
        %1891 = vmatprep.subr.mxu0 0.0
        %1892 = vmatpush1.msra.mxu0 0.0
        %1893 = vmatprep.subr.mxu0 0.0
        %1894 = vmatpush1.msra.mxu0 0.0
        %1895 = vmatprep.subr.mxu0 0.0
        %1896 = vmatpush1.msra.mxu0 0.0
        %1897 = vmatprep.subr.mxu0 0.0
        %1898 = vmatpush1.msra.mxu0 0.0
        %1899 = vmatprep.subr.mxu0 0.0
        %1900 = vmatpush1.msra.mxu0 0.0
        %1901 = vmatprep.subr.mxu0 0.0
        %1902 = vmatpush1.msra.mxu0 0.0
        %1903 = vmatprep.subr.mxu0 0.0
        %1904 = vmatpush1.msra.mxu0 0.0
        %1905 = vmatprep.subr.mxu0 0.0
        %1906 = vmatpush1.msra.mxu0 0.0
        %1907 = vmatprep.subr.mxu0 0.0
        %1908 = vmatpush1.msra.mxu0 0.0
        %1909 = vmatprep.subr.mxu0 0.0
        %1910 = vmatpush1.msra.mxu0 0.0
        %1911 = vmatprep.subr.mxu0 0.0
        %1912 = vmatpush1.msra.mxu0 0.0
        %1913 = vmatprep.subr.mxu0 0.0
        %1914 = vmatpush1.msra.mxu0 0.0
        %1915 = vmatprep.subr.mxu0 0.0
        %1916 = vmatpush1.msra.mxu0 0.0
        %1917 = vmatprep.subr.mxu0 0.0
        %1918 = vmatpush1.msra.mxu0 0.0
        %1919 = vmatprep.subr.mxu0 0.0
        %1920 = vmatpush1.msra.mxu0 0.0
        %1921 = vmatprep.subr.mxu0 0.0
        %1922 = vmatpush1.msra.mxu0 0.0
        %1923 = vmatprep.subr.mxu0 0.0
        %1924 = vmatpush1.msra.mxu0 0.0
        %1925 = vmatprep.subr.mxu0 0.0
        %1926 = vmatpush1.msra.mxu0 0.0
        %1927 = vmatprep.subr.mxu0 0.0
        %1928 = vmatpush1.msra.mxu0 0.0
        %1929 = vmatprep.subr.mxu0 0.0
        %1930 = vmatpush1.msra.mxu0 0.0
        %1931 = vmatprep.subr.mxu0 0.0
        %1932 = vmatpush1.msra.mxu0 0.0
        %1933 = vmatprep.subr.mxu0 0.0
        %1934 = vmatpush1.msra.mxu0 0.0
        %1935 = vmatprep.subr.mxu0 0.0
        %1936 = vmatpush1.msra.mxu0 0.0
        %1937 = vmatprep.subr.mxu0 0.0
        %1938 = vmatpush1.msra.mxu0 0.0
        %1939 = vmatprep.mubr.f32.mxu0 0.0
        %1940 = vmatmul.mubr.f32.gmra.mrb[0].mxu0 %v1864
        %v1941 = vpop.f32.mrb[0].mxu0
        %v1942 = vadd.f32 0.0, %v1941
        %v1943 = vpop.f32.mrb[0].mxu0
        %1944 = vmatprep.mubr.f32.mxu0 0.0
        %1945 = vmatmul.mubr.f32.gmra.mrb[0].mxu0 %v1867
        %v1946 = vpop.f32.mrb[0].mxu0
        %v1947 = vadd.f32 0.0, %v1946
        %v1948 = vpop.f32.mrb[0].mxu0
        %1949 = vmatprep.mubr.f32.mxu0 0.0
        %1950 = vmatmul.mubr.f32.gmra.mrb[0].mxu0 %v1870
        %v1951 = vpop.f32.mrb[0].mxu0
        %v1952 = vadd.f32 0.0, %v1951
        %v1953 = vpop.f32.mrb[0].mxu0
        %1954 = vmatprep.mubr.f32.mxu0 0.0
        %1955 = vmatmul.mubr.f32.gmra.mrb[0].mxu0 %v1873
        %v1956 = vpop.f32.mrb[0].mxu0
        %v1957 = vadd.f32 0.0, %v1956
        %v1958 = vpop.f32.mrb[0].mxu0
        %1959 = vdwg.mxu0
        %1960 = vrot.lane.b32.xlu0 %v1078, 64
        %v1961 = vpop.permute.xlu0 %1960
        %1962 = vrot.lane.b32.xlu0 %v1080, 64
        %v1963 = vpop.permute.xlu0 %1962
        %1964 = vrot.lane.b32.xlu0 %v1082, 64
        %v1965 = vpop.permute.xlu0 %1964
        %1966 = vrot.lane.b32.xlu0 %v1084, 64
        %v1967 = vpop.permute.xlu0 %1966
        %v1973 = vsel %vm883, %v1734, 0
        %v1976 = vsel %vm883, %v1735, 0
        %v1979 = vsel %vm883, %v1736, 0
        %v1982 = vsel %vm883, %v1737, 0
        %1984 = vmatprep.subr.mxu0 0.0
        %1985 = vmatpush1.msra.mxu0 %v1961
        %1986 = vmatprep.subr.mxu0 0.0
        %1987 = vmatpush1.msra.mxu0 %v1963
        %1988 = vmatprep.subr.mxu0 0.0
        %1989 = vmatpush1.msra.mxu0 %v1965
        %1990 = vmatprep.subr.mxu0 0.0
        %1991 = vmatpush1.msra.mxu0 %v1967
        %1992 = vmatprep.subr.mxu0 0.0
        %1993 = vmatpush1.msra.mxu0 0.0
        %1994 = vmatprep.subr.mxu0 0.0
        %1995 = vmatpush1.msra.mxu0 0.0
        %1996 = vmatprep.subr.mxu0 0.0
        %1997 = vmatpush1.msra.mxu0 0.0
        %1998 = vmatprep.subr.mxu0 0.0
        %1999 = vmatpush1.msra.mxu0 0.0
        %2000 = vmatprep.subr.mxu0 0.0
        %2001 = vmatpush1.msra.mxu0 0.0
        %2002 = vmatprep.subr.mxu0 0.0
        %2003 = vmatpush1.msra.mxu0 0.0
        %2004 = vmatprep.subr.mxu0 0.0
        %2005 = vmatpush1.msra.mxu0 0.0
        %2006 = vmatprep.subr.mxu0 0.0
        %2007 = vmatpush1.msra.mxu0 0.0
        %2008 = vmatprep.subr.mxu0 0.0
        %2009 = vmatpush1.msra.mxu0 0.0
        %2010 = vmatprep.subr.mxu0 0.0
        %2011 = vmatpush1.msra.mxu0 0.0
        %2012 = vmatprep.subr.mxu0 0.0
        %2013 = vmatpush1.msra.mxu0 0.0
        %2014 = vmatprep.subr.mxu0 0.0
        %2015 = vmatpush1.msra.mxu0 0.0
        %2016 = vmatprep.subr.mxu0 0.0
        %2017 = vmatpush1.msra.mxu0 0.0
        %2018 = vmatprep.subr.mxu0 0.0
        %2019 = vmatpush1.msra.mxu0 0.0
        %2020 = vmatprep.subr.mxu0 0.0
        %2021 = vmatpush1.msra.mxu0 0.0
        %2022 = vmatprep.subr.mxu0 0.0
        %2023 = vmatpush1.msra.mxu0 0.0
        %2024 = vmatprep.subr.mxu0 0.0
        %2025 = vmatpush1.msra.mxu0 0.0
        %2026 = vmatprep.subr.mxu0 0.0
        %2027 = vmatpush1.msra.mxu0 0.0
        %2028 = vmatprep.subr.mxu0 0.0
        %2029 = vmatpush1.msra.mxu0 0.0
        %2030 = vmatprep.subr.mxu0 0.0
        %2031 = vmatpush1.msra.mxu0 0.0
        %2032 = vmatprep.subr.mxu0 0.0
        %2033 = vmatpush1.msra.mxu0 0.0
        %2034 = vmatprep.subr.mxu0 0.0
        %2035 = vmatpush1.msra.mxu0 0.0
        %2036 = vmatprep.subr.mxu0 0.0
        %2037 = vmatpush1.msra.mxu0 0.0
        %2038 = vmatprep.subr.mxu0 0.0
        %2039 = vmatpush1.msra.mxu0 0.0
        %2040 = vmatprep.subr.mxu0 0.0
        %2041 = vmatpush1.msra.mxu0 0.0
        %2042 = vmatprep.subr.mxu0 0.0
        %2043 = vmatpush1.msra.mxu0 0.0
        %2044 = vmatprep.subr.mxu0 0.0
        %2045 = vmatpush1.msra.mxu0 0.0
        %2046 = vmatprep.subr.mxu0 0.0
        %2047 = vmatpush1.msra.mxu0 0.0
        %2048 = vmatprep.mubr.f32.mxu0 0.0
        %2049 = vmatmul.mubr.f32.gmra.mrb[0].mxu0 %v1973
        %v2050 = vpop.f32.mrb[0].mxu0
        %v2051 = vadd.f32 0.0, %v2050
        %v2052 = vpop.f32.mrb[0].mxu0
        %2053 = vmatprep.mubr.f32.mxu0 0.0
        %2054 = vmatmul.mubr.f32.gmra.mrb[0].mxu0 %v1976
        %v2055 = vpop.f32.mrb[0].mxu0
        %v2056 = vadd.f32 0.0, %v2055
        %v2057 = vpop.f32.mrb[0].mxu0
        %2058 = vmatprep.mubr.f32.mxu0 0.0
        %2059 = vmatmul.mubr.f32.gmra.mrb[0].mxu0 %v1979
        %v2060 = vpop.f32.mrb[0].mxu0
        %v2061 = vadd.f32 0.0, %v2060
        %v2062 = vpop.f32.mrb[0].mxu0
        %2063 = vmatprep.mubr.f32.mxu0 0.0
        %2064 = vmatmul.mubr.f32.gmra.mrb[0].mxu0 %v1982
        %v2065 = vpop.f32.mrb[0].mxu0
        %v2066 = vadd.f32 0.0, %v2065
        %v2067 = vpop.f32.mrb[0].mxu0
        %2068 = vdwg.mxu0
        %2069 = vrot.lane.b32.xlu0 %v1086, 64
        %v2070 = vpop.permute.xlu0 %2069
        %2071 = vrot.lane.b32.xlu0 %v1088, 64
        %v2072 = vpop.permute.xlu0 %2071
        %2073 = vrot.lane.b32.xlu0 %v1090, 64
        %v2074 = vpop.permute.xlu0 %2073
        %2075 = vrot.lane.b32.xlu0 %v1092, 64
        %v2076 = vpop.permute.xlu0 %2075
        %v2082 = vsel %vm883, %v1738, 0
        %v2085 = vsel %vm883, %v1739, 0
        %v2088 = vsel %vm883, %v1740, 0
        %v2091 = vsel %vm883, %v1741, 0
        %2093 = vmatprep.subr.mxu0 0.0
        %2094 = vmatpush1.msra.mxu0 %v2070
        %2095 = vmatprep.subr.mxu0 0.0
        %2096 = vmatpush1.msra.mxu0 %v2072
        %2097 = vmatprep.subr.mxu0 0.0
        %2098 = vmatpush1.msra.mxu0 %v2074
        %2099 = vmatprep.subr.mxu0 0.0
        %2100 = vmatpush1.msra.mxu0 %v2076
        %2101 = vmatprep.subr.mxu0 0.0
        %2102 = vmatpush1.msra.mxu0 0.0
        %2103 = vmatprep.subr.mxu0 0.0
        %2104 = vmatpush1.msra.mxu0 0.0
        %2105 = vmatprep.subr.mxu0 0.0
        %2106 = vmatpush1.msra.mxu0 0.0
        %2107 = vmatprep.subr.mxu0 0.0
        %2108 = vmatpush1.msra.mxu0 0.0
        %2109 = vmatprep.subr.mxu0 0.0
        %2110 = vmatpush1.msra.mxu0 0.0
        %2111 = vmatprep.subr.mxu0 0.0
        %2112 = vmatpush1.msra.mxu0 0.0
        %2113 = vmatprep.subr.mxu0 0.0
        %2114 = vmatpush1.msra.mxu0 0.0
        %2115 = vmatprep.subr.mxu0 0.0
        %2116 = vmatpush1.msra.mxu0 0.0
        %2117 = vmatprep.subr.mxu0 0.0
        %2118 = vmatpush1.msra.mxu0 0.0
        %2119 = vmatprep.subr.mxu0 0.0
        %2120 = vmatpush1.msra.mxu0 0.0
        %2121 = vmatprep.subr.mxu0 0.0
        %2122 = vmatpush1.msra.mxu0 0.0
        %2123 = vmatprep.subr.mxu0 0.0
        %2124 = vmatpush1.msra.mxu0 0.0
        %2125 = vmatprep.subr.mxu0 0.0
        %2126 = vmatpush1.msra.mxu0 0.0
        %2127 = vmatprep.subr.mxu0 0.0
        %2128 = vmatpush1.msra.mxu0 0.0
        %2129 = vmatprep.subr.mxu0 0.0
        %2130 = vmatpush1.msra.mxu0 0.0
        %2131 = vmatprep.subr.mxu0 0.0
        %2132 = vmatpush1.msra.mxu0 0.0
        %2133 = vmatprep.subr.mxu0 0.0
        %2134 = vmatpush1.msra.mxu0 0.0
        %2135 = vmatprep.subr.mxu0 0.0
        %2136 = vmatpush1.msra.mxu0 0.0
        %2137 = vmatprep.subr.mxu0 0.0
        %2138 = vmatpush1.msra.mxu0 0.0
        %2139 = vmatprep.subr.mxu0 0.0
        %2140 = vmatpush1.msra.mxu0 0.0
        %2141 = vmatprep.subr.mxu0 0.0
        %2142 = vmatpush1.msra.mxu0 0.0
        %2143 = vmatprep.subr.mxu0 0.0
        %2144 = vmatpush1.msra.mxu0 0.0
        %2145 = vmatprep.subr.mxu0 0.0
        %2146 = vmatpush1.msra.mxu0 0.0
        %2147 = vmatprep.subr.mxu0 0.0
        %2148 = vmatpush1.msra.mxu0 0.0
        %2149 = vmatprep.subr.mxu0 0.0
        %2150 = vmatpush1.msra.mxu0 0.0
        %2151 = vmatprep.subr.mxu0 0.0
        %2152 = vmatpush1.msra.mxu0 0.0
        %2153 = vmatprep.subr.mxu0 0.0
        %2154 = vmatpush1.msra.mxu0 0.0
        %2155 = vmatprep.subr.mxu0 0.0
        %2156 = vmatpush1.msra.mxu0 0.0
        %2157 = vmatprep.mubr.f32.mxu0 0.0
        %2158 = vmatmul.mubr.f32.gmra.mrb[0].mxu0 %v2082
        %v2159 = vpop.f32.mrb[0].mxu0
        %v2160 = vadd.f32 0.0, %v2159
        %v2161 = vpop.f32.mrb[0].mxu0
        %2162 = vmatprep.mubr.f32.mxu0 0.0
        %2163 = vmatmul.mubr.f32.gmra.mrb[0].mxu0 %v2085
        %v2164 = vpop.f32.mrb[0].mxu0
        %v2165 = vadd.f32 0.0, %v2164
        %v2166 = vpop.f32.mrb[0].mxu0
        %2167 = vmatprep.mubr.f32.mxu0 0.0
        %2168 = vmatmul.mubr.f32.gmra.mrb[0].mxu0 %v2088
        %v2169 = vpop.f32.mrb[0].mxu0
        %v2170 = vadd.f32 0.0, %v2169
        %v2171 = vpop.f32.mrb[0].mxu0
        %2172 = vmatprep.mubr.f32.mxu0 0.0
        %2173 = vmatmul.mubr.f32.gmra.mrb[0].mxu0 %v2091
        %v2174 = vpop.f32.mrb[0].mxu0
        %v2175 = vadd.f32 0.0, %v2174
        %v2176 = vpop.f32.mrb[0].mxu0
        %2177 = vdwg.mxu0
        %v2178 = vld [vmem:[%s708] sm:$0xff]
        %v2179 = vld [vmem:[%s708 + $0x8] sm:$0xff]
        %v2180 = vld [vmem:[%s708 + $0x10] sm:$0xff]
        %v2181 = vld [vmem:[%s708 + $0x18] sm:$0xff]
        %v2183 = vsel %vm1101, %v1942, 0
        %v2186 = vsel %vm1101, %v1947, 0
        %v2189 = vsel %vm1101, %v1952, 0
        %v2192 = vsel %vm1101, %v1957, 0
        %2194 = vmatprep.subr.mxu0 0.0
        %2195 = vmatpush1.msra.mxu0 %v2179
        %2196 = vmatprep.subr.mxu0 0.0
        %2197 = vmatpush1.msra.mxu0 0.0
        %2198 = vmatprep.subr.mxu0 0.0
        %2199 = vmatpush1.msra.mxu0 0.0
        %2200 = vmatprep.subr.mxu0 0.0
        %2201 = vmatpush1.msra.mxu0 0.0
        %2202 = vmatprep.subr.mxu0 0.0
        %2203 = vmatpush1.msra.mxu0 0.0
        %2204 = vmatprep.subr.mxu0 0.0
        %2205 = vmatpush1.msra.mxu0 0.0
        %2206 = vmatprep.subr.mxu0 0.0
        %2207 = vmatpush1.msra.mxu0 0.0
        %2208 = vmatprep.subr.mxu0 0.0
        %2209 = vmatpush1.msra.mxu0 0.0
        %2210 = vmatprep.subr.mxu0 0.0
        %2211 = vmatpush1.msra.mxu0 0.0
        %2212 = vmatprep.subr.mxu0 0.0
        %2213 = vmatpush1.msra.mxu0 0.0
        %2214 = vmatprep.subr.mxu0 0.0
        %2215 = vmatpush1.msra.mxu0 0.0
        %2216 = vmatprep.subr.mxu0 0.0
        %2217 = vmatpush1.msra.mxu0 0.0
        %2218 = vmatprep.subr.mxu0 0.0
        %2219 = vmatpush1.msra.mxu0 0.0
        %2220 = vmatprep.subr.mxu0 0.0
        %2221 = vmatpush1.msra.mxu0 0.0
        %2222 = vmatprep.subr.mxu0 0.0
        %2223 = vmatpush1.msra.mxu0 0.0
        %2224 = vmatprep.subr.mxu0 0.0
        %2225 = vmatpush1.msra.mxu0 0.0
        %2226 = vmatprep.subr.mxu0 0.0
        %2227 = vmatpush1.msra.mxu0 0.0
        %2228 = vmatprep.subr.mxu0 0.0
        %2229 = vmatpush1.msra.mxu0 0.0
        %2230 = vmatprep.subr.mxu0 0.0
        %2231 = vmatpush1.msra.mxu0 0.0
        %2232 = vmatprep.subr.mxu0 0.0
        %2233 = vmatpush1.msra.mxu0 0.0
        %2234 = vmatprep.subr.mxu0 0.0
        %2235 = vmatpush1.msra.mxu0 0.0
        %2236 = vmatprep.subr.mxu0 0.0
        %2237 = vmatpush1.msra.mxu0 0.0
        %2238 = vmatprep.subr.mxu0 0.0
        %2239 = vmatpush1.msra.mxu0 0.0
        %2240 = vmatprep.subr.mxu0 0.0
        %2241 = vmatpush1.msra.mxu0 0.0
        %2242 = vmatprep.subr.mxu0 0.0
        %2243 = vmatpush1.msra.mxu0 0.0
        %2244 = vmatprep.subr.mxu0 0.0
        %2245 = vmatpush1.msra.mxu0 0.0
        %2246 = vmatprep.subr.mxu0 0.0
        %2247 = vmatpush1.msra.mxu0 0.0
        %2248 = vmatprep.subr.mxu0 0.0
        %2249 = vmatpush1.msra.mxu0 0.0
        %2250 = vmatprep.subr.mxu0 0.0
        %2251 = vmatpush1.msra.mxu0 0.0
        %2252 = vmatprep.subr.mxu0 0.0
        %2253 = vmatpush1.msra.mxu0 0.0
        %2254 = vmatprep.subr.mxu0 0.0
        %2255 = vmatpush1.msra.mxu0 0.0
        %2256 = vmatprep.subr.mxu0 0.0
        %2257 = vmatpush1.msra.mxu0 0.0
        %2258 = vmatprep.mubr.f32.mxu0 0.0
        %2259 = vmatmul.mubr.f32.gmra.mrb[0].mxu0 %v2183
        %v2260 = vpop.f32.mrb[0].mxu0
        %v2261 = vadd.f32 0.0, %v2260
        %v2262 = vpop.f32.mrb[0].mxu0
        %2263 = vmatprep.mubr.f32.mxu0 0.0
        %2264 = vmatmul.mubr.f32.gmra.mrb[0].mxu0 %v2186
        %v2265 = vpop.f32.mrb[0].mxu0
        %v2266 = vadd.f32 0.0, %v2265
        %v2267 = vpop.f32.mrb[0].mxu0
        %2268 = vmatprep.mubr.f32.mxu0 0.0
        %2269 = vmatmul.mubr.f32.gmra.mrb[0].mxu0 %v2189
        %v2270 = vpop.f32.mrb[0].mxu0
        %v2271 = vadd.f32 0.0, %v2270
        %v2272 = vpop.f32.mrb[0].mxu0
        %2273 = vmatprep.mubr.f32.mxu0 0.0
        %2274 = vmatmul.mubr.f32.gmra.mrb[0].mxu0 %v2192
        %v2275 = vpop.f32.mrb[0].mxu0
        %v2276 = vadd.f32 0.0, %v2275
        %v2277 = vpop.f32.mrb[0].mxu0
        %2278 = vdwg.mxu0
        %v2280 = vsel %vm1101, %v1833, 0
        %v2283 = vsel %vm1101, %v1838, 0
        %v2286 = vsel %vm1101, %v1843, 0
        %v2289 = vsel %vm1101, %v1848, 0
        %2291 = vmatprep.subr.mxu0 0.0
        %2292 = vmatpush1.msra.mxu0 %v2178
        %2293 = vmatprep.subr.mxu0 0.0
        %2294 = vmatpush1.msra.mxu0 0.0
        %2295 = vmatprep.subr.mxu0 0.0
        %2296 = vmatpush1.msra.mxu0 0.0
        %2297 = vmatprep.subr.mxu0 0.0
        %2298 = vmatpush1.msra.mxu0 0.0
        %2299 = vmatprep.subr.mxu0 0.0
        %2300 = vmatpush1.msra.mxu0 0.0
        %2301 = vmatprep.subr.mxu0 0.0
        %2302 = vmatpush1.msra.mxu0 0.0
        %2303 = vmatprep.subr.mxu0 0.0
        %2304 = vmatpush1.msra.mxu0 0.0
        %2305 = vmatprep.subr.mxu0 0.0
        %2306 = vmatpush1.msra.mxu0 0.0
        %2307 = vmatprep.subr.mxu0 0.0
        %2308 = vmatpush1.msra.mxu0 0.0
        %2309 = vmatprep.subr.mxu0 0.0
        %2310 = vmatpush1.msra.mxu0 0.0
        %2311 = vmatprep.subr.mxu0 0.0
        %2312 = vmatpush1.msra.mxu0 0.0
        %2313 = vmatprep.subr.mxu0 0.0
        %2314 = vmatpush1.msra.mxu0 0.0
        %2315 = vmatprep.subr.mxu0 0.0
        %2316 = vmatpush1.msra.mxu0 0.0
        %2317 = vmatprep.subr.mxu0 0.0
        %2318 = vmatpush1.msra.mxu0 0.0
        %2319 = vmatprep.subr.mxu0 0.0
        %2320 = vmatpush1.msra.mxu0 0.0
        %2321 = vmatprep.subr.mxu0 0.0
        %2322 = vmatpush1.msra.mxu0 0.0
        %2323 = vmatprep.subr.mxu0 0.0
        %2324 = vmatpush1.msra.mxu0 0.0
        %2325 = vmatprep.subr.mxu0 0.0
        %2326 = vmatpush1.msra.mxu0 0.0
        %2327 = vmatprep.subr.mxu0 0.0
        %2328 = vmatpush1.msra.mxu0 0.0
        %2329 = vmatprep.subr.mxu0 0.0
        %2330 = vmatpush1.msra.mxu0 0.0
        %2331 = vmatprep.subr.mxu0 0.0
        %2332 = vmatpush1.msra.mxu0 0.0
        %2333 = vmatprep.subr.mxu0 0.0
        %2334 = vmatpush1.msra.mxu0 0.0
        %2335 = vmatprep.subr.mxu0 0.0
        %2336 = vmatpush1.msra.mxu0 0.0
        %2337 = vmatprep.subr.mxu0 0.0
        %2338 = vmatpush1.msra.mxu0 0.0
        %2339 = vmatprep.subr.mxu0 0.0
        %2340 = vmatpush1.msra.mxu0 0.0
        %2341 = vmatprep.subr.mxu0 0.0
        %2342 = vmatpush1.msra.mxu0 0.0
        %2343 = vmatprep.subr.mxu0 0.0
        %2344 = vmatpush1.msra.mxu0 0.0
        %2345 = vmatprep.subr.mxu0 0.0
        %2346 = vmatpush1.msra.mxu0 0.0
        %2347 = vmatprep.subr.mxu0 0.0
        %2348 = vmatpush1.msra.mxu0 0.0
        %2349 = vmatprep.subr.mxu0 0.0
        %2350 = vmatpush1.msra.mxu0 0.0
        %2351 = vmatprep.subr.mxu0 0.0
        %2352 = vmatpush1.msra.mxu0 0.0
        %2353 = vmatprep.subr.mxu0 0.0
        %2354 = vmatpush1.msra.mxu0 0.0
        %2355 = vmatprep.mubr.f32.mxu0 0.0
        %2356 = vmatmul.mubr.f32.gmra.mrb[0].mxu0 %v2280
        %v2357 = vpop.f32.mrb[0].mxu0
        %v2358 = vadd.f32 %v2261, %v2357
        %v2359 = vpop.f32.mrb[0].mxu0
        %2360 = vmatprep.mubr.f32.mxu0 0.0
        %2361 = vmatmul.mubr.f32.gmra.mrb[0].mxu0 %v2283
        %v2362 = vpop.f32.mrb[0].mxu0
        %v2363 = vadd.f32 %v2266, %v2362
        %v2364 = vpop.f32.mrb[0].mxu0
        %2365 = vmatprep.mubr.f32.mxu0 0.0
        %2366 = vmatmul.mubr.f32.gmra.mrb[0].mxu0 %v2286
        %v2367 = vpop.f32.mrb[0].mxu0
        %v2368 = vadd.f32 %v2271, %v2367
        %v2369 = vpop.f32.mrb[0].mxu0
        %2370 = vmatprep.mubr.f32.mxu0 0.0
        %2371 = vmatmul.mubr.f32.gmra.mrb[0].mxu0 %v2289
        %v2372 = vpop.f32.mrb[0].mxu0
        %v2373 = vadd.f32 %v2276, %v2372
        %v2374 = vpop.f32.mrb[0].mxu0
        %2375 = vdwg.mxu0
        %v2377 = vsel %vm1101, %v2051, 0
        %v2380 = vsel %vm1101, %v2056, 0
        %v2383 = vsel %vm1101, %v2061, 0
        %v2386 = vsel %vm1101, %v2066, 0
        %2388 = vmatprep.subr.mxu0 0.0
        %2389 = vmatpush1.msra.mxu0 %v2180
        %2390 = vmatprep.subr.mxu0 0.0
        %2391 = vmatpush1.msra.mxu0 0.0
        %2392 = vmatprep.subr.mxu0 0.0
        %2393 = vmatpush1.msra.mxu0 0.0
        %2394 = vmatprep.subr.mxu0 0.0
        %2395 = vmatpush1.msra.mxu0 0.0
        %2396 = vmatprep.subr.mxu0 0.0
        %2397 = vmatpush1.msra.mxu0 0.0
        %2398 = vmatprep.subr.mxu0 0.0
        %2399 = vmatpush1.msra.mxu0 0.0
        %2400 = vmatprep.subr.mxu0 0.0
        %2401 = vmatpush1.msra.mxu0 0.0
        %2402 = vmatprep.subr.mxu0 0.0
        %2403 = vmatpush1.msra.mxu0 0.0
        %2404 = vmatprep.subr.mxu0 0.0
        %2405 = vmatpush1.msra.mxu0 0.0
        %2406 = vmatprep.subr.mxu0 0.0
        %2407 = vmatpush1.msra.mxu0 0.0
        %2408 = vmatprep.subr.mxu0 0.0
        %2409 = vmatpush1.msra.mxu0 0.0
        %2410 = vmatprep.subr.mxu0 0.0
        %2411 = vmatpush1.msra.mxu0 0.0
        %2412 = vmatprep.subr.mxu0 0.0
        %2413 = vmatpush1.msra.mxu0 0.0
        %2414 = vmatprep.subr.mxu0 0.0
        %2415 = vmatpush1.msra.mxu0 0.0
        %2416 = vmatprep.subr.mxu0 0.0
        %2417 = vmatpush1.msra.mxu0 0.0
        %2418 = vmatprep.subr.mxu0 0.0
        %2419 = vmatpush1.msra.mxu0 0.0
        %2420 = vmatprep.subr.mxu0 0.0
        %2421 = vmatpush1.msra.mxu0 0.0
        %2422 = vmatprep.subr.mxu0 0.0
        %2423 = vmatpush1.msra.mxu0 0.0
        %2424 = vmatprep.subr.mxu0 0.0
        %2425 = vmatpush1.msra.mxu0 0.0
        %2426 = vmatprep.subr.mxu0 0.0
        %2427 = vmatpush1.msra.mxu0 0.0
        %2428 = vmatprep.subr.mxu0 0.0
        %2429 = vmatpush1.msra.mxu0 0.0
        %2430 = vmatprep.subr.mxu0 0.0
        %2431 = vmatpush1.msra.mxu0 0.0
        %2432 = vmatprep.subr.mxu0 0.0
        %2433 = vmatpush1.msra.mxu0 0.0
        %2434 = vmatprep.subr.mxu0 0.0
        %2435 = vmatpush1.msra.mxu0 0.0
        %2436 = vmatprep.subr.mxu0 0.0
        %2437 = vmatpush1.msra.mxu0 0.0
        %2438 = vmatprep.subr.mxu0 0.0
        %2439 = vmatpush1.msra.mxu0 0.0
        %2440 = vmatprep.subr.mxu0 0.0
        %2441 = vmatpush1.msra.mxu0 0.0
        %2442 = vmatprep.subr.mxu0 0.0
        %2443 = vmatpush1.msra.mxu0 0.0
        %2444 = vmatprep.subr.mxu0 0.0
        %2445 = vmatpush1.msra.mxu0 0.0
        %2446 = vmatprep.subr.mxu0 0.0
        %2447 = vmatpush1.msra.mxu0 0.0
        %2448 = vmatprep.subr.mxu0 0.0
        %2449 = vmatpush1.msra.mxu0 0.0
        %2450 = vmatprep.subr.mxu0 0.0
        %2451 = vmatpush1.msra.mxu0 0.0
        %2452 = vmatprep.mubr.f32.mxu0 0.0
        %2453 = vmatmul.mubr.f32.gmra.mrb[0].mxu0 %v2377
        %v2454 = vpop.f32.mrb[0].mxu0
        %v2455 = vadd.f32 0.0, %v2454
        %v2456 = vpop.f32.mrb[0].mxu0
        %2457 = vmatprep.mubr.f32.mxu0 0.0
        %2458 = vmatmul.mubr.f32.gmra.mrb[0].mxu0 %v2380
        %v2459 = vpop.f32.mrb[0].mxu0
        %v2460 = vadd.f32 0.0, %v2459
        %v2461 = vpop.f32.mrb[0].mxu0
        %2462 = vmatprep.mubr.f32.mxu0 0.0
        %2463 = vmatmul.mubr.f32.gmra.mrb[0].mxu0 %v2383
        %v2464 = vpop.f32.mrb[0].mxu0
        %v2465 = vadd.f32 0.0, %v2464
        %v2466 = vpop.f32.mrb[0].mxu0
        %2467 = vmatprep.mubr.f32.mxu0 0.0
        %2468 = vmatmul.mubr.f32.gmra.mrb[0].mxu0 %v2386
        %v2469 = vpop.f32.mrb[0].mxu0
        %v2470 = vadd.f32 0.0, %v2469
        %v2471 = vpop.f32.mrb[0].mxu0
        %2472 = vdwg.mxu0
        %v2473 = vadd.f32 %v2358, %v2455
        %v2474 = vadd.f32 %v2363, %v2460
        %v2475 = vadd.f32 %v2368, %v2465
        %v2476 = vadd.f32 %v2373, %v2470
        %v2478 = vsel %vm1101, %v2160, 0
        %v2481 = vsel %vm1101, %v2165, 0
        %v2484 = vsel %vm1101, %v2170, 0
        %v2487 = vsel %vm1101, %v2175, 0
        %2489 = vmatprep.subr.mxu0 0.0
        %2490 = vmatpush1.msra.mxu0 %v2181
        %2491 = vmatprep.subr.mxu0 0.0
        %2492 = vmatpush1.msra.mxu0 0.0
        %2493 = vmatprep.subr.mxu0 0.0
        %2494 = vmatpush1.msra.mxu0 0.0
        %2495 = vmatprep.subr.mxu0 0.0
        %2496 = vmatpush1.msra.mxu0 0.0
        %2497 = vmatprep.subr.mxu0 0.0
        %2498 = vmatpush1.msra.mxu0 0.0
        %2499 = vmatprep.subr.mxu0 0.0
        %2500 = vmatpush1.msra.mxu0 0.0
        %2501 = vmatprep.subr.mxu0 0.0
        %2502 = vmatpush1.msra.mxu0 0.0
        %2503 = vmatprep.subr.mxu0 0.0
        %2504 = vmatpush1.msra.mxu0 0.0
        %2505 = vmatprep.subr.mxu0 0.0
        %2506 = vmatpush1.msra.mxu0 0.0
        %2507 = vmatprep.subr.mxu0 0.0
        %2508 = vmatpush1.msra.mxu0 0.0
        %2509 = vmatprep.subr.mxu0 0.0
        %2510 = vmatpush1.msra.mxu0 0.0
        %2511 = vmatprep.subr.mxu0 0.0
        %2512 = vmatpush1.msra.mxu0 0.0
        %2513 = vmatprep.subr.mxu0 0.0
        %2514 = vmatpush1.msra.mxu0 0.0
        %2515 = vmatprep.subr.mxu0 0.0
        %2516 = vmatpush1.msra.mxu0 0.0
        %2517 = vmatprep.subr.mxu0 0.0
        %2518 = vmatpush1.msra.mxu0 0.0
        %2519 = vmatprep.subr.mxu0 0.0
        %2520 = vmatpush1.msra.mxu0 0.0
        %2521 = vmatprep.subr.mxu0 0.0
        %2522 = vmatpush1.msra.mxu0 0.0
        %2523 = vmatprep.subr.mxu0 0.0
        %2524 = vmatpush1.msra.mxu0 0.0
        %2525 = vmatprep.subr.mxu0 0.0
        %2526 = vmatpush1.msra.mxu0 0.0
        %2527 = vmatprep.subr.mxu0 0.0
        %2528 = vmatpush1.msra.mxu0 0.0
        %2529 = vmatprep.subr.mxu0 0.0
        %2530 = vmatpush1.msra.mxu0 0.0
        %2531 = vmatprep.subr.mxu0 0.0
        %2532 = vmatpush1.msra.mxu0 0.0
        %2533 = vmatprep.subr.mxu0 0.0
        %2534 = vmatpush1.msra.mxu0 0.0
        %2535 = vmatprep.subr.mxu0 0.0
        %2536 = vmatpush1.msra.mxu0 0.0
        %2537 = vmatprep.subr.mxu0 0.0
        %2538 = vmatpush1.msra.mxu0 0.0
        %2539 = vmatprep.subr.mxu0 0.0
        %2540 = vmatpush1.msra.mxu0 0.0
        %2541 = vmatprep.subr.mxu0 0.0
        %2542 = vmatpush1.msra.mxu0 0.0
        %2543 = vmatprep.subr.mxu0 0.0
        %2544 = vmatpush1.msra.mxu0 0.0
        %2545 = vmatprep.subr.mxu0 0.0
        %2546 = vmatpush1.msra.mxu0 0.0
        %2547 = vmatprep.subr.mxu0 0.0
        %2548 = vmatpush1.msra.mxu0 0.0
        %2549 = vmatprep.subr.mxu0 0.0
        %2550 = vmatpush1.msra.mxu0 0.0
        %2551 = vmatprep.subr.mxu0 0.0
        %2552 = vmatpush1.msra.mxu0 0.0
        %2553 = vmatprep.mubr.f32.mxu0 0.0
        %2554 = vmatmul.mubr.f32.gmra.mrb[0].mxu0 %v2478
        %v2555 = vpop.f32.mrb[0].mxu0
        %v2556 = vadd.f32 0.0, %v2555
        %v2557 = vpop.f32.mrb[0].mxu0
        %2558 = vmatprep.mubr.f32.mxu0 0.0
        %2559 = vmatmul.mubr.f32.gmra.mrb[0].mxu0 %v2481
        %v2560 = vpop.f32.mrb[0].mxu0
        %v2561 = vadd.f32 0.0, %v2560
        %v2562 = vpop.f32.mrb[0].mxu0
        %2563 = vmatprep.mubr.f32.mxu0 0.0
        %2564 = vmatmul.mubr.f32.gmra.mrb[0].mxu0 %v2484
        %v2565 = vpop.f32.mrb[0].mxu0
        %v2566 = vadd.f32 0.0, %v2565
        %v2567 = vpop.f32.mrb[0].mxu0
        %2568 = vmatprep.mubr.f32.mxu0 0.0
        %2569 = vmatmul.mubr.f32.gmra.mrb[0].mxu0 %v2487
        %v2570 = vpop.f32.mrb[0].mxu0
        %v2571 = vadd.f32 0.0, %v2570
        %v2572 = vpop.f32.mrb[0].mxu0
        %2573 = vdwg.mxu0
        %v2574 = vadd.f32 %v2473, %v2556
        %v2575 = vadd.f32 %v2474, %v2561
        %v2576 = vadd.f32 %v2475, %v2566
        %v2577 = vadd.f32 %v2476, %v2571
        %v2578 = vadd.f32 %v877, %v2574
        %v2579 = vadd.f32 %v878, %v2575
        %v2580 = vadd.f32 %v879, %v2576
        %v2581 = vadd.f32 %v880, %v2577
        %v2582 = vld [vmem:[%s711] sm:$0x1]
        %v2584 = vlaneseq
        %v2585 = vshrl.u32 %v2584, 7
        %v2586 = vsub.s32 0, %v2585
        %v2587 = vrot.slane %v2582, %v2586
        %v2589 = vadd.f32 %v2578, %v2587
        %v2590 = vadd.f32 %v2579, %v2587
        %v2591 = vadd.f32 %v2580, %v2587
        %v2592 = vadd.f32 %v2581, %v2587
        %v2593 = vld [vmem:[%s714] sm:$0x1]
        %v2594 = vld [vmem:[%s717] sm:$0x1]
        %v2595 = vsel %vm883, %v2589, 0.0
        %2596 = vadd.xlane.f32.xlu0 %v2595
        %v2597 = vpop.xlane.xlu0 %2596
        %v2598 = vsel %vm883, %v2590, 0.0
        %2599 = vadd.xlane.f32.xlu0 %v2598
        %v2600 = vpop.xlane.xlu0 %2599
        %v2601 = vsel %vm883, %v2591, 0.0
        %2602 = vadd.xlane.f32.xlu0 %v2601
        %v2603 = vpop.xlane.xlu0 %2602
        %v2604 = vsel %vm883, %v2592, 0.0
        %2605 = vadd.xlane.f32.xlu0 %v2604
        %v2606 = vpop.xlane.xlu0 %2605
        %v2607 = vmul.f32 %v2597, %v896
        %v2608 = vmul.f32 %v2600, %v896
        %v2609 = vmul.f32 %v2603, %v896
        %v2610 = vmul.f32 %v2606, %v896
        %v2611 = vsub.f32 %v2589, %v2607
        %v2612 = vsub.f32 %v2590, %v2608
        %v2613 = vsub.f32 %v2591, %v2609
        %v2614 = vsub.f32 %v2592, %v2610
        %v2615 = vmul.f32 %v2611, %v2611
        %v2616 = vmul.f32 %v2612, %v2612
        %v2617 = vmul.f32 %v2613, %v2613
        %v2618 = vmul.f32 %v2614, %v2614
        %v2619 = vsel %vm883, %v2615, 0.0
        %2620 = vadd.xlane.f32.xlu0 %v2619
        %v2621 = vpop.xlane.xlu0 %2620
        %v2622 = vsel %vm883, %v2616, 0.0
        %2623 = vadd.xlane.f32.xlu0 %v2622
        %v2624 = vpop.xlane.xlu0 %2623
        %v2625 = vsel %vm883, %v2617, 0.0
        %2626 = vadd.xlane.f32.xlu0 %v2625
        %v2627 = vpop.xlane.xlu0 %2626
        %v2628 = vsel %vm883, %v2618, 0.0
        %2629 = vadd.xlane.f32.xlu0 %v2628
        %v2630 = vpop.xlane.xlu0 %2629
        %v2631 = vmul.f32 %v2621, %v896
        %v2632 = vmul.f32 %v2624, %v896
        %v2633 = vmul.f32 %v2627, %v896
        %v2634 = vmul.f32 %v2630, %v896
        %v2635 = vadd.f32 %v2631, 1e-06
        %v2636 = vadd.f32 %v2632, 1e-06
        %v2637 = vadd.f32 %v2633, 1e-06
        %v2638 = vadd.f32 %v2634, 1e-06
        %v2639 = vrsqrt.pop %v2635
        %v2640 = vrsqrt.pop %v2636
        %v2641 = vrsqrt.pop %v2637
        %v2642 = vrsqrt.pop %v2638
        %v2643 = vmul.f32 %v2611, %v2639
        %v2644 = vmul.f32 %v2612, %v2640
        %v2645 = vmul.f32 %v2613, %v2641
        %v2646 = vmul.f32 %v2614, %v2642
        %v2648 = vlaneseq
        %v2649 = vshrl.u32 %v2648, 7
        %v2650 = vsub.s32 0, %v2649
        %v2651 = vrot.slane %v2593, %v2650
        %v2653 = vmul.f32 %v2643, %v2651
        %v2654 = vmul.f32 %v2644, %v2651
        %v2655 = vmul.f32 %v2645, %v2651
        %v2656 = vmul.f32 %v2646, %v2651
        %v2658 = vlaneseq
        %v2659 = vshrl.u32 %v2658, 7
        %v2660 = vsub.s32 0, %v2659
        %v2661 = vrot.slane %v2594, %v2660
        %v2663 = vadd.f32 %v2653, %v2661
        %v2664 = vadd.f32 %v2654, %v2661
        %v2665 = vadd.f32 %v2655, %v2661
        %v2666 = vadd.f32 %v2656, %v2661
        %v2667 = vld [vmem:[%s722] sm:$0xff]
        %v2668 = vld [vmem:[%s722 + $0x8] sm:$0xff]
        %v2669 = vld [vmem:[%s722 + $0x10] sm:$0xff]
        %v2670 = vld [vmem:[%s722 + $0x18] sm:$0xff]
        %v2671 = vld [vmem:[%s725] sm:$0x1]
        %v2673 = vlaneseq
        %v2674 = vshrl.u32 %v2673, 7
        %v2675 = vsub.s32 0, %v2674
        %v2676 = vrot.slane %v2671, %v2675
        %v2679 = vsel %vm883, %v2663, 0
        %v2682 = vsel %vm883, %v2664, 0
        %v2685 = vsel %vm883, %v2665, 0
        %v2688 = vsel %vm883, %v2666, 0
        %2690 = vmatprep.subr.mxu0 0.0
        %2691 = vmatpush1.msra.mxu0 %v2667
        %2692 = vmatprep.subr.mxu0 0.0
        %2693 = vmatpush1.msra.mxu0 %v2668
        %2694 = vmatprep.subr.mxu0 0.0
        %2695 = vmatpush1.msra.mxu0 %v2669
        %2696 = vmatprep.subr.mxu0 0.0
        %2697 = vmatpush1.msra.mxu0 %v2670
        %2698 = vmatprep.subr.mxu0 0.0
        %2699 = vmatpush1.msra.mxu0 0.0
        %2700 = vmatprep.subr.mxu0 0.0
        %2701 = vmatpush1.msra.mxu0 0.0
        %2702 = vmatprep.subr.mxu0 0.0
        %2703 = vmatpush1.msra.mxu0 0.0
        %2704 = vmatprep.subr.mxu0 0.0
        %2705 = vmatpush1.msra.mxu0 0.0
        %2706 = vmatprep.subr.mxu0 0.0
        %2707 = vmatpush1.msra.mxu0 0.0
        %2708 = vmatprep.subr.mxu0 0.0
        %2709 = vmatpush1.msra.mxu0 0.0
        %2710 = vmatprep.subr.mxu0 0.0
        %2711 = vmatpush1.msra.mxu0 0.0
        %2712 = vmatprep.subr.mxu0 0.0
        %2713 = vmatpush1.msra.mxu0 0.0
        %2714 = vmatprep.subr.mxu0 0.0
        %2715 = vmatpush1.msra.mxu0 0.0
        %2716 = vmatprep.subr.mxu0 0.0
        %2717 = vmatpush1.msra.mxu0 0.0
        %2718 = vmatprep.subr.mxu0 0.0
        %2719 = vmatpush1.msra.mxu0 0.0
        %2720 = vmatprep.subr.mxu0 0.0
        %2721 = vmatpush1.msra.mxu0 0.0
        %2722 = vmatprep.subr.mxu0 0.0
        %2723 = vmatpush1.msra.mxu0 0.0
        %2724 = vmatprep.subr.mxu0 0.0
        %2725 = vmatpush1.msra.mxu0 0.0
        %2726 = vmatprep.subr.mxu0 0.0
        %2727 = vmatpush1.msra.mxu0 0.0
        %2728 = vmatprep.subr.mxu0 0.0
        %2729 = vmatpush1.msra.mxu0 0.0
        %2730 = vmatprep.subr.mxu0 0.0
        %2731 = vmatpush1.msra.mxu0 0.0
        %2732 = vmatprep.subr.mxu0 0.0
        %2733 = vmatpush1.msra.mxu0 0.0
        %2734 = vmatprep.subr.mxu0 0.0
        %2735 = vmatpush1.msra.mxu0 0.0
        %2736 = vmatprep.subr.mxu0 0.0
        %2737 = vmatpush1.msra.mxu0 0.0
        %2738 = vmatprep.subr.mxu0 0.0
        %2739 = vmatpush1.msra.mxu0 0.0
        %2740 = vmatprep.subr.mxu0 0.0
        %2741 = vmatpush1.msra.mxu0 0.0
        %2742 = vmatprep.subr.mxu0 0.0
        %2743 = vmatpush1.msra.mxu0 0.0
        %2744 = vmatprep.subr.mxu0 0.0
        %2745 = vmatpush1.msra.mxu0 0.0
        %2746 = vmatprep.subr.mxu0 0.0
        %2747 = vmatpush1.msra.mxu0 0.0
        %2748 = vmatprep.subr.mxu0 0.0
        %2749 = vmatpush1.msra.mxu0 0.0
        %2750 = vmatprep.subr.mxu0 0.0
        %2751 = vmatpush1.msra.mxu0 0.0
        %2752 = vmatprep.subr.mxu0 0.0
        %2753 = vmatpush1.msra.mxu0 0.0
        %2754 = vmatprep.mubr.f32.mxu0 0.0
        %2755 = vmatmul.mubr.f32.gmra.mrb[0].mxu0 %v2679
        %v2756 = vpop.f32.mrb[0].mxu0
        %v2757 = vadd.f32 %v2676, %v2756
        %v2758 = vpop.f32.mrb[0].mxu0
        %2759 = vmatprep.mubr.f32.mxu0 0.0
        %2760 = vmatmul.mubr.f32.gmra.mrb[0].mxu0 %v2682
        %v2761 = vpop.f32.mrb[0].mxu0
        %v2762 = vadd.f32 %v2676, %v2761
        %v2763 = vpop.f32.mrb[0].mxu0
        %2764 = vmatprep.mubr.f32.mxu0 0.0
        %2765 = vmatmul.mubr.f32.gmra.mrb[0].mxu0 %v2685
        %v2766 = vpop.f32.mrb[0].mxu0
        %v2767 = vadd.f32 %v2676, %v2766
        %v2768 = vpop.f32.mrb[0].mxu0
        %2769 = vmatprep.mubr.f32.mxu0 0.0
        %2770 = vmatmul.mubr.f32.gmra.mrb[0].mxu0 %v2688
        %v2771 = vpop.f32.mrb[0].mxu0
        %v2772 = vadd.f32 %v2676, %v2771
        %v2773 = vpop.f32.mrb[0].mxu0
        %2774 = vdwg.mxu0
        %v2775 = vmul.f32 %v2757, 0.5
        %v2776 = vmul.f32 %v2762, 0.5
        %v2777 = vmul.f32 %v2767, 0.5
        %v2778 = vmul.f32 %v2772, 0.5
        %v2779 = vmul.f32 %v2757, 0.70710677
        %v2780 = vmul.f32 %v2762, 0.70710677
        %v2781 = vmul.f32 %v2767, 0.70710677
        %v2782 = vmul.f32 %v2772, 0.70710677
        %vm2783 = vcmp.ge.f32.partialorder %v2779, 0.0
        %vm2784 = vcmp.ge.f32.partialorder %v2780, 0.0
        %vm2785 = vcmp.ge.f32.partialorder %v2781, 0.0
        %vm2786 = vcmp.ge.f32.partialorder %v2782, 0.0
        %v2787 = vsel %vm2783, 1.0, -1.0
        %v2788 = vsel %vm2784, 1.0, -1.0
        %v2789 = vsel %vm2785, 1.0, -1.0
        %v2790 = vsel %vm2786, 1.0, -1.0
        %v2791 = vand.u32 2147483647, %v2779
        %v2792 = vand.u32 2147483647, %v2780
        %v2793 = vand.u32 2147483647, %v2781
        %v2794 = vand.u32 2147483647, %v2782
        %v2795 = vmul.f32 %v2791, 0.3275911
        %v2796 = vmul.f32 %v2792, 0.3275911
        %v2797 = vmul.f32 %v2793, 0.3275911
        %v2798 = vmul.f32 %v2794, 0.3275911
        %v2799 = vadd.f32 %v2795, 1.0
        %v2800 = vadd.f32 %v2796, 1.0
        %v2801 = vadd.f32 %v2797, 1.0
        %v2802 = vadd.f32 %v2798, 1.0
        %v2803 = vrcp.pop %v2799
        %v2804 = vmul.f32 1.0, %v2803
        %v2805 = vrcp.pop %v2800
        %v2806 = vmul.f32 1.0, %v2805
        %v2807 = vrcp.pop %v2801
        %v2808 = vmul.f32 1.0, %v2807
        %v2809 = vrcp.pop %v2802
        %v2810 = vmul.f32 1.0, %v2809
        %v2811 = vmul.f32 %v2804, 1.0614054
        %v2812 = vmul.f32 %v2806, 1.0614054
        %v2813 = vmul.f32 %v2808, 1.0614054
        %v2814 = vmul.f32 %v2810, 1.0614054
        %v2815 = vadd.f32 %v2811, -1.4531521
        %v2816 = vadd.f32 %v2812, -1.4531521
        %v2817 = vadd.f32 %v2813, -1.4531521
        %v2818 = vadd.f32 %v2814, -1.4531521
        %v2819 = vmul.f32 %v2815, %v2804
        %v2820 = vmul.f32 %v2816, %v2806
        %v2821 = vmul.f32 %v2817, %v2808
        %v2822 = vmul.f32 %v2818, %v2810
        %v2823 = vadd.f32 %v2819, 1.4214138
        %v2824 = vadd.f32 %v2820, 1.4214138
        %v2825 = vadd.f32 %v2821, 1.4214138
        %v2826 = vadd.f32 %v2822, 1.4214138
        %v2827 = vmul.f32 %v2823, %v2804
        %v2828 = vmul.f32 %v2824, %v2806
        %v2829 = vmul.f32 %v2825, %v2808
        %v2830 = vmul.f32 %v2826, %v2810
        %v2831 = vadd.f32 %v2827, -0.28449672
        %v2832 = vadd.f32 %v2828, -0.28449672
        %v2833 = vadd.f32 %v2829, -0.28449672
        %v2834 = vadd.f32 %v2830, -0.28449672
        %v2835 = vmul.f32 %v2831, %v2804
        %v2836 = vmul.f32 %v2832, %v2806
        %v2837 = vmul.f32 %v2833, %v2808
        %v2838 = vmul.f32 %v2834, %v2810
        %v2839 = vadd.f32 %v2835, 0.2548296
        %v2840 = vadd.f32 %v2836, 0.2548296
        %v2841 = vadd.f32 %v2837, 0.2548296
        %v2842 = vadd.f32 %v2838, 0.2548296
        %v2843 = vmul.f32 %v2839, %v2804
        %v2844 = vmul.f32 %v2840, %v2806
        %v2845 = vmul.f32 %v2841, %v2808
        %v2846 = vmul.f32 %v2842, %v2810
        %v2847 = vsub.f32 0.0, %v2791
        %v2848 = vsub.f32 0.0, %v2792
        %v2849 = vsub.f32 0.0, %v2793
        %v2850 = vsub.f32 0.0, %v2794
        %v2851 = vmul.f32 %v2847, %v2791
        %v2852 = vmul.f32 %v2848, %v2792
        %v2853 = vmul.f32 %v2849, %v2793
        %v2854 = vmul.f32 %v2850, %v2794
        %v2855 = vmul.f32 %v2851, 1.442695
        %v2856 = vpow.pop %v2855
        %v2857 = vmul.f32 %v2852, 1.442695
        %v2858 = vpow.pop %v2857
        %v2859 = vmul.f32 %v2853, 1.442695
        %v2860 = vpow.pop %v2859
        %v2861 = vmul.f32 %v2854, 1.442695
        %v2862 = vpow.pop %v2861
        %v2863 = vmul.f32 %v2843, %v2856
        %v2864 = vmul.f32 %v2844, %v2858
        %v2865 = vmul.f32 %v2845, %v2860
        %v2866 = vmul.f32 %v2846, %v2862
        %v2867 = vsub.f32 1.0, %v2863
        %v2868 = vsub.f32 1.0, %v2864
        %v2869 = vsub.f32 1.0, %v2865
        %v2870 = vsub.f32 1.0, %v2866
        %v2871 = vmul.f32 %v2787, %v2867
        %v2872 = vmul.f32 %v2788, %v2868
        %v2873 = vmul.f32 %v2789, %v2869
        %v2874 = vmul.f32 %v2790, %v2870
        %v2875 = vadd.f32 %v2871, 1.0
        %v2876 = vadd.f32 %v2872, 1.0
        %v2877 = vadd.f32 %v2873, 1.0
        %v2878 = vadd.f32 %v2874, 1.0
        %v2879 = vmul.f32 %v2775, %v2875
        %v2880 = vmul.f32 %v2776, %v2876
        %v2881 = vmul.f32 %v2777, %v2877
        %v2882 = vmul.f32 %v2778, %v2878
        %v2883 = vld [vmem:[%s730] sm:$0xff]
        %v2884 = vld [vmem:[%s730 + $0x8] sm:$0xff]
        %v2885 = vld [vmem:[%s730 + $0x10] sm:$0xff]
        %v2886 = vld [vmem:[%s730 + $0x18] sm:$0xff]
        %v2887 = vld [vmem:[%s730 + $0x20] sm:$0xff]
        %v2888 = vld [vmem:[%s730 + $0x28] sm:$0xff]
        %v2889 = vld [vmem:[%s730 + $0x30] sm:$0xff]
        %v2890 = vld [vmem:[%s730 + $0x38] sm:$0xff]
        %v2891 = vld [vmem:[%s730 + $0x40] sm:$0xff]
        %v2892 = vld [vmem:[%s730 + $0x48] sm:$0xff]
        %v2893 = vld [vmem:[%s730 + $0x50] sm:$0xff]
        %v2894 = vld [vmem:[%s730 + $0x58] sm:$0xff]
        %v2895 = vld [vmem:[%s730 + $0x60] sm:$0xff]
        %v2896 = vld [vmem:[%s730 + $0x68] sm:$0xff]
        %v2897 = vld [vmem:[%s730 + $0x70] sm:$0xff]
        %v2898 = vld [vmem:[%s730 + $0x78] sm:$0xff]
        %v2899 = vld [vmem:[%s733] sm:$0x1]
        %v2901 = vlaneseq
        %v2902 = vshrl.u32 %v2901, 7
        %v2903 = vsub.s32 0, %v2902
        %v2904 = vrot.slane %v2899, %v2903
        %2906 = vmatprep.subr.mxu0 0.0
        %2907 = vmatpush1.msra.mxu0 %v2883
        %2908 = vmatprep.subr.mxu0 0.0
        %2909 = vmatpush1.msra.mxu0 %v2884
        %2910 = vmatprep.subr.mxu0 0.0
        %2911 = vmatpush1.msra.mxu0 %v2885
        %2912 = vmatprep.subr.mxu0 0.0
        %2913 = vmatpush1.msra.mxu0 %v2886
        %2914 = vmatprep.subr.mxu0 0.0
        %2915 = vmatpush1.msra.mxu0 %v2887
        %2916 = vmatprep.subr.mxu0 0.0
        %2917 = vmatpush1.msra.mxu0 %v2888
        %2918 = vmatprep.subr.mxu0 0.0
        %2919 = vmatpush1.msra.mxu0 %v2889
        %2920 = vmatprep.subr.mxu0 0.0
        %2921 = vmatpush1.msra.mxu0 %v2890
        %2922 = vmatprep.subr.mxu0 0.0
        %2923 = vmatpush1.msra.mxu0 %v2891
        %2924 = vmatprep.subr.mxu0 0.0
        %2925 = vmatpush1.msra.mxu0 %v2892
        %2926 = vmatprep.subr.mxu0 0.0
        %2927 = vmatpush1.msra.mxu0 %v2893
        %2928 = vmatprep.subr.mxu0 0.0
        %2929 = vmatpush1.msra.mxu0 %v2894
        %2930 = vmatprep.subr.mxu0 0.0
        %2931 = vmatpush1.msra.mxu0 %v2895
        %2932 = vmatprep.subr.mxu0 0.0
        %2933 = vmatpush1.msra.mxu0 %v2896
        %2934 = vmatprep.subr.mxu0 0.0
        %2935 = vmatpush1.msra.mxu0 %v2897
        %2936 = vmatprep.subr.mxu0 0.0
        %2937 = vmatpush1.msra.mxu0 %v2898
        %2938 = vmatprep.subr.mxu0 0.0
        %2939 = vmatpush1.msra.mxu0 0.0
        %2940 = vmatprep.subr.mxu0 0.0
        %2941 = vmatpush1.msra.mxu0 0.0
        %2942 = vmatprep.subr.mxu0 0.0
        %2943 = vmatpush1.msra.mxu0 0.0
        %2944 = vmatprep.subr.mxu0 0.0
        %2945 = vmatpush1.msra.mxu0 0.0
        %2946 = vmatprep.subr.mxu0 0.0
        %2947 = vmatpush1.msra.mxu0 0.0
        %2948 = vmatprep.subr.mxu0 0.0
        %2949 = vmatpush1.msra.mxu0 0.0
        %2950 = vmatprep.subr.mxu0 0.0
        %2951 = vmatpush1.msra.mxu0 0.0
        %2952 = vmatprep.subr.mxu0 0.0
        %2953 = vmatpush1.msra.mxu0 0.0
        %2954 = vmatprep.subr.mxu0 0.0
        %2955 = vmatpush1.msra.mxu0 0.0
        %2956 = vmatprep.subr.mxu0 0.0
        %2957 = vmatpush1.msra.mxu0 0.0
        %2958 = vmatprep.subr.mxu0 0.0
        %2959 = vmatpush1.msra.mxu0 0.0
        %2960 = vmatprep.subr.mxu0 0.0
        %2961 = vmatpush1.msra.mxu0 0.0
        %2962 = vmatprep.subr.mxu0 0.0
        %2963 = vmatpush1.msra.mxu0 0.0
        %2964 = vmatprep.subr.mxu0 0.0
        %2965 = vmatpush1.msra.mxu0 0.0
        %2966 = vmatprep.subr.mxu0 0.0
        %2967 = vmatpush1.msra.mxu0 0.0
        %2968 = vmatprep.subr.mxu0 0.0
        %2969 = vmatpush1.msra.mxu0 0.0
        %2970 = vmatprep.mubr.f32.mxu0 0.0
        %2971 = vmatmul.mubr.f32.gmra.mrb[0].mxu0 %v2879
        %v2972 = vpop.f32.mrb[0].mxu0
        %v2973 = vadd.f32 %v2904, %v2972
        %v2974 = vpop.f32.mrb[0].mxu0
        %2975 = vmatprep.mubr.f32.mxu0 0.0
        %2976 = vmatmul.mubr.f32.gmra.mrb[0].mxu0 %v2880
        %v2977 = vpop.f32.mrb[0].mxu0
        %v2978 = vadd.f32 %v2904, %v2977
        %v2979 = vpop.f32.mrb[0].mxu0
        %2980 = vmatprep.mubr.f32.mxu0 0.0
        %2981 = vmatmul.mubr.f32.gmra.mrb[0].mxu0 %v2881
        %v2982 = vpop.f32.mrb[0].mxu0
        %v2983 = vadd.f32 %v2904, %v2982
        %v2984 = vpop.f32.mrb[0].mxu0
        %2985 = vmatprep.mubr.f32.mxu0 0.0
        %2986 = vmatmul.mubr.f32.gmra.mrb[0].mxu0 %v2882
        %v2987 = vpop.f32.mrb[0].mxu0
        %v2988 = vadd.f32 %v2904, %v2987
        %v2989 = vpop.f32.mrb[0].mxu0
        %2990 = vdwg.mxu0
        %v2991 = vadd.f32 %v2589, %v2973
        %v2992 = vadd.f32 %v2590, %v2978
        %v2993 = vadd.f32 %v2591, %v2983
        %v2994 = vadd.f32 %v2592, %v2988
        %2995 = vst.msk [vmem:[#allocation2] sm:$0xff] %vm883, %v2991
        %2996 = vst.msk [vmem:[#allocation2 + $0x8] sm:$0xff] %vm883, %v2992
        %2997 = vst.msk [vmem:[#allocation2 + $0x10] sm:$0xff] %vm883, %v2993
        %2998 = vst.msk [vmem:[#allocation2 + $0x18] sm:$0xff] %vm883, %v2994
        %p2999 = scmp.eq.s32.totalorder %s30, 1
        // Predicated region
        $region97: #{vit_forward.1} parent=91 // pred_check
          %p3000 = pneg %p2999
        $region98: #{vit_forward.1} parent=91 // pred_check_branch
          %3002 = sbr.rel (%p3000) target = $region100
        $region99: #{vit_forward.1} parent=91 // pred_region
          %v3003 = vld [vmem:[%s4] sm:$0x1]
          %v3004 = vld [vmem:[%s5] sm:$0x1]
          %v3007 = vrot.slane %v2993, 7
          %vm3008 = vcmask 1041409
          %v3009 = vsel %vm3008, %v3007, %v2991
          %vm3011 = vcmask 254976
          %v3012 = vsel %vm3011, %v3009, 0.0
          %3013 = vadd.xlane.f32.xlu0 %v3012
          %v3014 = vpop.xlane.xlu0 %3013
          %v3015 = vmul.f32 %v3014, %v896
          %v3017 = vrot.slane %v3015, 1
          %v3020 = vsub.f32 %v2991, %v3015
          %v3021 = vsub.f32 %v2993, %v3017
          %v3022 = vmul.f32 %v3020, %v3020
          %v3023 = vmul.f32 %v3021, %v3021
          %v3026 = vrot.slane %v3023, 7
          %v3027 = vsel %vm3008, %v3026, %v3022
          %v3029 = vsel %vm3011, %v3027, 0.0
          %3030 = vadd.xlane.f32.xlu0 %v3029
          %v3031 = vpop.xlane.xlu0 %3030
          %v3032 = vmul.f32 %v3031, %v896
          %v3033 = vadd.f32 %v3032, 1e-06
          %v3034 = vrsqrt.pop %v3033
          %v3036 = vrot.slane %v3034, 1
          %v3039 = vmul.f32 %v3020, %v3034
          %v3040 = vmul.f32 %v3021, %v3036
          %v3042 = vlaneseq
          %v3043 = vshrl.u32 %v3042, 7
          %v3044 = vsub.s32 0, %v3043
          %v3045 = vrot.slane %v3003, %v3044
          %v3047 = vmul.f32 %v3039, %v3045
          %v3048 = vmul.f32 %v3040, %v3045
          %v3050 = vlaneseq
          %v3051 = vshrl.u32 %v3050, 7
          %v3052 = vsub.s32 0, %v3051
          %v3053 = vrot.slane %v3004, %v3052
          %v3055 = vadd.f32 %v3047, %v3053
          %v3056 = vadd.f32 %v3048, %v3053
          %v3059 = vrot.slane %v3056, 7
          %v3060 = vsel %vm3008, %v3059, %v3055
          %3062 = vst.msk [vmem:[#allocation3] sm:$0x3] %vm3011, %v3060
        $region100: #{vit_forward.1} parent=91 // pred_fallthru
          _
        // Predicated region
        $region101: #{vit_forward.1} parent=91 // pred_check
          %p3063 = pneg %p481
        $region102: #{vit_forward.1} parent=91 // pred_check_branch
          %3065 = sbr.rel (%p3063) target = $region104
        $region103: #{vit_forward.1} parent=91 // pred_region
          %s3067 = ssub.s32 32, 32
          %3068 = vsyncadd [#allocation4], %s3067
          %s3070 = sshll.u32 [#allocation3], 4
          %s3071 = int_to_ptr.vmem [resolvable:$true] %s3070
          %3073 = dma.vmem_to_hbm [thread:$0]  %s3071, 32, %s18, [#allocation4]
        $region104: #{vit_forward.1} parent=91 // pred_fallthru
          _
        // Predicated region
        $region105: #{vit_forward.1} parent=91 // pred_check
          %p3074 = pneg %p481
        $region106: #{vit_forward.1} parent=91 // pred_check_branch
          %3076 = sbr.rel (%p3074) target = $region108
        $region107: #{vit_forward.1} parent=91 // pred_region
          %3077 = dma.done [#allocation4], 32
        $region108: #{vit_forward.1} parent=91 // pred_fallthru
          _
      $region92: #{vit_forward.1} parent=5 // pred_fallthru
        _
      %p3078 = scmp.le.s32.totalorder 2, %s25
      // Predicated region
      $region109: #{vit_forward.1} parent=5 // pred_check
        %p3079 = pneg %p3078
      $region110: #{vit_forward.1} parent=5 // pred_check_branch
        %3081 = sbr.rel (%p3079) target = $region112
      $region111: #{vit_forward.1} parent=5 // pred_region
        %s3082 = ssub.s32 %s25, 2
      $region112: #{vit_forward.1} parent=5 // pred_fallthru
        _
    $region6: #{vit_forward.1} parent=1 // loop_footer
      %s29 = sadd.s32 1, %s25
    $region7: #{vit_forward.1} parent=1 // loop_footer_branch
      %24 = sbr.rel target = $region3
    $region8: #{vit_forward.1} parent=1 // loop_exit
      _
    %3083 = vsyncpa [#allocation4], 1
    %s3084 = scalar_lea.sflag [#allocation4], 1
    %3085 = vsyncpa %s3084, 1

</llo_original>
